<compile_context>
chip_gen: v5e
topology: v5e:2x2
jax: 0.10.0
libtpu: 0.0.40
codegen_flags: <defaults>
</compile_context>

<pallas_src>
import functools

import jax
import jax.numpy as jnp
import numpy as np
from jax.experimental import pallas as pl
from jax.experimental.pallas import tpu as pltpu


# ----------------------------------------------------------------------------
# Helpers
# ----------------------------------------------------------------------------
def _round_up(x, m):
    return ((x + m - 1) // m) * m


def _vmem_limit_bytes():
    """Generation-aware scoped-VMEM limit: ~3/4 of physical, capped at 100MiB."""
    cap = 64 * 1024 * 1024                      # conservative default (v7x-sized)
    try:
        cap = int(pltpu.get_tpu_info().vmem_capacity_bytes)
    except Exception:
        pass
    return min((cap // 4) * 3, 100 * 1024 * 1024)


def _pick_row_tile(*, Ho, Wo, Wp, s, H, W, Cin, HID_P, COUT_P, has_expand,
                   weight_bytes, limit_bytes):
    """Largest output-row tile TH (<=32, dividing Ho, layout-legal) whose
    estimated VMEM footprint fits the scoped limit."""
    FLAT = (H + 2) * Wp

    def usage(th):
        lwin = ((th - 1) * s + 3) * Wp
        u = 2 * H * W * Cin * 4                 # full-image x block, double-buffered
        u += FLAT * Cin * 4                     # padded-input scratch
        u += th * Wo * HID_P * 4                # depthwise-output scratch
        u += 4 * th * Wo * COUT_P * 4           # output block (x2) + project temps
        u += 2 * weight_bytes                   # resident weights (double-buffered)
        if has_expand:
            u += 4 * lwin * HID_P * 4           # hidden-window scratch + expand temps
        return u

    cands = [d for d in range(1, min(Ho, 32) + 1)
             if Ho % d == 0 and ((d * Wo) % 8 == 0 or d == Ho)]
    if not cands:
        cands = [Ho]
    fits = [d for d in cands if usage(d) <= limit_bytes]
    return max(fits) if fits else min(cands)


# ----------------------------------------------------------------------------
# Fused kernel
# ----------------------------------------------------------------------------
def _make_kernel(*, has_expand, use_res, s, H, W, Cin, HID_P, COUT_P,
                 TH, Wo, Wp, LWIN, mm_dtype):
    THWo = TH * Wo

    def kernel(*refs):
        it = iter(refs)
        x_ref = next(it)                                     # (H, W, Cin)
        if has_expand:
            mask_ref, w1_ref, b1_ref = next(it), next(it), next(it)
        wdw_ref, bdw_ref = next(it), next(it)                # (9,HID_P), (1,HID_P)
        w2_ref, b2_ref = next(it), next(it)                  # (HID_P,COUT_P), (1,COUT_P)
        rproj_ref = next(it) if use_res else None            # (Cin, COUT_P)
        o_ref = next(it)                                     # (TH*Wo, COUT_P)
        xpad_ref = next(it)                                  # (FLAT, Cin) scratch
        hwin_ref = next(it) if has_expand else None          # (LWIN, HID_P) scratch
        dw_ref = next(it)                                    # (TH*Wo, HID_P) scratch

        t = pl.program_id(1)

        # ---- build the zero-padded input image once per batch element ------
        # Only the padding strip is zeroed (not the whole scratch); the H row
        # copies are statically unrolled so the LLO scheduler sees them.
        @pl.when(t == 0)
        def _():
            xpad_ref[pl.ds(0, Wp + 1), :] = jnp.zeros((Wp + 1, Cin), jnp.float32)
            zmargin = jnp.zeros((Wp - W, Cin), jnp.float32)

            def one_row(r):
                xpad_ref[pl.ds((r + 1) * Wp + 1, W), :] = x_ref[r]
                xpad_ref[pl.ds((r + 1) * Wp + W + 1, Wp - W), :] = zmargin

            if H <= 64:
                for r in range(H):
                    one_row(r)
            else:
                def body(r, c):
                    one_row(r)
                    return c
                jax.lax.fori_loop(0, H, body, 0, unroll=8)
            xpad_ref[pl.ds((H + 1) * Wp + 1, Wp - 1), :] = (
                jnp.zeros((Wp - 1, Cin), jnp.float32))

        win0 = pl.multiple_of(t * (TH * s * Wp), 8)          # flat window start

        # ---- expand: 1x1 conv (MXU) + BN + ReLU6 into the hidden scratch ---
        if has_expand:
            xwin = xpad_ref[pl.ds(win0, LWIN), :]            # (LWIN, Cin)
            h = jnp.dot(xwin.astype(mm_dtype), w1_ref[...],
                        preferred_element_type=jnp.float32)
            h = jnp.clip(h + b1_ref[...], 0.0, 6.0)
            # conv-padding positions must be zero (expand(0)=relu6(bias)!=0):
            # one multiply with a precomputed 0/1 mask.
            h = h * mask_ref[pl.ds(win0, LWIN), :]
            # TODO(synk): chunk this store over row groups if LWIN*HID_P gets
            # large enough to pressure VMEM on real feature-map sizes.
            hwin_ref[...] = h
            tap_ref, tap_base = hwin_ref, 0                  # static tap offsets
        else:
            tap_ref, tap_base = xpad_ref, win0               # hidden == input

        # ---- depthwise 3x3 + BN + ReLU6, only at kept output positions -----
        wdw = wdw_ref[...]                                   # (9, HID_P)
        bdw = bdw_ref[...]                                   # (1, HID_P)
        for i in range(TH):                                  # static unroll
            acc = jnp.zeros((Wo, HID_P), jnp.float32)
            for kh in range(3):
                for kw in range(3):
                    k = kh * 3 + kw
                    start = tap_base + (i * s + kh) * Wp + kw
                    if s == 1:
                        tap = tap_ref[pl.ds(start, Wo), :]
                    else:                                    # strided: no wasted FMAs
                        tap = tap_ref[pl.ds(start, Wo, stride=s), :]
                    acc = acc + tap * wdw[k:k + 1, :]
            dw_ref[i * Wo:(i + 1) * Wo, :] = jnp.clip(acc + bdw, 0.0, 6.0)

        # ---- project: ONE matmul for the tile, ONE lane-dense store --------
        y = jnp.dot(dw_ref[...].astype(mm_dtype), w2_ref[...],
                    preferred_element_type=jnp.float32)
        y = y + b2_ref[...]
        if use_res:
            res = jnp.concatenate([x_ref[t * TH + i] for i in range(TH)],
                                  axis=0)                    # (TH*Wo, Cin)
            # Inject the Cin residual lanes into the COUT_P-wide slab via a
            # tiny matmul with a fixed identity (avoids lane-padding ops).
            y = y + jnp.dot(res.astype(mm_dtype), rproj_ref[...],
                            preferred_element_type=jnp.float32)
        o_ref[...] = y

    return kernel


# ----------------------------------------------------------------------------
# Wrappers
# ----------------------------------------------------------------------------
def inverted_residual_forward_nhwc(x, params, *, stride, expand_ratio,
                                   matmul_dtype=jnp.bfloat16):
    """Fused InvertedResidual forward on NHWC float32 input."""
    N, H, W, Cin = x.shape
    s = int(stride)
    hidden = params["w_dw"].shape[-1]
    Cout = params["w_pw2"].shape[1]
    has_expand = expand_ratio != 1
    use_res = (s == 1) and (Cin == Cout)

    Ho = (H + 2 - 3) // s + 1
    Wo = (W + 2 - 3) // s + 1
    Wp = _round_up(W + 2, 8)                     # row pitch (no pow2 waste)
    FLAT = (H + 2) * Wp
    HID_P = _round_up(hidden, 128) if has_expand else Cin   # lane pad is free
    COUT_P = _round_up(Cout, 128)                # lane-dense output store

    x = x.astype(jnp.float32)
    f32 = jnp.float32

    # ---- fold BN (inference) scales into the weights, zero-pad channel dims -
    wdw = params["w_dw"].reshape(9, hidden) * params["scale_dw"].reshape(-1)[None, :]
    bdw = params["bias_dw"].reshape(1, hidden)
    w2 = params["w_pw2"] * params["scale2"].reshape(-1)[None, :]
    b2 = params["bias2"].reshape(1, Cout)

    def pad2(a, r, c):
        a = a.astype(f32)
        return jnp.pad(a, ((0, r - a.shape[0]), (0, c - a.shape[1])))

    wdw = pad2(wdw, 9, HID_P)                    # depthwise stays f32 (v5e-safe)
    bdw = pad2(bdw, 1, HID_P)
    w2 = pad2(w2, HID_P, COUT_P).astype(matmul_dtype)
    b2 = pad2(b2, 1, COUT_P)

    inputs = [x]
    in_specs = [pl.BlockSpec((None, H, W, Cin), lambda n, t: (n, 0, 0, 0))]

    def resident(a):
        nd = a.ndim
        # TODO(synk): pipeline_mode=pl.Buffered(1) would drop the pointless
        # double-buffer on these constant-index blocks; kept at the default for
        # lowering safety.
        return pl.BlockSpec(a.shape, lambda n, t, _nd=nd: (0,) * _nd)

    if has_expand:
        w1 = params["w_pw1"] * params["scale1"].reshape(-1)[None, :]
        w1 = pad2(w1, Cin, HID_P).astype(matmul_dtype)
        b1 = pad2(params["bias1"].reshape(1, hidden), 1, HID_P)
        q = np.arange(FLAT)
        mask = (((q // Wp >= 1) & (q // Wp <= H) & (q % Wp >= 1) & (q % Wp <= W))
                .astype(np.float32).reshape(FLAT, 1))
        for a in (mask, w1, b1):
            inputs.append(a)
            in_specs.append(resident(a))
    for a in (wdw, bdw, w2, b2):
        inputs.append(a)
        in_specs.append(resident(a))
    if use_res:
        rproj = jnp.asarray(np.eye(Cin, COUT_P, dtype=np.float32),
                            dtype=matmul_dtype)
        inputs.append(rproj)
        in_specs.append(resident(rproj))

    weight_bytes = sum(int(np.prod(a.shape)) * a.dtype.itemsize
                       for a in inputs[1:])
    limit = _vmem_limit_bytes()
    TH = _pick_row_tile(Ho=Ho, Wo=Wo, Wp=Wp, s=s, H=H, W=W, Cin=Cin,
                        HID_P=HID_P, COUT_P=COUT_P, has_expand=has_expand,
                        weight_bytes=weight_bytes, limit_bytes=limit)
    T = Ho // TH
    THWo = TH * Wo
    LWIN = ((TH - 1) * s + 3) * Wp

    scratch = [pltpu.VMEM((FLAT, Cin), jnp.float32)]
    if has_expand:
        scratch.append(pltpu.VMEM((LWIN, HID_P), jnp.float32))
    scratch.append(pltpu.VMEM((THWo, HID_P), jnp.float32))

    kernel = _make_kernel(has_expand=has_expand, use_res=use_res, s=s, H=H,
                          W=W, Cin=Cin, HID_P=HID_P, COUT_P=COUT_P, TH=TH,
                          Wo=Wo, Wp=Wp, LWIN=LWIN, mm_dtype=matmul_dtype)

    # TODO(synk): for batch-1 inference on v7x, split the row-tile axis into an
    # outer size-2 "parallel" axis so both TensorCores get work.
    out = pl.pallas_call(
        kernel,
        out_shape=jax.ShapeDtypeStruct((N, Ho * Wo, COUT_P), jnp.float32),
        grid=(N, T),
        in_specs=in_specs,
        out_specs=pl.BlockSpec((None, THWo, COUT_P), lambda n, t: (n, t, 0)),
        scratch_shapes=scratch,
        compiler_params=pltpu.CompilerParams(
            dimension_semantics=("parallel", "arbitrary"),
            vmem_limit_bytes=limit),
    )(*inputs)

    # lane-dense (N, Ho*Wo, 128k) kernel output -> (N, Ho, Wo, Cout)
    return out.reshape(N, Ho, Wo, COUT_P)[..., :Cout]


def inverted_residual_forward(x_nchw, params, *, stride, expand_ratio,
                              matmul_dtype=jnp.bfloat16):
    """Forward pass of InvertedResidual.  Input/output are NCHW float32.
    The NCHW<->NHWC transposes only honour the PyTorch interface."""
    x = jnp.transpose(x_nchw, (0, 2, 3, 1))
    out = inverted_residual_forward_nhwc(x, params, stride=stride,
                                         expand_ratio=expand_ratio,
                                         matmul_dtype=matmul_dtype)
    return jnp.transpose(out, (0, 3, 1, 2))


# ----------------------------------------------------------------------------
# Deterministic parameter construction + pure-JAX reference
# ----------------------------------------------------------------------------
def make_params(key, in_channels, out_channels, expand_ratio):
    hidden = in_channels * expand_ratio
    ks = jax.random.split(key, 12)

    def bn_fold(kg, kb, km, kv, c):
        gamma = 1.0 + 0.1 * jax.random.normal(kg, (c,), jnp.float32)
        beta = 0.1 * jax.random.normal(kb, (c,), jnp.float32)
        mean = 0.1 * jax.random.normal(km, (c,), jnp.float32)
        var = jnp.abs(jax.random.normal(kv, (c,), jnp.float32)) + 0.5
        scale = gamma / jnp.sqrt(var + 1e-5)
        bias = beta - mean * scale
        return scale.reshape(1, c), bias.reshape(1, c)

    p = {}
    p["w_pw1"] = 0.2 * jax.random.normal(ks[0], (in_channels, hidden), jnp.float32)
    p["scale1"], p["bias1"] = bn_fold(ks[1], ks[2], ks[3], ks[4], hidden)
    p["w_dw"] = 0.2 * jax.random.normal(ks[5], (3, 3, hidden), jnp.float32)
    p["scale_dw"], p["bias_dw"] = bn_fold(ks[6], ks[7], ks[8], ks[9], hidden)
    p["w_pw2"] = 0.2 * jax.random.normal(ks[10], (hidden, out_channels), jnp.float32)
    p["scale2"], p["bias2"] = bn_fold(ks[11], ks[0], ks[1], ks[2], out_channels)
    return p


def reference_forward(x_nchw, params, *, stride, expand_ratio):
    """Pure-jnp f32 reference (module semantics) for verification."""
    N, Cin, H, W = x_nchw.shape
    Cout = params["w_pw2"].shape[1]
    use_res = (stride == 1) and (Cin == Cout)
    x = jnp.transpose(x_nchw, (0, 2, 3, 1)).astype(jnp.float32)

    if expand_ratio != 1:
        h = jnp.einsum("nhwc,cd->nhwd", x, params["w_pw1"])
        h = jnp.clip(h * params["scale1"] + params["bias1"], 0.0, 6.0)
    else:
        h = x
    hp = jnp.pad(h, ((0, 0), (1, 1), (1, 1), (0, 0)))
    Ho = (H + 2 - 3) // stride + 1
    Wo = (W + 2 - 3) // stride + 1
    acc = jnp.zeros((N, Ho, Wo, h.shape[-1]), jnp.float32)
    for kh in range(3):
        for kw in range(3):
            patch = hp[:, kh:kh + (Ho - 1) * stride + 1:stride,
                       kw:kw + (Wo - 1) * stride + 1:stride, :]
            acc = acc + patch * params["w_dw"][kh, kw][None, None, None, :]
    h = jnp.clip(acc * params["scale_dw"] + params["bias_dw"], 0.0, 6.0)
    out = jnp.einsum("nhwc,cd->nhwd", h, params["w_pw2"])
    out = out * params["scale2"] + params["bias2"]
    if use_res:
        out = out + x
    return jnp.transpose(out, (0, 3, 1, 2))


if __name__ == "__main__":
    key = jax.random.PRNGKey(0)
    keys = jax.random.split(key, 4)

    # f32 configs prove structural exactness (tight tol); bf16 configs exercise
    # the MXU-native path (loosened tol: bf16 inputs, f32 accumulation).
    configs = [
        # name,            N  Cin Cout  H   W  s  er  mm_dtype       rtol   atol
        ("s1_e3_res_f32",  2, 8,  8,   16, 16, 1, 3, jnp.float32,   1e-4, 1e-4),
        ("s1_e3_res_bf16", 2, 8,  8,   16, 16, 1, 3, jnp.bfloat16,  5e-2, 5e-2),
        ("s2_e6_bf16",     2, 8, 16,   16, 16, 2, 6, jnp.bfloat16,  5e-2, 5e-2),
        ("s1_e1_res_f32",  2, 8,  8,   16, 16, 1, 1, jnp.float32,   1e-4, 1e-4),
    ]
    for i, (name, N, Cin, Cout, H, W, stride, er, mdt, rtol, atol) in enumerate(configs):
        kx, kp = jax.random.split(keys[i])
        x = jax.random.normal(kx, (N, Cin, H, W), jnp.float32)
        params = make_params(kp, Cin, Cout, er)
        fwd = jax.jit(functools.partial(inverted_residual_forward, stride=stride,
                                        expand_ratio=er, matmul_dtype=mdt))
        out = jax.block_until_ready(fwd(x, params))
        ref = reference_forward(x, params, stride=stride, expand_ratio=er)
        Ho = (H + 2 - 3) // stride + 1
        Wo = (W + 2 - 3) // stride + 1
        assert out.shape == (N, Cout, Ho, Wo), name
        np.testing.assert_allclose(np.asarray(out), np.asarray(ref),
                                   rtol=rtol, atol=atol, err_msg=name)
    print("KERNEL_OK")
</pallas_src>

<mosaic_0001>
module attributes {stable_mosaic.version = 11 : i64} {
  func.func @kernel(%arg0: i32, %arg1: i32, %arg2: memref<1x16x16x8xf32, #tpu.memory_space<vmem>>, %arg3: memref<432x1xf32, #tpu.memory_space<vmem>>, %arg4: memref<8x128xf32, #tpu.memory_space<vmem>>, %arg5: memref<1x128xf32, #tpu.memory_space<vmem>>, %arg6: memref<9x128xf32, #tpu.memory_space<vmem>>, %arg7: memref<1x128xf32, #tpu.memory_space<vmem>>, %arg8: memref<128x128xf32, #tpu.memory_space<vmem>>, %arg9: memref<1x128xf32, #tpu.memory_space<vmem>>, %arg10: memref<8x128xf32, #tpu.memory_space<vmem>>, %arg11: memref<1x256x128xf32, #tpu.memory_space<vmem>>, %arg12: memref<432x8xf32, #tpu.memory_space<vmem>>, %arg13: memref<432x128xf32, #tpu.memory_space<vmem>>, %arg14: memref<256x128xf32, #tpu.memory_space<vmem>>) attributes {dimension_semantics = [#tpu.dimension_semantics<parallel>, #tpu.dimension_semantics<arbitrary>], iteration_bounds = array<i64: 2, 1>, scalar_prefetch = 0 : i64, scratch_operands = 3 : i64, tpu.core_type = #tpu.core_type<tc>, window_params = [{transform_indices = @transform_0, window_bounds = array<i64: 1, 16, 16, 8>}, {pipeline_mode = #tpu.pipeline_mode<synchronous>, transform_indices = @transform_1, window_bounds = array<i64: 432, 1>}, {pipeline_mode = #tpu.pipeline_mode<synchronous>, transform_indices = @transform_2, window_bounds = array<i64: 8, 128>}, {pipeline_mode = #tpu.pipeline_mode<synchronous>, transform_indices = @transform_3, window_bounds = array<i64: 1, 128>}, {pipeline_mode = #tpu.pipeline_mode<synchronous>, transform_indices = @transform_4, window_bounds = array<i64: 9, 128>}, {pipeline_mode = #tpu.pipeline_mode<synchronous>, transform_indices = @transform_5, window_bounds = array<i64: 1, 128>}, {pipeline_mode = #tpu.pipeline_mode<synchronous>, transform_indices = @transform_6, window_bounds = array<i64: 128, 128>}, {pipeline_mode = #tpu.pipeline_mode<synchronous>, transform_indices = @transform_7, window_bounds = array<i64: 1, 128>}, {pipeline_mode = #tpu.pipeline_mode<synchronous>, transform_indices = @transform_8, window_bounds = array<i64: 8, 128>}, {transform_indices = @transform_9, window_bounds = array<i64: 1, 256, 128>}]} {
    %c0_i32 = arith.constant 0 : i32
    %0 = arith.cmpi eq, %arg1, %c0_i32 : i32
    %1 = arith.extui %0 : i1 to i32
    %c0_i32_0 = arith.constant 0 : i32
    %2 = arith.cmpi ne, %1, %c0_i32_0 : i32
    scf.if %2 {
      %cst_396 = arith.constant 0.000000e+00 : f32
      %964 = vector.broadcast %cst_396 : f32 to vector<25x8xf32>
      %c0_397 = arith.constant 0 : index
      %c0_398 = arith.constant 0 : index
      %965 = vector.load %arg12[%c0_397, %c0_398] : memref<432x8xf32, #tpu.memory_space<vmem>>, vector<25x8xf32>
      tpu.vector_store %arg12[%c0_397, %c0_398], %964 {strides = array<i32>} : memref<432x8xf32, #tpu.memory_space<vmem>>, vector<25x8xf32>,
      %cst_399 = arith.constant 0.000000e+00 : f32
      %966 = vector.broadcast %cst_399 : f32 to vector<8x8xf32>
      %c0_400 = arith.constant 0 : index
      %c0_401 = arith.constant 0 : index
      %c0_402 = arith.constant 0 : index
      %c0_403 = arith.constant 0 : index
      %967 = vector.load %arg2[%c0_400, %c0_401, %c0_402, %c0_403] : memref<1x16x16x8xf32, #tpu.memory_space<vmem>>, vector<1x1x16x8xf32>
      %968 = vector.shape_cast %967 : vector<1x1x16x8xf32> to vector<16x8xf32>
      %c25_404 = arith.constant 25 : index
      %c0_405 = arith.constant 0 : index
      %969 = vector.load %arg12[%c25_404, %c0_405] : memref<432x8xf32, #tpu.memory_space<vmem>>, vector<16x8xf32>
      tpu.vector_store %arg12[%c25_404, %c0_405], %968 {strides = array<i32>} : memref<432x8xf32, #tpu.memory_space<vmem>>, vector<16x8xf32>,
      %c41 = arith.constant 41 : index
      %c0_406 = arith.constant 0 : index
      %970 = vector.load %arg12[%c41, %c0_406] : memref<432x8xf32, #tpu.memory_space<vmem>>, vector<8x8xf32>
      tpu.vector_store %arg12[%c41, %c0_406], %966 {strides = array<i32>} : memref<432x8xf32, #tpu.memory_space<vmem>>, vector<8x8xf32>,
      %c0_407 = arith.constant 0 : index
      %c1_408 = arith.constant 1 : index
      %c0_409 = arith.constant 0 : index
      %c0_410 = arith.constant 0 : index
      %971 = vector.load %arg2[%c0_407, %c1_408, %c0_409, %c0_410] : memref<1x16x16x8xf32, #tpu.memory_space<vmem>>, vector<1x1x16x8xf32>
      %972 = vector.shape_cast %971 : vector<1x1x16x8xf32> to vector<16x8xf32>
      %c49_411 = arith.constant 49 : index
      %c0_412 = arith.constant 0 : index
      %973 = vector.load %arg12[%c49_411, %c0_412] : memref<432x8xf32, #tpu.memory_space<vmem>>, vector<16x8xf32>
      tpu.vector_store %arg12[%c49_411, %c0_412], %972 {strides = array<i32>} : memref<432x8xf32, #tpu.memory_space<vmem>>, vector<16x8xf32>,
      %c65 = arith.constant 65 : index
      %c0_413 = arith.constant 0 : index
      %974 = vector.load %arg12[%c65, %c0_413] : memref<432x8xf32, #tpu.memory_space<vmem>>, vector<8x8xf32>
      tpu.vector_store %arg12[%c65, %c0_413], %966 {strides = array<i32>} : memref<432x8xf32, #tpu.memory_space<vmem>>, vector<8x8xf32>,
      %c0_414 = arith.constant 0 : index
      %c2_415 = arith.constant 2 : index
      %c0_416 = arith.constant 0 : index
      %c0_417 = arith.constant 0 : index
      %975 = vector.load %arg2[%c0_414, %c2_415, %c0_416, %c0_417] : memref<1x16x16x8xf32, #tpu.memory_space<vmem>>, vector<1x1x16x8xf32>
      %976 = vector.shape_cast %975 : vector<1x1x16x8xf32> to vector<16x8xf32>
      %c73_418 = arith.constant 73 : index
      %c0_419 = arith.constant 0 : index
      %977 = vector.load %arg12[%c73_418, %c0_419] : memref<432x8xf32, #tpu.memory_space<vmem>>, vector<16x8xf32>
      tpu.vector_store %arg12[%c73_418, %c0_419], %976 {strides = array<i32>} : memref<432x8xf32, #tpu.memory_space<vmem>>, vector<16x8xf32>,
      %c89 = arith.constant 89 : index
      %c0_420 = arith.constant 0 : index
      %978 = vector.load %arg12[%c89, %c0_420] : memref<432x8xf32, #tpu.memory_space<vmem>>, vector<8x8xf32>
      tpu.vector_store %arg12[%c89, %c0_420], %966 {strides = array<i32>} : memref<432x8xf32, #tpu.memory_space<vmem>>, vector<8x8xf32>,
      %c0_421 = arith.constant 0 : index
      %c3 = arith.constant 3 : index
      %c0_422 = arith.constant 0 : index
      %c0_423 = arith.constant 0 : index
      %979 = vector.load %arg2[%c0_421, %c3, %c0_422, %c0_423] : memref<1x16x16x8xf32, #tpu.memory_space<vmem>>, vector<1x1x16x8xf32>
      %980 = vector.shape_cast %979 : vector<1x1x16x8xf32> to vector<16x8xf32>
      %c97_424 = arith.constant 97 : index
      %c0_425 = arith.constant 0 : index
      %981 = vector.load %arg12[%c97_424, %c0_425] : memref<432x8xf32, #tpu.memory_space<vmem>>, vector<16x8xf32>
      tpu.vector_store %arg12[%c97_424, %c0_425], %980 {strides = array<i32>} : memref<432x8xf32, #tpu.memory_space<vmem>>, vector<16x8xf32>,
      %c113 = arith.constant 113 : index
      %c0_426 = arith.constant 0 : index
      %982 = vector.load %arg12[%c113, %c0_426] : memref<432x8xf32, #tpu.memory_space<vmem>>, vector<8x8xf32>
      tpu.vector_store %arg12[%c113, %c0_426], %966 {strides = array<i32>} : memref<432x8xf32, #tpu.memory_space<vmem>>, vector<8x8xf32>,
      %c0_427 = arith.constant 0 : index
      %c4 = arith.constant 4 : index
      %c0_428 = arith.constant 0 : index
      %c0_429 = arith.constant 0 : index
      %983 = vector.load %arg2[%c0_427, %c4, %c0_428, %c0_429] : memref<1x16x16x8xf32, #tpu.memory_space<vmem>>, vector<1x1x16x8xf32>
      %984 = vector.shape_cast %983 : vector<1x1x16x8xf32> to vector<16x8xf32>
      %c121_430 = arith.constant 121 : index
      %c0_431 = arith.constant 0 : index
      %985 = vector.load %arg12[%c121_430, %c0_431] : memref<432x8xf32, #tpu.memory_space<vmem>>, vector<16x8xf32>
      tpu.vector_store %arg12[%c121_430, %c0_431], %984 {strides = array<i32>} : memref<432x8xf32, #tpu.memory_space<vmem>>, vector<16x8xf32>,
      %c137 = arith.constant 137 : index
      %c0_432 = arith.constant 0 : index
      %986 = vector.load %arg12[%c137, %c0_432] : memref<432x8xf32, #tpu.memory_space<vmem>>, vector<8x8xf32>
      tpu.vector_store %arg12[%c137, %c0_432], %966 {strides = array<i32>} : memref<432x8xf32, #tpu.memory_space<vmem>>, vector<8x8xf32>,
      %c0_433 = arith.constant 0 : index
      %c5 = arith.constant 5 : index
      %c0_434 = arith.constant 0 : index
      %c0_435 = arith.constant 0 : index
      %987 = vector.load %arg2[%c0_433, %c5, %c0_434, %c0_435] : memref<1x16x16x8xf32, #tpu.memory_space<vmem>>, vector<1x1x16x8xf32>
      %988 = vector.shape_cast %987 : vector<1x1x16x8xf32> to vector<16x8xf32>
      %c145_436 = arith.constant 145 : index
      %c0_437 = arith.constant 0 : index
      %989 = vector.load %arg12[%c145_436, %c0_437] : memref<432x8xf32, #tpu.memory_space<vmem>>, vector<16x8xf32>
      tpu.vector_store %arg12[%c145_436, %c0_437], %988 {strides = array<i32>} : memref<432x8xf32, #tpu.memory_space<vmem>>, vector<16x8xf32>,
      %c161 = arith.constant 161 : index
      %c0_438 = arith.constant 0 : index
      %990 = vector.load %arg12[%c161, %c0_438] : memref<432x8xf32, #tpu.memory_space<vmem>>, vector<8x8xf32>
      tpu.vector_store %arg12[%c161, %c0_438], %966 {strides = array<i32>} : memref<432x8xf32, #tpu.memory_space<vmem>>, vector<8x8xf32>,
      %c0_439 = arith.constant 0 : index
      %c6 = arith.constant 6 : index
      %c0_440 = arith.constant 0 : index
      %c0_441 = arith.constant 0 : index
      %991 = vector.load %arg2[%c0_439, %c6, %c0_440, %c0_441] : memref<1x16x16x8xf32, #tpu.memory_space<vmem>>, vector<1x1x16x8xf32>
      %992 = vector.shape_cast %991 : vector<1x1x16x8xf32> to vector<16x8xf32>
      %c169_442 = arith.constant 169 : index
      %c0_443 = arith.constant 0 : index
      %993 = vector.load %arg12[%c169_442, %c0_443] : memref<432x8xf32, #tpu.memory_space<vmem>>, vector<16x8xf32>
      tpu.vector_store %arg12[%c169_442, %c0_443], %992 {strides = array<i32>} : memref<432x8xf32, #tpu.memory_space<vmem>>, vector<16x8xf32>,
      %c185 = arith.constant 185 : index
      %c0_444 = arith.constant 0 : index
      %994 = vector.load %arg12[%c185, %c0_444] : memref<432x8xf32, #tpu.memory_space<vmem>>, vector<8x8xf32>
      tpu.vector_store %arg12[%c185, %c0_444], %966 {strides = array<i32>} : memref<432x8xf32, #tpu.memory_space<vmem>>, vector<8x8xf32>,
      %c0_445 = arith.constant 0 : index
      %c7 = arith.constant 7 : index
      %c0_446 = arith.constant 0 : index
      %c0_447 = arith.constant 0 : index
      %995 = vector.load %arg2[%c0_445, %c7, %c0_446, %c0_447] : memref<1x16x16x8xf32, #tpu.memory_space<vmem>>, vector<1x1x16x8xf32>
      %996 = vector.shape_cast %995 : vector<1x1x16x8xf32> to vector<16x8xf32>
      %c193_448 = arith.constant 193 : index
      %c0_449 = arith.constant 0 : index
      %997 = vector.load %arg12[%c193_448, %c0_449] : memref<432x8xf32, #tpu.memory_space<vmem>>, vector<16x8xf32>
      tpu.vector_store %arg12[%c193_448, %c0_449], %996 {strides = array<i32>} : memref<432x8xf32, #tpu.memory_space<vmem>>, vector<16x8xf32>,
      %c209 = arith.constant 209 : index
      %c0_450 = arith.constant 0 : index
      %998 = vector.load %arg12[%c209, %c0_450] : memref<432x8xf32, #tpu.memory_space<vmem>>, vector<8x8xf32>
      tpu.vector_store %arg12[%c209, %c0_450], %966 {strides = array<i32>} : memref<432x8xf32, #tpu.memory_space<vmem>>, vector<8x8xf32>,
      %c0_451 = arith.constant 0 : index
      %c8 = arith.constant 8 : index
      %c0_452 = arith.constant 0 : index
      %c0_453 = arith.constant 0 : index
      %999 = vector.load %arg2[%c0_451, %c8, %c0_452, %c0_453] : memref<1x16x16x8xf32, #tpu.memory_space<vmem>>, vector<1x1x16x8xf32>
      %1000 = vector.shape_cast %999 : vector<1x1x16x8xf32> to vector<16x8xf32>
      %c217_454 = arith.constant 217 : index
      %c0_455 = arith.constant 0 : index
      %1001 = vector.load %arg12[%c217_454, %c0_455] : memref<432x8xf32, #tpu.memory_space<vmem>>, vector<16x8xf32>
      tpu.vector_store %arg12[%c217_454, %c0_455], %1000 {strides = array<i32>} : memref<432x8xf32, #tpu.memory_space<vmem>>, vector<16x8xf32>,
      %c233 = arith.constant 233 : index
      %c0_456 = arith.constant 0 : index
      %1002 = vector.load %arg12[%c233, %c0_456] : memref<432x8xf32, #tpu.memory_space<vmem>>, vector<8x8xf32>
      tpu.vector_store %arg12[%c233, %c0_456], %966 {strides = array<i32>} : memref<432x8xf32, #tpu.memory_space<vmem>>, vector<8x8xf32>,
      %c0_457 = arith.constant 0 : index
      %c9 = arith.constant 9 : index
      %c0_458 = arith.constant 0 : index
      %c0_459 = arith.constant 0 : index
      %1003 = vector.load %arg2[%c0_457, %c9, %c0_458, %c0_459] : memref<1x16x16x8xf32, #tpu.memory_space<vmem>>, vector<1x1x16x8xf32>
      %1004 = vector.shape_cast %1003 : vector<1x1x16x8xf32> to vector<16x8xf32>
      %c241_460 = arith.constant 241 : index
      %c0_461 = arith.constant 0 : index
      %1005 = vector.load %arg12[%c241_460, %c0_461] : memref<432x8xf32, #tpu.memory_space<vmem>>, vector<16x8xf32>
      tpu.vector_store %arg12[%c241_460, %c0_461], %1004 {strides = array<i32>} : memref<432x8xf32, #tpu.memory_space<vmem>>, vector<16x8xf32>,
      %c257 = arith.constant 257 : index
      %c0_462 = arith.constant 0 : index
      %1006 = vector.load %arg12[%c257, %c0_462] : memref<432x8xf32, #tpu.memory_space<vmem>>, vector<8x8xf32>
      tpu.vector_store %arg12[%c257, %c0_462], %966 {strides = array<i32>} : memref<432x8xf32, #tpu.memory_space<vmem>>, vector<8x8xf32>,
      %c0_463 = arith.constant 0 : index
      %c10 = arith.constant 10 : index
      %c0_464 = arith.constant 0 : index
      %c0_465 = arith.constant 0 : index
      %1007 = vector.load %arg2[%c0_463, %c10, %c0_464, %c0_465] : memref<1x16x16x8xf32, #tpu.memory_space<vmem>>, vector<1x1x16x8xf32>
      %1008 = vector.shape_cast %1007 : vector<1x1x16x8xf32> to vector<16x8xf32>
      %c265_466 = arith.constant 265 : index
      %c0_467 = arith.constant 0 : index
      %1009 = vector.load %arg12[%c265_466, %c0_467] : memref<432x8xf32, #tpu.memory_space<vmem>>, vector<16x8xf32>
      tpu.vector_store %arg12[%c265_466, %c0_467], %1008 {strides = array<i32>} : memref<432x8xf32, #tpu.memory_space<vmem>>, vector<16x8xf32>,
      %c281 = arith.constant 281 : index
      %c0_468 = arith.constant 0 : index
      %1010 = vector.load %arg12[%c281, %c0_468] : memref<432x8xf32, #tpu.memory_space<vmem>>, vector<8x8xf32>
      tpu.vector_store %arg12[%c281, %c0_468], %966 {strides = array<i32>} : memref<432x8xf32, #tpu.memory_space<vmem>>, vector<8x8xf32>,
      %c0_469 = arith.constant 0 : index
      %c11 = arith.constant 11 : index
      %c0_470 = arith.constant 0 : index
      %c0_471 = arith.constant 0 : index
      %1011 = vector.load %arg2[%c0_469, %c11, %c0_470, %c0_471] : memref<1x16x16x8xf32, #tpu.memory_space<vmem>>, vector<1x1x16x8xf32>
      %1012 = vector.shape_cast %1011 : vector<1x1x16x8xf32> to vector<16x8xf32>
      %c289_472 = arith.constant 289 : index
      %c0_473 = arith.constant 0 : index
      %1013 = vector.load %arg12[%c289_472, %c0_473] : memref<432x8xf32, #tpu.memory_space<vmem>>, vector<16x8xf32>
      tpu.vector_store %arg12[%c289_472, %c0_473], %1012 {strides = array<i32>} : memref<432x8xf32, #tpu.memory_space<vmem>>, vector<16x8xf32>,
      %c305 = arith.constant 305 : index
      %c0_474 = arith.constant 0 : index
      %1014 = vector.load %arg12[%c305, %c0_474] : memref<432x8xf32, #tpu.memory_space<vmem>>, vector<8x8xf32>
      tpu.vector_store %arg12[%c305, %c0_474], %966 {strides = array<i32>} : memref<432x8xf32, #tpu.memory_space<vmem>>, vector<8x8xf32>,
      %c0_475 = arith.constant 0 : index
      %c12 = arith.constant 12 : index
      %c0_476 = arith.constant 0 : index
      %c0_477 = arith.constant 0 : index
      %1015 = vector.load %arg2[%c0_475, %c12, %c0_476, %c0_477] : memref<1x16x16x8xf32, #tpu.memory_space<vmem>>, vector<1x1x16x8xf32>
      %1016 = vector.shape_cast %1015 : vector<1x1x16x8xf32> to vector<16x8xf32>
      %c313_478 = arith.constant 313 : index
      %c0_479 = arith.constant 0 : index
      %1017 = vector.load %arg12[%c313_478, %c0_479] : memref<432x8xf32, #tpu.memory_space<vmem>>, vector<16x8xf32>
      tpu.vector_store %arg12[%c313_478, %c0_479], %1016 {strides = array<i32>} : memref<432x8xf32, #tpu.memory_space<vmem>>, vector<16x8xf32>,
      %c329 = arith.constant 329 : index
      %c0_480 = arith.constant 0 : index
      %1018 = vector.load %arg12[%c329, %c0_480] : memref<432x8xf32, #tpu.memory_space<vmem>>, vector<8x8xf32>
      tpu.vector_store %arg12[%c329, %c0_480], %966 {strides = array<i32>} : memref<432x8xf32, #tpu.memory_space<vmem>>, vector<8x8xf32>,
      %c0_481 = arith.constant 0 : index
      %c13 = arith.constant 13 : index
      %c0_482 = arith.constant 0 : index
      %c0_483 = arith.constant 0 : index
      %1019 = vector.load %arg2[%c0_481, %c13, %c0_482, %c0_483] : memref<1x16x16x8xf32, #tpu.memory_space<vmem>>, vector<1x1x16x8xf32>
      %1020 = vector.shape_cast %1019 : vector<1x1x16x8xf32> to vector<16x8xf32>
      %c337_484 = arith.constant 337 : index
      %c0_485 = arith.constant 0 : index
      %1021 = vector.load %arg12[%c337_484, %c0_485] : memref<432x8xf32, #tpu.memory_space<vmem>>, vector<16x8xf32>
      tpu.vector_store %arg12[%c337_484, %c0_485], %1020 {strides = array<i32>} : memref<432x8xf32, #tpu.memory_space<vmem>>, vector<16x8xf32>,
      %c353 = arith.constant 353 : index
      %c0_486 = arith.constant 0 : index
      %1022 = vector.load %arg12[%c353, %c0_486] : memref<432x8xf32, #tpu.memory_space<vmem>>, vector<8x8xf32>
      tpu.vector_store %arg12[%c353, %c0_486], %966 {strides = array<i32>} : memref<432x8xf32, #tpu.memory_space<vmem>>, vector<8x8xf32>,
      %c0_487 = arith.constant 0 : index
      %c14 = arith.constant 14 : index
      %c0_488 = arith.constant 0 : index
      %c0_489 = arith.constant 0 : index
      %1023 = vector.load %arg2[%c0_487, %c14, %c0_488, %c0_489] : memref<1x16x16x8xf32, #tpu.memory_space<vmem>>, vector<1x1x16x8xf32>
      %1024 = vector.shape_cast %1023 : vector<1x1x16x8xf32> to vector<16x8xf32>
      %c361_490 = arith.constant 361 : index
      %c0_491 = arith.constant 0 : index
      %1025 = vector.load %arg12[%c361_490, %c0_491] : memref<432x8xf32, #tpu.memory_space<vmem>>, vector<16x8xf32>
      tpu.vector_store %arg12[%c361_490, %c0_491], %1024 {strides = array<i32>} : memref<432x8xf32, #tpu.memory_space<vmem>>, vector<16x8xf32>,
      %c377 = arith.constant 377 : index
      %c0_492 = arith.constant 0 : index
      %1026 = vector.load %arg12[%c377, %c0_492] : memref<432x8xf32, #tpu.memory_space<vmem>>, vector<8x8xf32>
      tpu.vector_store %arg12[%c377, %c0_492], %966 {strides = array<i32>} : memref<432x8xf32, #tpu.memory_space<vmem>>, vector<8x8xf32>,
      %c0_493 = arith.constant 0 : index
      %c15 = arith.constant 15 : index
      %c0_494 = arith.constant 0 : index
      %c0_495 = arith.constant 0 : index
      %1027 = vector.load %arg2[%c0_493, %c15, %c0_494, %c0_495] : memref<1x16x16x8xf32, #tpu.memory_space<vmem>>, vector<1x1x16x8xf32>
      %1028 = vector.shape_cast %1027 : vector<1x1x16x8xf32> to vector<16x8xf32>
      %c385_496 = arith.constant 385 : index
      %c0_497 = arith.constant 0 : index
      %1029 = vector.load %arg12[%c385_496, %c0_497] : memref<432x8xf32, #tpu.memory_space<vmem>>, vector<16x8xf32>
      tpu.vector_store %arg12[%c385_496, %c0_497], %1028 {strides = array<i32>} : memref<432x8xf32, #tpu.memory_space<vmem>>, vector<16x8xf32>,
      %c401 = arith.constant 401 : index
      %c0_498 = arith.constant 0 : index
      %1030 = vector.load %arg12[%c401, %c0_498] : memref<432x8xf32, #tpu.memory_space<vmem>>, vector<8x8xf32>
      tpu.vector_store %arg12[%c401, %c0_498], %966 {strides = array<i32>} : memref<432x8xf32, #tpu.memory_space<vmem>>, vector<8x8xf32>,
      %cst_499 = arith.constant 0.000000e+00 : f32
      %1031 = vector.broadcast %cst_499 : f32 to vector<23x8xf32>
      %c409_500 = arith.constant 409 : index
      %c0_501 = arith.constant 0 : index
      %1032 = vector.load %arg12[%c409_500, %c0_501] : memref<432x8xf32, #tpu.memory_space<vmem>>, vector<23x8xf32>
      tpu.vector_store %arg12[%c409_500, %c0_501], %1031 {strides = array<i32>} : memref<432x8xf32, #tpu.memory_space<vmem>>, vector<23x8xf32>,
    } else {
    }
    %c384_i32 = arith.constant 384 : i32
    %3 = arith.muli %arg1, %c384_i32 : i32
    %4 = tpu.assume_multiple %3, 8 : i32
    %5 = arith.index_cast %4 : i32 to index
    %c0 = arith.constant 0 : index
    %6 = vector.load %arg12[%5, %c0] : memref<432x8xf32, #tpu.memory_space<vmem>>, vector<432x8xf32>
    %c0_1 = arith.constant 0 : index
    %c0_2 = arith.constant 0 : index
    %7 = vector.load %arg4[%c0_1, %c0_2] : memref<8x128xf32, #tpu.memory_space<vmem>>, vector<8x128xf32>
    %cst = arith.constant dense<0.000000e+00> : vector<432x128xf32>
    %8 = tpu.matmul %6, %7, %cst {dimension_numbers = #tpu.dot_dimension_numbers<[1], [0], [0], [1], [0, 0, 1, 1], [], []>} : vector<432x8xf32>, vector<8x128xf32>, vector<432x128xf32> -> vector<432x128xf32>
    %c0_3 = arith.constant 0 : index
    %c0_4 = arith.constant 0 : index
    %9 = vector.load %arg5[%c0_3, %c0_4] : memref<1x128xf32, #tpu.memory_space<vmem>>, vector<1x128xf32>
    %10 = vector.broadcast %9 : vector<1x128xf32> to vector<432x128xf32>
    %11 = arith.addf %8, %10 : vector<432x128xf32>
    %cst_5 = arith.constant 0.000000e+00 : f32
    %cst_6 = arith.constant 6.000000e+00 : f32
    %12 = vector.broadcast %cst_5 : f32 to vector<432x128xf32>
    %13 = arith.maximumf %12, %11 : vector<432x128xf32>
    %14 = vector.broadcast %cst_6 : f32 to vector<432x128xf32>
    %15 = arith.minimumf %14, %13 : vector<432x128xf32>
    %16 = arith.index_cast %4 : i32 to index
    %c0_7 = arith.constant 0 : index
    %17 = vector.load %arg3[%16, %c0_7] : memref<432x1xf32, #tpu.memory_space<vmem>>, vector<432x1xf32>
    %18 = vector.broadcast %17 : vector<432x1xf32> to vector<432x128xf32>
    %19 = arith.mulf %15, %18 : vector<432x128xf32>
    %c0_8 = arith.constant 0 : index
    %c0_9 = arith.constant 0 : index
    %20 = vector.load %arg13[%c0_8, %c0_9] : memref<432x128xf32, #tpu.memory_space<vmem>>, vector<432x128xf32>
    tpu.vector_store %arg13[%c0_8, %c0_9], %19 {strides = array<i32>} : memref<432x128xf32, #tpu.memory_space<vmem>>, vector<432x128xf32>,
    %c0_10 = arith.constant 0 : index
    %c0_11 = arith.constant 0 : index
    %21 = vector.load %arg6[%c0_10, %c0_11] : memref<9x128xf32, #tpu.memory_space<vmem>>, vector<9x128xf32>
    %c0_12 = arith.constant 0 : index
    %c0_13 = arith.constant 0 : index
    %22 = vector.load %arg7[%c0_12, %c0_13] : memref<1x128xf32, #tpu.memory_space<vmem>>, vector<1x128xf32>
    %cst_14 = arith.constant 0.000000e+00 : f32
    %23 = vector.broadcast %cst_14 : f32 to vector<16x128xf32>
    %c0_15 = arith.constant 0 : index
    %c0_16 = arith.constant 0 : index
    %24 = vector.load %arg13[%c0_15, %c0_16] : memref<432x128xf32, #tpu.memory_space<vmem>>, vector<16x128xf32>
    %25 = vector.extract_strided_slice %21 {offsets = [0, 0], sizes = [1, 128], strides = [1, 1]} : vector<9x128xf32> to vector<1x128xf32>
    %26 = vector.broadcast %25 : vector<1x128xf32> to vector<16x128xf32>
    %27 = arith.mulf %24, %26 : vector<16x128xf32>
    %28 = arith.addf %23, %27 : vector<16x128xf32>
    %c1 = arith.constant 1 : index
    %c0_17 = arith.constant 0 : index
    %29 = vector.load %arg13[%c1, %c0_17] : memref<432x128xf32, #tpu.memory_space<vmem>>, vector<16x128xf32>
    %30 = vector.extract_strided_slice %21 {offsets = [1, 0], sizes = [1, 128], strides = [1, 1]} : vector<9x128xf32> to vector<1x128xf32>
    %31 = vector.broadcast %30 : vector<1x128xf32> to vector<16x128xf32>
    %32 = arith.mulf %29, %31 : vector<16x128xf32>
    %33 = arith.addf %28, %32 : vector<16x128xf32>
    %c2 = arith.constant 2 : index
    %c0_18 = arith.constant 0 : index
    %34 = vector.load %arg13[%c2, %c0_18] : memref<432x128xf32, #tpu.memory_space<vmem>>, vector<16x128xf32>
    %35 = vector.extract_strided_slice %21 {offsets = [2, 0], sizes = [1, 128], strides = [1, 1]} : vector<9x128xf32> to vector<1x128xf32>
    %36 = vector.broadcast %35 : vector<1x128xf32> to vector<16x128xf32>
    %37 = arith.mulf %34, %36 : vector<16x128xf32>
    %38 = arith.addf %33, %37 : vector<16x128xf32>
    %c24 = arith.constant 24 : index
    %c0_19 = arith.constant 0 : index
    %39 = vector.load %arg13[%c24, %c0_19] : memref<432x128xf32, #tpu.memory_space<vmem>>, vector<16x128xf32>
    %40 = vector.extract_strided_slice %21 {offsets = [3, 0], sizes = [1, 128], strides = [1, 1]} : vector<9x128xf32> to vector<1x128xf32>
    %41 = vector.broadcast %40 : vector<1x128xf32> to vector<16x128xf32>
    %42 = arith.mulf %39, %41 : vector<16x128xf32>
    %43 = arith.addf %38, %42 : vector<16x128xf32>
    %c25 = arith.constant 25 : index
    %c0_20 = arith.constant 0 : index
    %44 = vector.load %arg13[%c25, %c0_20] : memref<432x128xf32, #tpu.memory_space<vmem>>, vector<16x128xf32>
    %45 = vector.extract_strided_slice %21 {offsets = [4, 0], sizes = [1, 128], strides = [1, 1]} : vector<9x128xf32> to vector<1x128xf32>
    %46 = vector.broadcast %45 : vector<1x128xf32> to vector<16x128xf32>
    %47 = arith.mulf %44, %46 : vector<16x128xf32>
    %48 = arith.addf %43, %47 : vector<16x128xf32>
    %c26 = arith.constant 26 : index
    %c0_21 = arith.constant 0 : index
    %49 = vector.load %arg13[%c26, %c0_21] : memref<432x128xf32, #tpu.memory_space<vmem>>, vector<16x128xf32>
    %50 = vector.extract_strided_slice %21 {offsets = [5, 0], sizes = [1, 128], strides = [1, 1]} : vector<9x128xf32> to vector<1x128xf32>
    %51 = vector.broadcast %50 : vector<1x128xf32> to vector<16x128xf32>
    %52 = arith.mulf %49, %51 : vector<16x128xf32>
    %53 = arith.addf %48, %52 : vector<16x128xf32>
    %c48 = arith.constant 48 : index
    %c0_22 = arith.constant 0 : index
    %54 = vector.load %arg13[%c48, %c0_22] : memref<432x128xf32, #tpu.memory_space<vmem>>, vector<16x128xf32>
    %55 = vector.extract_strided_slice %21 {offsets = [6, 0], sizes = [1, 128], strides = [1, 1]} : vector<9x128xf32> to vector<1x128xf32>
    %56 = vector.broadcast %55 : vector<1x128xf32> to vector<16x128xf32>
    %57 = arith.mulf %54, %56 : vector<16x128xf32>
    %58 = arith.addf %53, %57 : vector<16x128xf32>
    %c49 = arith.constant 49 : index
    %c0_23 = arith.constant 0 : index
    %59 = vector.load %arg13[%c49, %c0_23] : memref<432x128xf32, #tpu.memory_space<vmem>>, vector<16x128xf32>
    %60 = vector.extract_strided_slice %21 {offsets = [7, 0], sizes = [1, 128], strides = [1, 1]} : vector<9x128xf32> to vector<1x128xf32>
    %61 = vector.broadcast %60 : vector<1x128xf32> to vector<16x128xf32>
    %62 = arith.mulf %59, %61 : vector<16x128xf32>
    %63 = arith.addf %58, %62 : vector<16x128xf32>
    %c50 = arith.constant 50 : index
    %c0_24 = arith.constant 0 : index
    %64 = vector.load %arg13[%c50, %c0_24] : memref<432x128xf32, #tpu.memory_space<vmem>>, vector<16x128xf32>
    %65 = vector.extract_strided_slice %21 {offsets = [8, 0], sizes = [1, 128], strides = [1, 1]} : vector<9x128xf32> to vector<1x128xf32>
    %66 = vector.broadcast %65 : vector<1x128xf32> to vector<16x128xf32>
    %67 = arith.mulf %64, %66 : vector<16x128xf32>
    %68 = arith.addf %63, %67 : vector<16x128xf32>
    %69 = vector.broadcast %22 : vector<1x128xf32> to vector<16x128xf32>
    %70 = arith.addf %68, %69 : vector<16x128xf32>
    %cst_25 = arith.constant 0.000000e+00 : f32
    %cst_26 = arith.constant 6.000000e+00 : f32
    %71 = vector.broadcast %cst_25 : f32 to vector<16x128xf32>
    %72 = arith.maximumf %71, %70 : vector<16x128xf32>
    %73 = vector.broadcast %cst_26 : f32 to vector<16x128xf32>
    %74 = arith.minimumf %73, %72 : vector<16x128xf32>
    %c0_27 = arith.constant 0 : index
    %c0_28 = arith.constant 0 : index
    %75 = vector.load %arg14[%c0_27, %c0_28] : memref<256x128xf32, #tpu.memory_space<vmem>>, vector<16x128xf32>
    tpu.vector_store %arg14[%c0_27, %c0_28], %74 {strides = array<i32>} : memref<256x128xf32, #tpu.memory_space<vmem>>, vector<16x128xf32>,
    %cst_29 = arith.constant 0.000000e+00 : f32
    %76 = vector.broadcast %cst_29 : f32 to vector<16x128xf32>
    %c24_30 = arith.constant 24 : index
    %c0_31 = arith.constant 0 : index
    %77 = vector.load %arg13[%c24_30, %c0_31] : memref<432x128xf32, #tpu.memory_space<vmem>>, vector<16x128xf32>
    %78 = vector.extract_strided_slice %21 {offsets = [0, 0], sizes = [1, 128], strides = [1, 1]} : vector<9x128xf32> to vector<1x128xf32>
    %79 = vector.broadcast %78 : vector<1x128xf32> to vector<16x128xf32>
    %80 = arith.mulf %77, %79 : vector<16x128xf32>
    %81 = arith.addf %76, %80 : vector<16x128xf32>
    %c25_32 = arith.constant 25 : index
    %c0_33 = arith.constant 0 : index
    %82 = vector.load %arg13[%c25_32, %c0_33] : memref<432x128xf32, #tpu.memory_space<vmem>>, vector<16x128xf32>
    %83 = vector.extract_strided_slice %21 {offsets = [1, 0], sizes = [1, 128], strides = [1, 1]} : vector<9x128xf32> to vector<1x128xf32>
    %84 = vector.broadcast %83 : vector<1x128xf32> to vector<16x128xf32>
    %85 = arith.mulf %82, %84 : vector<16x128xf32>
    %86 = arith.addf %81, %85 : vector<16x128xf32>
    %c26_34 = arith.constant 26 : index
    %c0_35 = arith.constant 0 : index
    %87 = vector.load %arg13[%c26_34, %c0_35] : memref<432x128xf32, #tpu.memory_space<vmem>>, vector<16x128xf32>
    %88 = vector.extract_strided_slice %21 {offsets = [2, 0], sizes = [1, 128], strides = [1, 1]} : vector<9x128xf32> to vector<1x128xf32>
    %89 = vector.broadcast %88 : vector<1x128xf32> to vector<16x128xf32>
    %90 = arith.mulf %87, %89 : vector<16x128xf32>
    %91 = arith.addf %86, %90 : vector<16x128xf32>
    %c48_36 = arith.constant 48 : index
    %c0_37 = arith.constant 0 : index
    %92 = vector.load %arg13[%c48_36, %c0_37] : memref<432x128xf32, #tpu.memory_space<vmem>>, vector<16x128xf32>
    %93 = vector.extract_strided_slice %21 {offsets = [3, 0], sizes = [1, 128], strides = [1, 1]} : vector<9x128xf32> to vector<1x128xf32>
    %94 = vector.broadcast %93 : vector<1x128xf32> to vector<16x128xf32>
    %95 = arith.mulf %92, %94 : vector<16x128xf32>
    %96 = arith.addf %91, %95 : vector<16x128xf32>
    %c49_38 = arith.constant 49 : index
    %c0_39 = arith.constant 0 : index
    %97 = vector.load %arg13[%c49_38, %c0_39] : memref<432x128xf32, #tpu.memory_space<vmem>>, vector<16x128xf32>
    %98 = vector.extract_strided_slice %21 {offsets = [4, 0], sizes = [1, 128], strides = [1, 1]} : vector<9x128xf32> to vector<1x128xf32>
    %99 = vector.broadcast %98 : vector<1x128xf32> to vector<16x128xf32>
    %100 = arith.mulf %97, %99 : vector<16x128xf32>
    %101 = arith.addf %96, %100 : vector<16x128xf32>
    %c50_40 = arith.constant 50 : index
    %c0_41 = arith.constant 0 : index
    %102 = vector.load %arg13[%c50_40, %c0_41] : memref<432x128xf32, #tpu.memory_space<vmem>>, vector<16x128xf32>
    %103 = vector.extract_strided_slice %21 {offsets = [5, 0], sizes = [1, 128], strides = [1, 1]} : vector<9x128xf32> to vector<1x128xf32>
    %104 = vector.broadcast %103 : vector<1x128xf32> to vector<16x128xf32>
    %105 = arith.mulf %102, %104 : vector<16x128xf32>
    %106 = arith.addf %101, %105 : vector<16x128xf32>
    %c72 = arith.constant 72 : index
    %c0_42 = arith.constant 0 : index
    %107 = vector.load %arg13[%c72, %c0_42] : memref<432x128xf32, #tpu.memory_space<vmem>>, vector<16x128xf32>
    %108 = vector.extract_strided_slice %21 {offsets = [6, 0], sizes = [1, 128], strides = [1, 1]} : vector<9x128xf32> to vector<1x128xf32>
    %109 = vector.broadcast %108 : vector<1x128xf32> to vector<16x128xf32>
    %110 = arith.mulf %107, %109 : vector<16x128xf32>
    %111 = arith.addf %106, %110 : vector<16x128xf32>
    %c73 = arith.constant 73 : index
    %c0_43 = arith.constant 0 : index
    %112 = vector.load %arg13[%c73, %c0_43] : memref<432x128xf32, #tpu.memory_space<vmem>>, vector<16x128xf32>
    %113 = vector.extract_strided_slice %21 {offsets = [7, 0], sizes = [1, 128], strides = [1, 1]} : vector<9x128xf32> to vector<1x128xf32>
    %114 = vector.broadcast %113 : vector<1x128xf32> to vector<16x128xf32>
    %115 = arith.mulf %112, %114 : vector<16x128xf32>
    %116 = arith.addf %111, %115 : vector<16x128xf32>
    %c74 = arith.constant 74 : index
    %c0_44 = arith.constant 0 : index
    %117 = vector.load %arg13[%c74, %c0_44] : memref<432x128xf32, #tpu.memory_space<vmem>>, vector<16x128xf32>
    %118 = vector.extract_strided_slice %21 {offsets = [8, 0], sizes = [1, 128], strides = [1, 1]} : vector<9x128xf32> to vector<1x128xf32>
    %119 = vector.broadcast %118 : vector<1x128xf32> to vector<16x128xf32>
    %120 = arith.mulf %117, %119 : vector<16x128xf32>
    %121 = arith.addf %116, %120 : vector<16x128xf32>
    %122 = vector.broadcast %22 : vector<1x128xf32> to vector<16x128xf32>
    %123 = arith.addf %121, %122 : vector<16x128xf32>
    %cst_45 = arith.constant 0.000000e+00 : f32
    %cst_46 = arith.constant 6.000000e+00 : f32
    %124 = vector.broadcast %cst_45 : f32 to vector<16x128xf32>
    %125 = arith.maximumf %124, %123 : vector<16x128xf32>
    %126 = vector.broadcast %cst_46 : f32 to vector<16x128xf32>
    %127 = arith.minimumf %126, %125 : vector<16x128xf32>
    %c16 = arith.constant 16 : index
    %c0_47 = arith.constant 0 : index
    %128 = vector.load %arg14[%c16, %c0_47] : memref<256x128xf32, #tpu.memory_space<vmem>>, vector<16x128xf32>
    tpu.vector_store %arg14[%c16, %c0_47], %127 {strides = array<i32>} : memref<256x128xf32, #tpu.memory_space<vmem>>, vector<16x128xf32>,
    %cst_48 = arith.constant 0.000000e+00 : f32
    %129 = vector.broadcast %cst_48 : f32 to vector<16x128xf32>
    %c48_49 = arith.constant 48 : index
    %c0_50 = arith.constant 0 : index
    %130 = vector.load %arg13[%c48_49, %c0_50] : memref<432x128xf32, #tpu.memory_space<vmem>>, vector<16x128xf32>
    %131 = vector.extract_strided_slice %21 {offsets = [0, 0], sizes = [1, 128], strides = [1, 1]} : vector<9x128xf32> to vector<1x128xf32>
    %132 = vector.broadcast %131 : vector<1x128xf32> to vector<16x128xf32>
    %133 = arith.mulf %130, %132 : vector<16x128xf32>
    %134 = arith.addf %129, %133 : vector<16x128xf32>
    %c49_51 = arith.constant 49 : index
    %c0_52 = arith.constant 0 : index
    %135 = vector.load %arg13[%c49_51, %c0_52] : memref<432x128xf32, #tpu.memory_space<vmem>>, vector<16x128xf32>
    %136 = vector.extract_strided_slice %21 {offsets = [1, 0], sizes = [1, 128], strides = [1, 1]} : vector<9x128xf32> to vector<1x128xf32>
    %137 = vector.broadcast %136 : vector<1x128xf32> to vector<16x128xf32>
    %138 = arith.mulf %135, %137 : vector<16x128xf32>
    %139 = arith.addf %134, %138 : vector<16x128xf32>
    %c50_53 = arith.constant 50 : index
    %c0_54 = arith.constant 0 : index
    %140 = vector.load %arg13[%c50_53, %c0_54] : memref<432x128xf32, #tpu.memory_space<vmem>>, vector<16x128xf32>
    %141 = vector.extract_strided_slice %21 {offsets = [2, 0], sizes = [1, 128], strides = [1, 1]} : vector<9x128xf32> to vector<1x128xf32>
    %142 = vector.broadcast %141 : vector<1x128xf32> to vector<16x128xf32>
    %143 = arith.mulf %140, %142 : vector<16x128xf32>
    %144 = arith.addf %139, %143 : vector<16x128xf32>
    %c72_55 = arith.constant 72 : index
    %c0_56 = arith.constant 0 : index
    %145 = vector.load %arg13[%c72_55, %c0_56] : memref<432x128xf32, #tpu.memory_space<vmem>>, vector<16x128xf32>
    %146 = vector.extract_strided_slice %21 {offsets = [3, 0], sizes = [1, 128], strides = [1, 1]} : vector<9x128xf32> to vector<1x128xf32>
    %147 = vector.broadcast %146 : vector<1x128xf32> to vector<16x128xf32>
    %148 = arith.mulf %145, %147 : vector<16x128xf32>
    %149 = arith.addf %144, %148 : vector<16x128xf32>
    %c73_57 = arith.constant 73 : index
    %c0_58 = arith.constant 0 : index
    %150 = vector.load %arg13[%c73_57, %c0_58] : memref<432x128xf32, #tpu.memory_space<vmem>>, vector<16x128xf32>
    %151 = vector.extract_strided_slice %21 {offsets = [4, 0], sizes = [1, 128], strides = [1, 1]} : vector<9x128xf32> to vector<1x128xf32>
    %152 = vector.broadcast %151 : vector<1x128xf32> to vector<16x128xf32>
    %153 = arith.mulf %150, %152 : vector<16x128xf32>
    %154 = arith.addf %149, %153 : vector<16x128xf32>
    %c74_59 = arith.constant 74 : index
    %c0_60 = arith.constant 0 : index
    %155 = vector.load %arg13[%c74_59, %c0_60] : memref<432x128xf32, #tpu.memory_space<vmem>>, vector<16x128xf32>
    %156 = vector.extract_strided_slice %21 {offsets = [5, 0], sizes = [1, 128], strides = [1, 1]} : vector<9x128xf32> to vector<1x128xf32>
    %157 = vector.broadcast %156 : vector<1x128xf32> to vector<16x128xf32>
    %158 = arith.mulf %155, %157 : vector<16x128xf32>
    %159 = arith.addf %154, %158 : vector<16x128xf32>
    %c96 = arith.constant 96 : index
    %c0_61 = arith.constant 0 : index
    %160 = vector.load %arg13[%c96, %c0_61] : memref<432x128xf32, #tpu.memory_space<vmem>>, vector<16x128xf32>
    %161 = vector.extract_strided_slice %21 {offsets = [6, 0], sizes = [1, 128], strides = [1, 1]} : vector<9x128xf32> to vector<1x128xf32>
    %162 = vector.broadcast %161 : vector<1x128xf32> to vector<16x128xf32>
    %163 = arith.mulf %160, %162 : vector<16x128xf32>
    %164 = arith.addf %159, %163 : vector<16x128xf32>
    %c97 = arith.constant 97 : index
    %c0_62 = arith.constant 0 : index
    %165 = vector.load %arg13[%c97, %c0_62] : memref<432x128xf32, #tpu.memory_space<vmem>>, vector<16x128xf32>
    %166 = vector.extract_strided_slice %21 {offsets = [7, 0], sizes = [1, 128], strides = [1, 1]} : vector<9x128xf32> to vector<1x128xf32>
    %167 = vector.broadcast %166 : vector<1x128xf32> to vector<16x128xf32>
    %168 = arith.mulf %165, %167 : vector<16x128xf32>
    %169 = arith.addf %164, %168 : vector<16x128xf32>
    %c98 = arith.constant 98 : index
    %c0_63 = arith.constant 0 : index
    %170 = vector.load %arg13[%c98, %c0_63] : memref<432x128xf32, #tpu.memory_space<vmem>>, vector<16x128xf32>
    %171 = vector.extract_strided_slice %21 {offsets = [8, 0], sizes = [1, 128], strides = [1, 1]} : vector<9x128xf32> to vector<1x128xf32>
    %172 = vector.broadcast %171 : vector<1x128xf32> to vector<16x128xf32>
    %173 = arith.mulf %170, %172 : vector<16x128xf32>
    %174 = arith.addf %169, %173 : vector<16x128xf32>
    %175 = vector.broadcast %22 : vector<1x128xf32> to vector<16x128xf32>
    %176 = arith.addf %174, %175 : vector<16x128xf32>
    %cst_64 = arith.constant 0.000000e+00 : f32
    %cst_65 = arith.constant 6.000000e+00 : f32
    %177 = vector.broadcast %cst_64 : f32 to vector<16x128xf32>
    %178 = arith.maximumf %177, %176 : vector<16x128xf32>
    %179 = vector.broadcast %cst_65 : f32 to vector<16x128xf32>
    %180 = arith.minimumf %179, %178 : vector<16x128xf32>
    %c32 = arith.constant 32 : index
    %c0_66 = arith.constant 0 : index
    %181 = vector.load %arg14[%c32, %c0_66] : memref<256x128xf32, #tpu.memory_space<vmem>>, vector<16x128xf32>
    tpu.vector_store %arg14[%c32, %c0_66], %180 {strides = array<i32>} : memref<256x128xf32, #tpu.memory_space<vmem>>, vector<16x128xf32>,
    %cst_67 = arith.constant 0.000000e+00 : f32
    %182 = vector.broadcast %cst_67 : f32 to vector<16x128xf32>
    %c72_68 = arith.constant 72 : index
    %c0_69 = arith.constant 0 : index
    %183 = vector.load %arg13[%c72_68, %c0_69] : memref<432x128xf32, #tpu.memory_space<vmem>>, vector<16x128xf32>
    %184 = vector.extract_strided_slice %21 {offsets = [0, 0], sizes = [1, 128], strides = [1, 1]} : vector<9x128xf32> to vector<1x128xf32>
    %185 = vector.broadcast %184 : vector<1x128xf32> to vector<16x128xf32>
    %186 = arith.mulf %183, %185 : vector<16x128xf32>
    %187 = arith.addf %182, %186 : vector<16x128xf32>
    %c73_70 = arith.constant 73 : index
    %c0_71 = arith.constant 0 : index
    %188 = vector.load %arg13[%c73_70, %c0_71] : memref<432x128xf32, #tpu.memory_space<vmem>>, vector<16x128xf32>
    %189 = vector.extract_strided_slice %21 {offsets = [1, 0], sizes = [1, 128], strides = [1, 1]} : vector<9x128xf32> to vector<1x128xf32>
    %190 = vector.broadcast %189 : vector<1x128xf32> to vector<16x128xf32>
    %191 = arith.mulf %188, %190 : vector<16x128xf32>
    %192 = arith.addf %187, %191 : vector<16x128xf32>
    %c74_72 = arith.constant 74 : index
    %c0_73 = arith.constant 0 : index
    %193 = vector.load %arg13[%c74_72, %c0_73] : memref<432x128xf32, #tpu.memory_space<vmem>>, vector<16x128xf32>
    %194 = vector.extract_strided_slice %21 {offsets = [2, 0], sizes = [1, 128], strides = [1, 1]} : vector<9x128xf32> to vector<1x128xf32>
    %195 = vector.broadcast %194 : vector<1x128xf32> to vector<16x128xf32>
    %196 = arith.mulf %193, %195 : vector<16x128xf32>
    %197 = arith.addf %192, %196 : vector<16x128xf32>
    %c96_74 = arith.constant 96 : index
    %c0_75 = arith.constant 0 : index
    %198 = vector.load %arg13[%c96_74, %c0_75] : memref<432x128xf32, #tpu.memory_space<vmem>>, vector<16x128xf32>
    %199 = vector.extract_strided_slice %21 {offsets = [3, 0], sizes = [1, 128], strides = [1, 1]} : vector<9x128xf32> to vector<1x128xf32>
    %200 = vector.broadcast %199 : vector<1x128xf32> to vector<16x128xf32>
    %201 = arith.mulf %198, %200 : vector<16x128xf32>
    %202 = arith.addf %197, %201 : vector<16x128xf32>
    %c97_76 = arith.constant 97 : index
    %c0_77 = arith.constant 0 : index
    %203 = vector.load %arg13[%c97_76, %c0_77] : memref<432x128xf32, #tpu.memory_space<vmem>>, vector<16x128xf32>
    %204 = vector.extract_strided_slice %21 {offsets = [4, 0], sizes = [1, 128], strides = [1, 1]} : vector<9x128xf32> to vector<1x128xf32>
    %205 = vector.broadcast %204 : vector<1x128xf32> to vector<16x128xf32>
    %206 = arith.mulf %203, %205 : vector<16x128xf32>
    %207 = arith.addf %202, %206 : vector<16x128xf32>
    %c98_78 = arith.constant 98 : index
    %c0_79 = arith.constant 0 : index
    %208 = vector.load %arg13[%c98_78, %c0_79] : memref<432x128xf32, #tpu.memory_space<vmem>>, vector<16x128xf32>
    %209 = vector.extract_strided_slice %21 {offsets = [5, 0], sizes = [1, 128], strides = [1, 1]} : vector<9x128xf32> to vector<1x128xf32>
    %210 = vector.broadcast %209 : vector<1x128xf32> to vector<16x128xf32>
    %211 = arith.mulf %208, %210 : vector<16x128xf32>
    %212 = arith.addf %207, %211 : vector<16x128xf32>
    %c120 = arith.constant 120 : index
    %c0_80 = arith.constant 0 : index
    %213 = vector.load %arg13[%c120, %c0_80] : memref<432x128xf32, #tpu.memory_space<vmem>>, vector<16x128xf32>
    %214 = vector.extract_strided_slice %21 {offsets = [6, 0], sizes = [1, 128], strides = [1, 1]} : vector<9x128xf32> to vector<1x128xf32>
    %215 = vector.broadcast %214 : vector<1x128xf32> to vector<16x128xf32>
    %216 = arith.mulf %213, %215 : vector<16x128xf32>
    %217 = arith.addf %212, %216 : vector<16x128xf32>
    %c121 = arith.constant 121 : index
    %c0_81 = arith.constant 0 : index
    %218 = vector.load %arg13[%c121, %c0_81] : memref<432x128xf32, #tpu.memory_space<vmem>>, vector<16x128xf32>
    %219 = vector.extract_strided_slice %21 {offsets = [7, 0], sizes = [1, 128], strides = [1, 1]} : vector<9x128xf32> to vector<1x128xf32>
    %220 = vector.broadcast %219 : vector<1x128xf32> to vector<16x128xf32>
    %221 = arith.mulf %218, %220 : vector<16x128xf32>
    %222 = arith.addf %217, %221 : vector<16x128xf32>
    %c122 = arith.constant 122 : index
    %c0_82 = arith.constant 0 : index
    %223 = vector.load %arg13[%c122, %c0_82] : memref<432x128xf32, #tpu.memory_space<vmem>>, vector<16x128xf32>
    %224 = vector.extract_strided_slice %21 {offsets = [8, 0], sizes = [1, 128], strides = [1, 1]} : vector<9x128xf32> to vector<1x128xf32>
    %225 = vector.broadcast %224 : vector<1x128xf32> to vector<16x128xf32>
    %226 = arith.mulf %223, %225 : vector<16x128xf32>
    %227 = arith.addf %222, %226 : vector<16x128xf32>
    %228 = vector.broadcast %22 : vector<1x128xf32> to vector<16x128xf32>
    %229 = arith.addf %227, %228 : vector<16x128xf32>
    %cst_83 = arith.constant 0.000000e+00 : f32
    %cst_84 = arith.constant 6.000000e+00 : f32
    %230 = vector.broadcast %cst_83 : f32 to vector<16x128xf32>
    %231 = arith.maximumf %230, %229 : vector<16x128xf32>
    %232 = vector.broadcast %cst_84 : f32 to vector<16x128xf32>
    %233 = arith.minimumf %232, %231 : vector<16x128xf32>
    %c48_85 = arith.constant 48 : index
    %c0_86 = arith.constant 0 : index
    %234 = vector.load %arg14[%c48_85, %c0_86] : memref<256x128xf32, #tpu.memory_space<vmem>>, vector<16x128xf32>
    tpu.vector_store %arg14[%c48_85, %c0_86], %233 {strides = array<i32>} : memref<256x128xf32, #tpu.memory_space<vmem>>, vector<16x128xf32>,
    %cst_87 = arith.constant 0.000000e+00 : f32
    %235 = vector.broadcast %cst_87 : f32 to vector<16x128xf32>
    %c96_88 = arith.constant 96 : index
    %c0_89 = arith.constant 0 : index
    %236 = vector.load %arg13[%c96_88, %c0_89] : memref<432x128xf32, #tpu.memory_space<vmem>>, vector<16x128xf32>
    %237 = vector.extract_strided_slice %21 {offsets = [0, 0], sizes = [1, 128], strides = [1, 1]} : vector<9x128xf32> to vector<1x128xf32>
    %238 = vector.broadcast %237 : vector<1x128xf32> to vector<16x128xf32>
    %239 = arith.mulf %236, %238 : vector<16x128xf32>
    %240 = arith.addf %235, %239 : vector<16x128xf32>
    %c97_90 = arith.constant 97 : index
    %c0_91 = arith.constant 0 : index
    %241 = vector.load %arg13[%c97_90, %c0_91] : memref<432x128xf32, #tpu.memory_space<vmem>>, vector<16x128xf32>
    %242 = vector.extract_strided_slice %21 {offsets = [1, 0], sizes = [1, 128], strides = [1, 1]} : vector<9x128xf32> to vector<1x128xf32>
    %243 = vector.broadcast %242 : vector<1x128xf32> to vector<16x128xf32>
    %244 = arith.mulf %241, %243 : vector<16x128xf32>
    %245 = arith.addf %240, %244 : vector<16x128xf32>
    %c98_92 = arith.constant 98 : index
    %c0_93 = arith.constant 0 : index
    %246 = vector.load %arg13[%c98_92, %c0_93] : memref<432x128xf32, #tpu.memory_space<vmem>>, vector<16x128xf32>
    %247 = vector.extract_strided_slice %21 {offsets = [2, 0], sizes = [1, 128], strides = [1, 1]} : vector<9x128xf32> to vector<1x128xf32>
    %248 = vector.broadcast %247 : vector<1x128xf32> to vector<16x128xf32>
    %249 = arith.mulf %246, %248 : vector<16x128xf32>
    %250 = arith.addf %245, %249 : vector<16x128xf32>
    %c120_94 = arith.constant 120 : index
    %c0_95 = arith.constant 0 : index
    %251 = vector.load %arg13[%c120_94, %c0_95] : memref<432x128xf32, #tpu.memory_space<vmem>>, vector<16x128xf32>
    %252 = vector.extract_strided_slice %21 {offsets = [3, 0], sizes = [1, 128], strides = [1, 1]} : vector<9x128xf32> to vector<1x128xf32>
    %253 = vector.broadcast %252 : vector<1x128xf32> to vector<16x128xf32>
    %254 = arith.mulf %251, %253 : vector<16x128xf32>
    %255 = arith.addf %250, %254 : vector<16x128xf32>
    %c121_96 = arith.constant 121 : index
    %c0_97 = arith.constant 0 : index
    %256 = vector.load %arg13[%c121_96, %c0_97] : memref<432x128xf32, #tpu.memory_space<vmem>>, vector<16x128xf32>
    %257 = vector.extract_strided_slice %21 {offsets = [4, 0], sizes = [1, 128], strides = [1, 1]} : vector<9x128xf32> to vector<1x128xf32>
    %258 = vector.broadcast %257 : vector<1x128xf32> to vector<16x128xf32>
    %259 = arith.mulf %256, %258 : vector<16x128xf32>
    %260 = arith.addf %255, %259 : vector<16x128xf32>
    %c122_98 = arith.constant 122 : index
    %c0_99 = arith.constant 0 : index
    %261 = vector.load %arg13[%c122_98, %c0_99] : memref<432x128xf32, #tpu.memory_space<vmem>>, vector<16x128xf32>
    %262 = vector.extract_strided_slice %21 {offsets = [5, 0], sizes = [1, 128], strides = [1, 1]} : vector<9x128xf32> to vector<1x128xf32>
    %263 = vector.broadcast %262 : vector<1x128xf32> to vector<16x128xf32>
    %264 = arith.mulf %261, %263 : vector<16x128xf32>
    %265 = arith.addf %260, %264 : vector<16x128xf32>
    %c144 = arith.constant 144 : index
    %c0_100 = arith.constant 0 : index
    %266 = vector.load %arg13[%c144, %c0_100] : memref<432x128xf32, #tpu.memory_space<vmem>>, vector<16x128xf32>
    %267 = vector.extract_strided_slice %21 {offsets = [6, 0], sizes = [1, 128], strides = [1, 1]} : vector<9x128xf32> to vector<1x128xf32>
    %268 = vector.broadcast %267 : vector<1x128xf32> to vector<16x128xf32>
    %269 = arith.mulf %266, %268 : vector<16x128xf32>
    %270 = arith.addf %265, %269 : vector<16x128xf32>
    %c145 = arith.constant 145 : index
    %c0_101 = arith.constant 0 : index
    %271 = vector.load %arg13[%c145, %c0_101] : memref<432x128xf32, #tpu.memory_space<vmem>>, vector<16x128xf32>
    %272 = vector.extract_strided_slice %21 {offsets = [7, 0], sizes = [1, 128], strides = [1, 1]} : vector<9x128xf32> to vector<1x128xf32>
    %273 = vector.broadcast %272 : vector<1x128xf32> to vector<16x128xf32>
    %274 = arith.mulf %271, %273 : vector<16x128xf32>
    %275 = arith.addf %270, %274 : vector<16x128xf32>
    %c146 = arith.constant 146 : index
    %c0_102 = arith.constant 0 : index
    %276 = vector.load %arg13[%c146, %c0_102] : memref<432x128xf32, #tpu.memory_space<vmem>>, vector<16x128xf32>
    %277 = vector.extract_strided_slice %21 {offsets = [8, 0], sizes = [1, 128], strides = [1, 1]} : vector<9x128xf32> to vector<1x128xf32>
    %278 = vector.broadcast %277 : vector<1x128xf32> to vector<16x128xf32>
    %279 = arith.mulf %276, %278 : vector<16x128xf32>
    %280 = arith.addf %275, %279 : vector<16x128xf32>
    %281 = vector.broadcast %22 : vector<1x128xf32> to vector<16x128xf32>
    %282 = arith.addf %280, %281 : vector<16x128xf32>
    %cst_103 = arith.constant 0.000000e+00 : f32
    %cst_104 = arith.constant 6.000000e+00 : f32
    %283 = vector.broadcast %cst_103 : f32 to vector<16x128xf32>
    %284 = arith.maximumf %283, %282 : vector<16x128xf32>
    %285 = vector.broadcast %cst_104 : f32 to vector<16x128xf32>
    %286 = arith.minimumf %285, %284 : vector<16x128xf32>
    %c64 = arith.constant 64 : index
    %c0_105 = arith.constant 0 : index
    %287 = vector.load %arg14[%c64, %c0_105] : memref<256x128xf32, #tpu.memory_space<vmem>>, vector<16x128xf32>
    tpu.vector_store %arg14[%c64, %c0_105], %286 {strides = array<i32>} : memref<256x128xf32, #tpu.memory_space<vmem>>, vector<16x128xf32>,
    %cst_106 = arith.constant 0.000000e+00 : f32
    %288 = vector.broadcast %cst_106 : f32 to vector<16x128xf32>
    %c120_107 = arith.constant 120 : index
    %c0_108 = arith.constant 0 : index
    %289 = vector.load %arg13[%c120_107, %c0_108] : memref<432x128xf32, #tpu.memory_space<vmem>>, vector<16x128xf32>
    %290 = vector.extract_strided_slice %21 {offsets = [0, 0], sizes = [1, 128], strides = [1, 1]} : vector<9x128xf32> to vector<1x128xf32>
    %291 = vector.broadcast %290 : vector<1x128xf32> to vector<16x128xf32>
    %292 = arith.mulf %289, %291 : vector<16x128xf32>
    %293 = arith.addf %288, %292 : vector<16x128xf32>
    %c121_109 = arith.constant 121 : index
    %c0_110 = arith.constant 0 : index
    %294 = vector.load %arg13[%c121_109, %c0_110] : memref<432x128xf32, #tpu.memory_space<vmem>>, vector<16x128xf32>
    %295 = vector.extract_strided_slice %21 {offsets = [1, 0], sizes = [1, 128], strides = [1, 1]} : vector<9x128xf32> to vector<1x128xf32>
    %296 = vector.broadcast %295 : vector<1x128xf32> to vector<16x128xf32>
    %297 = arith.mulf %294, %296 : vector<16x128xf32>
    %298 = arith.addf %293, %297 : vector<16x128xf32>
    %c122_111 = arith.constant 122 : index
    %c0_112 = arith.constant 0 : index
    %299 = vector.load %arg13[%c122_111, %c0_112] : memref<432x128xf32, #tpu.memory_space<vmem>>, vector<16x128xf32>
    %300 = vector.extract_strided_slice %21 {offsets = [2, 0], sizes = [1, 128], strides = [1, 1]} : vector<9x128xf32> to vector<1x128xf32>
    %301 = vector.broadcast %300 : vector<1x128xf32> to vector<16x128xf32>
    %302 = arith.mulf %299, %301 : vector<16x128xf32>
    %303 = arith.addf %298, %302 : vector<16x128xf32>
    %c144_113 = arith.constant 144 : index
    %c0_114 = arith.constant 0 : index
    %304 = vector.load %arg13[%c144_113, %c0_114] : memref<432x128xf32, #tpu.memory_space<vmem>>, vector<16x128xf32>
    %305 = vector.extract_strided_slice %21 {offsets = [3, 0], sizes = [1, 128], strides = [1, 1]} : vector<9x128xf32> to vector<1x128xf32>
    %306 = vector.broadcast %305 : vector<1x128xf32> to vector<16x128xf32>
    %307 = arith.mulf %304, %306 : vector<16x128xf32>
    %308 = arith.addf %303, %307 : vector<16x128xf32>
    %c145_115 = arith.constant 145 : index
    %c0_116 = arith.constant 0 : index
    %309 = vector.load %arg13[%c145_115, %c0_116] : memref<432x128xf32, #tpu.memory_space<vmem>>, vector<16x128xf32>
    %310 = vector.extract_strided_slice %21 {offsets = [4, 0], sizes = [1, 128], strides = [1, 1]} : vector<9x128xf32> to vector<1x128xf32>
    %311 = vector.broadcast %310 : vector<1x128xf32> to vector<16x128xf32>
    %312 = arith.mulf %309, %311 : vector<16x128xf32>
    %313 = arith.addf %308, %312 : vector<16x128xf32>
    %c146_117 = arith.constant 146 : index
    %c0_118 = arith.constant 0 : index
    %314 = vector.load %arg13[%c146_117, %c0_118] : memref<432x128xf32, #tpu.memory_space<vmem>>, vector<16x128xf32>
    %315 = vector.extract_strided_slice %21 {offsets = [5, 0], sizes = [1, 128], strides = [1, 1]} : vector<9x128xf32> to vector<1x128xf32>
    %316 = vector.broadcast %315 : vector<1x128xf32> to vector<16x128xf32>
    %317 = arith.mulf %314, %316 : vector<16x128xf32>
    %318 = arith.addf %313, %317 : vector<16x128xf32>
    %c168 = arith.constant 168 : index
    %c0_119 = arith.constant 0 : index
    %319 = vector.load %arg13[%c168, %c0_119] : memref<432x128xf32, #tpu.memory_space<vmem>>, vector<16x128xf32>
    %320 = vector.extract_strided_slice %21 {offsets = [6, 0], sizes = [1, 128], strides = [1, 1]} : vector<9x128xf32> to vector<1x128xf32>
    %321 = vector.broadcast %320 : vector<1x128xf32> to vector<16x128xf32>
    %322 = arith.mulf %319, %321 : vector<16x128xf32>
    %323 = arith.addf %318, %322 : vector<16x128xf32>
    %c169 = arith.constant 169 : index
    %c0_120 = arith.constant 0 : index
    %324 = vector.load %arg13[%c169, %c0_120] : memref<432x128xf32, #tpu.memory_space<vmem>>, vector<16x128xf32>
    %325 = vector.extract_strided_slice %21 {offsets = [7, 0], sizes = [1, 128], strides = [1, 1]} : vector<9x128xf32> to vector<1x128xf32>
    %326 = vector.broadcast %325 : vector<1x128xf32> to vector<16x128xf32>
    %327 = arith.mulf %324, %326 : vector<16x128xf32>
    %328 = arith.addf %323, %327 : vector<16x128xf32>
    %c170 = arith.constant 170 : index
    %c0_121 = arith.constant 0 : index
    %329 = vector.load %arg13[%c170, %c0_121] : memref<432x128xf32, #tpu.memory_space<vmem>>, vector<16x128xf32>
    %330 = vector.extract_strided_slice %21 {offsets = [8, 0], sizes = [1, 128], strides = [1, 1]} : vector<9x128xf32> to vector<1x128xf32>
    %331 = vector.broadcast %330 : vector<1x128xf32> to vector<16x128xf32>
    %332 = arith.mulf %329, %331 : vector<16x128xf32>
    %333 = arith.addf %328, %332 : vector<16x128xf32>
    %334 = vector.broadcast %22 : vector<1x128xf32> to vector<16x128xf32>
    %335 = arith.addf %333, %334 : vector<16x128xf32>
    %cst_122 = arith.constant 0.000000e+00 : f32
    %cst_123 = arith.constant 6.000000e+00 : f32
    %336 = vector.broadcast %cst_122 : f32 to vector<16x128xf32>
    %337 = arith.maximumf %336, %335 : vector<16x128xf32>
    %338 = vector.broadcast %cst_123 : f32 to vector<16x128xf32>
    %339 = arith.minimumf %338, %337 : vector<16x128xf32>
    %c80 = arith.constant 80 : index
    %c0_124 = arith.constant 0 : index
    %340 = vector.load %arg14[%c80, %c0_124] : memref<256x128xf32, #tpu.memory_space<vmem>>, vector<16x128xf32>
    tpu.vector_store %arg14[%c80, %c0_124], %339 {strides = array<i32>} : memref<256x128xf32, #tpu.memory_space<vmem>>, vector<16x128xf32>,
    %cst_125 = arith.constant 0.000000e+00 : f32
    %341 = vector.broadcast %cst_125 : f32 to vector<16x128xf32>
    %c144_126 = arith.constant 144 : index
    %c0_127 = arith.constant 0 : index
    %342 = vector.load %arg13[%c144_126, %c0_127] : memref<432x128xf32, #tpu.memory_space<vmem>>, vector<16x128xf32>
    %343 = vector.extract_strided_slice %21 {offsets = [0, 0], sizes = [1, 128], strides = [1, 1]} : vector<9x128xf32> to vector<1x128xf32>
    %344 = vector.broadcast %343 : vector<1x128xf32> to vector<16x128xf32>
    %345 = arith.mulf %342, %344 : vector<16x128xf32>
    %346 = arith.addf %341, %345 : vector<16x128xf32>
    %c145_128 = arith.constant 145 : index
    %c0_129 = arith.constant 0 : index
    %347 = vector.load %arg13[%c145_128, %c0_129] : memref<432x128xf32, #tpu.memory_space<vmem>>, vector<16x128xf32>
    %348 = vector.extract_strided_slice %21 {offsets = [1, 0], sizes = [1, 128], strides = [1, 1]} : vector<9x128xf32> to vector<1x128xf32>
    %349 = vector.broadcast %348 : vector<1x128xf32> to vector<16x128xf32>
    %350 = arith.mulf %347, %349 : vector<16x128xf32>
    %351 = arith.addf %346, %350 : vector<16x128xf32>
    %c146_130 = arith.constant 146 : index
    %c0_131 = arith.constant 0 : index
    %352 = vector.load %arg13[%c146_130, %c0_131] : memref<432x128xf32, #tpu.memory_space<vmem>>, vector<16x128xf32>
    %353 = vector.extract_strided_slice %21 {offsets = [2, 0], sizes = [1, 128], strides = [1, 1]} : vector<9x128xf32> to vector<1x128xf32>
    %354 = vector.broadcast %353 : vector<1x128xf32> to vector<16x128xf32>
    %355 = arith.mulf %352, %354 : vector<16x128xf32>
    %356 = arith.addf %351, %355 : vector<16x128xf32>
    %c168_132 = arith.constant 168 : index
    %c0_133 = arith.constant 0 : index
    %357 = vector.load %arg13[%c168_132, %c0_133] : memref<432x128xf32, #tpu.memory_space<vmem>>, vector<16x128xf32>
    %358 = vector.extract_strided_slice %21 {offsets = [3, 0], sizes = [1, 128], strides = [1, 1]} : vector<9x128xf32> to vector<1x128xf32>
    %359 = vector.broadcast %358 : vector<1x128xf32> to vector<16x128xf32>
    %360 = arith.mulf %357, %359 : vector<16x128xf32>
    %361 = arith.addf %356, %360 : vector<16x128xf32>
    %c169_134 = arith.constant 169 : index
    %c0_135 = arith.constant 0 : index
    %362 = vector.load %arg13[%c169_134, %c0_135] : memref<432x128xf32, #tpu.memory_space<vmem>>, vector<16x128xf32>
    %363 = vector.extract_strided_slice %21 {offsets = [4, 0], sizes = [1, 128], strides = [1, 1]} : vector<9x128xf32> to vector<1x128xf32>
    %364 = vector.broadcast %363 : vector<1x128xf32> to vector<16x128xf32>
    %365 = arith.mulf %362, %364 : vector<16x128xf32>
    %366 = arith.addf %361, %365 : vector<16x128xf32>
    %c170_136 = arith.constant 170 : index
    %c0_137 = arith.constant 0 : index
    %367 = vector.load %arg13[%c170_136, %c0_137] : memref<432x128xf32, #tpu.memory_space<vmem>>, vector<16x128xf32>
    %368 = vector.extract_strided_slice %21 {offsets = [5, 0], sizes = [1, 128], strides = [1, 1]} : vector<9x128xf32> to vector<1x128xf32>
    %369 = vector.broadcast %368 : vector<1x128xf32> to vector<16x128xf32>
    %370 = arith.mulf %367, %369 : vector<16x128xf32>
    %371 = arith.addf %366, %370 : vector<16x128xf32>
    %c192 = arith.constant 192 : index
    %c0_138 = arith.constant 0 : index
    %372 = vector.load %arg13[%c192, %c0_138] : memref<432x128xf32, #tpu.memory_space<vmem>>, vector<16x128xf32>
    %373 = vector.extract_strided_slice %21 {offsets = [6, 0], sizes = [1, 128], strides = [1, 1]} : vector<9x128xf32> to vector<1x128xf32>
    %374 = vector.broadcast %373 : vector<1x128xf32> to vector<16x128xf32>
    %375 = arith.mulf %372, %374 : vector<16x128xf32>
    %376 = arith.addf %371, %375 : vector<16x128xf32>
    %c193 = arith.constant 193 : index
    %c0_139 = arith.constant 0 : index
    %377 = vector.load %arg13[%c193, %c0_139] : memref<432x128xf32, #tpu.memory_space<vmem>>, vector<16x128xf32>
    %378 = vector.extract_strided_slice %21 {offsets = [7, 0], sizes = [1, 128], strides = [1, 1]} : vector<9x128xf32> to vector<1x128xf32>
    %379 = vector.broadcast %378 : vector<1x128xf32> to vector<16x128xf32>
    %380 = arith.mulf %377, %379 : vector<16x128xf32>
    %381 = arith.addf %376, %380 : vector<16x128xf32>
    %c194 = arith.constant 194 : index
    %c0_140 = arith.constant 0 : index
    %382 = vector.load %arg13[%c194, %c0_140] : memref<432x128xf32, #tpu.memory_space<vmem>>, vector<16x128xf32>
    %383 = vector.extract_strided_slice %21 {offsets = [8, 0], sizes = [1, 128], strides = [1, 1]} : vector<9x128xf32> to vector<1x128xf32>
    %384 = vector.broadcast %383 : vector<1x128xf32> to vector<16x128xf32>
    %385 = arith.mulf %382, %384 : vector<16x128xf32>
    %386 = arith.addf %381, %385 : vector<16x128xf32>
    %387 = vector.broadcast %22 : vector<1x128xf32> to vector<16x128xf32>
    %388 = arith.addf %386, %387 : vector<16x128xf32>
    %cst_141 = arith.constant 0.000000e+00 : f32
    %cst_142 = arith.constant 6.000000e+00 : f32
    %389 = vector.broadcast %cst_141 : f32 to vector<16x128xf32>
    %390 = arith.maximumf %389, %388 : vector<16x128xf32>
    %391 = vector.broadcast %cst_142 : f32 to vector<16x128xf32>
    %392 = arith.minimumf %391, %390 : vector<16x128xf32>
    %c96_143 = arith.constant 96 : index
    %c0_144 = arith.constant 0 : index
    %393 = vector.load %arg14[%c96_143, %c0_144] : memref<256x128xf32, #tpu.memory_space<vmem>>, vector<16x128xf32>
    tpu.vector_store %arg14[%c96_143, %c0_144], %392 {strides = array<i32>} : memref<256x128xf32, #tpu.memory_space<vmem>>, vector<16x128xf32>,
    %cst_145 = arith.constant 0.000000e+00 : f32
    %394 = vector.broadcast %cst_145 : f32 to vector<16x128xf32>
    %c168_146 = arith.constant 168 : index
    %c0_147 = arith.constant 0 : index
    %395 = vector.load %arg13[%c168_146, %c0_147] : memref<432x128xf32, #tpu.memory_space<vmem>>, vector<16x128xf32>
    %396 = vector.extract_strided_slice %21 {offsets = [0, 0], sizes = [1, 128], strides = [1, 1]} : vector<9x128xf32> to vector<1x128xf32>
    %397 = vector.broadcast %396 : vector<1x128xf32> to vector<16x128xf32>
    %398 = arith.mulf %395, %397 : vector<16x128xf32>
    %399 = arith.addf %394, %398 : vector<16x128xf32>
    %c169_148 = arith.constant 169 : index
    %c0_149 = arith.constant 0 : index
    %400 = vector.load %arg13[%c169_148, %c0_149] : memref<432x128xf32, #tpu.memory_space<vmem>>, vector<16x128xf32>
    %401 = vector.extract_strided_slice %21 {offsets = [1, 0], sizes = [1, 128], strides = [1, 1]} : vector<9x128xf32> to vector<1x128xf32>
    %402 = vector.broadcast %401 : vector<1x128xf32> to vector<16x128xf32>
    %403 = arith.mulf %400, %402 : vector<16x128xf32>
    %404 = arith.addf %399, %403 : vector<16x128xf32>
    %c170_150 = arith.constant 170 : index
    %c0_151 = arith.constant 0 : index
    %405 = vector.load %arg13[%c170_150, %c0_151] : memref<432x128xf32, #tpu.memory_space<vmem>>, vector<16x128xf32>
    %406 = vector.extract_strided_slice %21 {offsets = [2, 0], sizes = [1, 128], strides = [1, 1]} : vector<9x128xf32> to vector<1x128xf32>
    %407 = vector.broadcast %406 : vector<1x128xf32> to vector<16x128xf32>
    %408 = arith.mulf %405, %407 : vector<16x128xf32>
    %409 = arith.addf %404, %408 : vector<16x128xf32>
    %c192_152 = arith.constant 192 : index
    %c0_153 = arith.constant 0 : index
    %410 = vector.load %arg13[%c192_152, %c0_153] : memref<432x128xf32, #tpu.memory_space<vmem>>, vector<16x128xf32>
    %411 = vector.extract_strided_slice %21 {offsets = [3, 0], sizes = [1, 128], strides = [1, 1]} : vector<9x128xf32> to vector<1x128xf32>
    %412 = vector.broadcast %411 : vector<1x128xf32> to vector<16x128xf32>
    %413 = arith.mulf %410, %412 : vector<16x128xf32>
    %414 = arith.addf %409, %413 : vector<16x128xf32>
    %c193_154 = arith.constant 193 : index
    %c0_155 = arith.constant 0 : index
    %415 = vector.load %arg13[%c193_154, %c0_155] : memref<432x128xf32, #tpu.memory_space<vmem>>, vector<16x128xf32>
    %416 = vector.extract_strided_slice %21 {offsets = [4, 0], sizes = [1, 128], strides = [1, 1]} : vector<9x128xf32> to vector<1x128xf32>
    %417 = vector.broadcast %416 : vector<1x128xf32> to vector<16x128xf32>
    %418 = arith.mulf %415, %417 : vector<16x128xf32>
    %419 = arith.addf %414, %418 : vector<16x128xf32>
    %c194_156 = arith.constant 194 : index
    %c0_157 = arith.constant 0 : index
    %420 = vector.load %arg13[%c194_156, %c0_157] : memref<432x128xf32, #tpu.memory_space<vmem>>, vector<16x128xf32>
    %421 = vector.extract_strided_slice %21 {offsets = [5, 0], sizes = [1, 128], strides = [1, 1]} : vector<9x128xf32> to vector<1x128xf32>
    %422 = vector.broadcast %421 : vector<1x128xf32> to vector<16x128xf32>
    %423 = arith.mulf %420, %422 : vector<16x128xf32>
    %424 = arith.addf %419, %423 : vector<16x128xf32>
    %c216 = arith.constant 216 : index
    %c0_158 = arith.constant 0 : index
    %425 = vector.load %arg13[%c216, %c0_158] : memref<432x128xf32, #tpu.memory_space<vmem>>, vector<16x128xf32>
    %426 = vector.extract_strided_slice %21 {offsets = [6, 0], sizes = [1, 128], strides = [1, 1]} : vector<9x128xf32> to vector<1x128xf32>
    %427 = vector.broadcast %426 : vector<1x128xf32> to vector<16x128xf32>
    %428 = arith.mulf %425, %427 : vector<16x128xf32>
    %429 = arith.addf %424, %428 : vector<16x128xf32>
    %c217 = arith.constant 217 : index
    %c0_159 = arith.constant 0 : index
    %430 = vector.load %arg13[%c217, %c0_159] : memref<432x128xf32, #tpu.memory_space<vmem>>, vector<16x128xf32>
    %431 = vector.extract_strided_slice %21 {offsets = [7, 0], sizes = [1, 128], strides = [1, 1]} : vector<9x128xf32> to vector<1x128xf32>
    %432 = vector.broadcast %431 : vector<1x128xf32> to vector<16x128xf32>
    %433 = arith.mulf %430, %432 : vector<16x128xf32>
    %434 = arith.addf %429, %433 : vector<16x128xf32>
    %c218 = arith.constant 218 : index
    %c0_160 = arith.constant 0 : index
    %435 = vector.load %arg13[%c218, %c0_160] : memref<432x128xf32, #tpu.memory_space<vmem>>, vector<16x128xf32>
    %436 = vector.extract_strided_slice %21 {offsets = [8, 0], sizes = [1, 128], strides = [1, 1]} : vector<9x128xf32> to vector<1x128xf32>
    %437 = vector.broadcast %436 : vector<1x128xf32> to vector<16x128xf32>
    %438 = arith.mulf %435, %437 : vector<16x128xf32>
    %439 = arith.addf %434, %438 : vector<16x128xf32>
    %440 = vector.broadcast %22 : vector<1x128xf32> to vector<16x128xf32>
    %441 = arith.addf %439, %440 : vector<16x128xf32>
    %cst_161 = arith.constant 0.000000e+00 : f32
    %cst_162 = arith.constant 6.000000e+00 : f32
    %442 = vector.broadcast %cst_161 : f32 to vector<16x128xf32>
    %443 = arith.maximumf %442, %441 : vector<16x128xf32>
    %444 = vector.broadcast %cst_162 : f32 to vector<16x128xf32>
    %445 = arith.minimumf %444, %443 : vector<16x128xf32>
    %c112 = arith.constant 112 : index
    %c0_163 = arith.constant 0 : index
    %446 = vector.load %arg14[%c112, %c0_163] : memref<256x128xf32, #tpu.memory_space<vmem>>, vector<16x128xf32>
    tpu.vector_store %arg14[%c112, %c0_163], %445 {strides = array<i32>} : memref<256x128xf32, #tpu.memory_space<vmem>>, vector<16x128xf32>,
    %cst_164 = arith.constant 0.000000e+00 : f32
    %447 = vector.broadcast %cst_164 : f32 to vector<16x128xf32>
    %c192_165 = arith.constant 192 : index
    %c0_166 = arith.constant 0 : index
    %448 = vector.load %arg13[%c192_165, %c0_166] : memref<432x128xf32, #tpu.memory_space<vmem>>, vector<16x128xf32>
    %449 = vector.extract_strided_slice %21 {offsets = [0, 0], sizes = [1, 128], strides = [1, 1]} : vector<9x128xf32> to vector<1x128xf32>
    %450 = vector.broadcast %449 : vector<1x128xf32> to vector<16x128xf32>
    %451 = arith.mulf %448, %450 : vector<16x128xf32>
    %452 = arith.addf %447, %451 : vector<16x128xf32>
    %c193_167 = arith.constant 193 : index
    %c0_168 = arith.constant 0 : index
    %453 = vector.load %arg13[%c193_167, %c0_168] : memref<432x128xf32, #tpu.memory_space<vmem>>, vector<16x128xf32>
    %454 = vector.extract_strided_slice %21 {offsets = [1, 0], sizes = [1, 128], strides = [1, 1]} : vector<9x128xf32> to vector<1x128xf32>
    %455 = vector.broadcast %454 : vector<1x128xf32> to vector<16x128xf32>
    %456 = arith.mulf %453, %455 : vector<16x128xf32>
    %457 = arith.addf %452, %456 : vector<16x128xf32>
    %c194_169 = arith.constant 194 : index
    %c0_170 = arith.constant 0 : index
    %458 = vector.load %arg13[%c194_169, %c0_170] : memref<432x128xf32, #tpu.memory_space<vmem>>, vector<16x128xf32>
    %459 = vector.extract_strided_slice %21 {offsets = [2, 0], sizes = [1, 128], strides = [1, 1]} : vector<9x128xf32> to vector<1x128xf32>
    %460 = vector.broadcast %459 : vector<1x128xf32> to vector<16x128xf32>
    %461 = arith.mulf %458, %460 : vector<16x128xf32>
    %462 = arith.addf %457, %461 : vector<16x128xf32>
    %c216_171 = arith.constant 216 : index
    %c0_172 = arith.constant 0 : index
    %463 = vector.load %arg13[%c216_171, %c0_172] : memref<432x128xf32, #tpu.memory_space<vmem>>, vector<16x128xf32>
    %464 = vector.extract_strided_slice %21 {offsets = [3, 0], sizes = [1, 128], strides = [1, 1]} : vector<9x128xf32> to vector<1x128xf32>
    %465 = vector.broadcast %464 : vector<1x128xf32> to vector<16x128xf32>
    %466 = arith.mulf %463, %465 : vector<16x128xf32>
    %467 = arith.addf %462, %466 : vector<16x128xf32>
    %c217_173 = arith.constant 217 : index
    %c0_174 = arith.constant 0 : index
    %468 = vector.load %arg13[%c217_173, %c0_174] : memref<432x128xf32, #tpu.memory_space<vmem>>, vector<16x128xf32>
    %469 = vector.extract_strided_slice %21 {offsets = [4, 0], sizes = [1, 128], strides = [1, 1]} : vector<9x128xf32> to vector<1x128xf32>
    %470 = vector.broadcast %469 : vector<1x128xf32> to vector<16x128xf32>
    %471 = arith.mulf %468, %470 : vector<16x128xf32>
    %472 = arith.addf %467, %471 : vector<16x128xf32>
    %c218_175 = arith.constant 218 : index
    %c0_176 = arith.constant 0 : index
    %473 = vector.load %arg13[%c218_175, %c0_176] : memref<432x128xf32, #tpu.memory_space<vmem>>, vector<16x128xf32>
    %474 = vector.extract_strided_slice %21 {offsets = [5, 0], sizes = [1, 128], strides = [1, 1]} : vector<9x128xf32> to vector<1x128xf32>
    %475 = vector.broadcast %474 : vector<1x128xf32> to vector<16x128xf32>
    %476 = arith.mulf %473, %475 : vector<16x128xf32>
    %477 = arith.addf %472, %476 : vector<16x128xf32>
    %c240 = arith.constant 240 : index
    %c0_177 = arith.constant 0 : index
    %478 = vector.load %arg13[%c240, %c0_177] : memref<432x128xf32, #tpu.memory_space<vmem>>, vector<16x128xf32>
    %479 = vector.extract_strided_slice %21 {offsets = [6, 0], sizes = [1, 128], strides = [1, 1]} : vector<9x128xf32> to vector<1x128xf32>
    %480 = vector.broadcast %479 : vector<1x128xf32> to vector<16x128xf32>
    %481 = arith.mulf %478, %480 : vector<16x128xf32>
    %482 = arith.addf %477, %481 : vector<16x128xf32>
    %c241 = arith.constant 241 : index
    %c0_178 = arith.constant 0 : index
    %483 = vector.load %arg13[%c241, %c0_178] : memref<432x128xf32, #tpu.memory_space<vmem>>, vector<16x128xf32>
    %484 = vector.extract_strided_slice %21 {offsets = [7, 0], sizes = [1, 128], strides = [1, 1]} : vector<9x128xf32> to vector<1x128xf32>
    %485 = vector.broadcast %484 : vector<1x128xf32> to vector<16x128xf32>
    %486 = arith.mulf %483, %485 : vector<16x128xf32>
    %487 = arith.addf %482, %486 : vector<16x128xf32>
    %c242 = arith.constant 242 : index
    %c0_179 = arith.constant 0 : index
    %488 = vector.load %arg13[%c242, %c0_179] : memref<432x128xf32, #tpu.memory_space<vmem>>, vector<16x128xf32>
    %489 = vector.extract_strided_slice %21 {offsets = [8, 0], sizes = [1, 128], strides = [1, 1]} : vector<9x128xf32> to vector<1x128xf32>
    %490 = vector.broadcast %489 : vector<1x128xf32> to vector<16x128xf32>
    %491 = arith.mulf %488, %490 : vector<16x128xf32>
    %492 = arith.addf %487, %491 : vector<16x128xf32>
    %493 = vector.broadcast %22 : vector<1x128xf32> to vector<16x128xf32>
    %494 = arith.addf %492, %493 : vector<16x128xf32>
    %cst_180 = arith.constant 0.000000e+00 : f32
    %cst_181 = arith.constant 6.000000e+00 : f32
    %495 = vector.broadcast %cst_180 : f32 to vector<16x128xf32>
    %496 = arith.maximumf %495, %494 : vector<16x128xf32>
    %497 = vector.broadcast %cst_181 : f32 to vector<16x128xf32>
    %498 = arith.minimumf %497, %496 : vector<16x128xf32>
    %c128 = arith.constant 128 : index
    %c0_182 = arith.constant 0 : index
    %499 = vector.load %arg14[%c128, %c0_182] : memref<256x128xf32, #tpu.memory_space<vmem>>, vector<16x128xf32>
    tpu.vector_store %arg14[%c128, %c0_182], %498 {strides = array<i32>} : memref<256x128xf32, #tpu.memory_space<vmem>>, vector<16x128xf32>,
    %cst_183 = arith.constant 0.000000e+00 : f32
    %500 = vector.broadcast %cst_183 : f32 to vector<16x128xf32>
    %c216_184 = arith.constant 216 : index
    %c0_185 = arith.constant 0 : index
    %501 = vector.load %arg13[%c216_184, %c0_185] : memref<432x128xf32, #tpu.memory_space<vmem>>, vector<16x128xf32>
    %502 = vector.extract_strided_slice %21 {offsets = [0, 0], sizes = [1, 128], strides = [1, 1]} : vector<9x128xf32> to vector<1x128xf32>
    %503 = vector.broadcast %502 : vector<1x128xf32> to vector<16x128xf32>
    %504 = arith.mulf %501, %503 : vector<16x128xf32>
    %505 = arith.addf %500, %504 : vector<16x128xf32>
    %c217_186 = arith.constant 217 : index
    %c0_187 = arith.constant 0 : index
    %506 = vector.load %arg13[%c217_186, %c0_187] : memref<432x128xf32, #tpu.memory_space<vmem>>, vector<16x128xf32>
    %507 = vector.extract_strided_slice %21 {offsets = [1, 0], sizes = [1, 128], strides = [1, 1]} : vector<9x128xf32> to vector<1x128xf32>
    %508 = vector.broadcast %507 : vector<1x128xf32> to vector<16x128xf32>
    %509 = arith.mulf %506, %508 : vector<16x128xf32>
    %510 = arith.addf %505, %509 : vector<16x128xf32>
    %c218_188 = arith.constant 218 : index
    %c0_189 = arith.constant 0 : index
    %511 = vector.load %arg13[%c218_188, %c0_189] : memref<432x128xf32, #tpu.memory_space<vmem>>, vector<16x128xf32>
    %512 = vector.extract_strided_slice %21 {offsets = [2, 0], sizes = [1, 128], strides = [1, 1]} : vector<9x128xf32> to vector<1x128xf32>
    %513 = vector.broadcast %512 : vector<1x128xf32> to vector<16x128xf32>
    %514 = arith.mulf %511, %513 : vector<16x128xf32>
    %515 = arith.addf %510, %514 : vector<16x128xf32>
    %c240_190 = arith.constant 240 : index
    %c0_191 = arith.constant 0 : index
    %516 = vector.load %arg13[%c240_190, %c0_191] : memref<432x128xf32, #tpu.memory_space<vmem>>, vector<16x128xf32>
    %517 = vector.extract_strided_slice %21 {offsets = [3, 0], sizes = [1, 128], strides = [1, 1]} : vector<9x128xf32> to vector<1x128xf32>
    %518 = vector.broadcast %517 : vector<1x128xf32> to vector<16x128xf32>
    %519 = arith.mulf %516, %518 : vector<16x128xf32>
    %520 = arith.addf %515, %519 : vector<16x128xf32>
    %c241_192 = arith.constant 241 : index
    %c0_193 = arith.constant 0 : index
    %521 = vector.load %arg13[%c241_192, %c0_193] : memref<432x128xf32, #tpu.memory_space<vmem>>, vector<16x128xf32>
    %522 = vector.extract_strided_slice %21 {offsets = [4, 0], sizes = [1, 128], strides = [1, 1]} : vector<9x128xf32> to vector<1x128xf32>
    %523 = vector.broadcast %522 : vector<1x128xf32> to vector<16x128xf32>
    %524 = arith.mulf %521, %523 : vector<16x128xf32>
    %525 = arith.addf %520, %524 : vector<16x128xf32>
    %c242_194 = arith.constant 242 : index
    %c0_195 = arith.constant 0 : index
    %526 = vector.load %arg13[%c242_194, %c0_195] : memref<432x128xf32, #tpu.memory_space<vmem>>, vector<16x128xf32>
    %527 = vector.extract_strided_slice %21 {offsets = [5, 0], sizes = [1, 128], strides = [1, 1]} : vector<9x128xf32> to vector<1x128xf32>
    %528 = vector.broadcast %527 : vector<1x128xf32> to vector<16x128xf32>
    %529 = arith.mulf %526, %528 : vector<16x128xf32>
    %530 = arith.addf %525, %529 : vector<16x128xf32>
    %c264 = arith.constant 264 : index
    %c0_196 = arith.constant 0 : index
    %531 = vector.load %arg13[%c264, %c0_196] : memref<432x128xf32, #tpu.memory_space<vmem>>, vector<16x128xf32>
    %532 = vector.extract_strided_slice %21 {offsets = [6, 0], sizes = [1, 128], strides = [1, 1]} : vector<9x128xf32> to vector<1x128xf32>
    %533 = vector.broadcast %532 : vector<1x128xf32> to vector<16x128xf32>
    %534 = arith.mulf %531, %533 : vector<16x128xf32>
    %535 = arith.addf %530, %534 : vector<16x128xf32>
    %c265 = arith.constant 265 : index
    %c0_197 = arith.constant 0 : index
    %536 = vector.load %arg13[%c265, %c0_197] : memref<432x128xf32, #tpu.memory_space<vmem>>, vector<16x128xf32>
    %537 = vector.extract_strided_slice %21 {offsets = [7, 0], sizes = [1, 128], strides = [1, 1]} : vector<9x128xf32> to vector<1x128xf32>
    %538 = vector.broadcast %537 : vector<1x128xf32> to vector<16x128xf32>
    %539 = arith.mulf %536, %538 : vector<16x128xf32>
    %540 = arith.addf %535, %539 : vector<16x128xf32>
    %c266 = arith.constant 266 : index
    %c0_198 = arith.constant 0 : index
    %541 = vector.load %arg13[%c266, %c0_198] : memref<432x128xf32, #tpu.memory_space<vmem>>, vector<16x128xf32>
    %542 = vector.extract_strided_slice %21 {offsets = [8, 0], sizes = [1, 128], strides = [1, 1]} : vector<9x128xf32> to vector<1x128xf32>
    %543 = vector.broadcast %542 : vector<1x128xf32> to vector<16x128xf32>
    %544 = arith.mulf %541, %543 : vector<16x128xf32>
    %545 = arith.addf %540, %544 : vector<16x128xf32>
    %546 = vector.broadcast %22 : vector<1x128xf32> to vector<16x128xf32>
    %547 = arith.addf %545, %546 : vector<16x128xf32>
    %cst_199 = arith.constant 0.000000e+00 : f32
    %cst_200 = arith.constant 6.000000e+00 : f32
    %548 = vector.broadcast %cst_199 : f32 to vector<16x128xf32>
    %549 = arith.maximumf %548, %547 : vector<16x128xf32>
    %550 = vector.broadcast %cst_200 : f32 to vector<16x128xf32>
    %551 = arith.minimumf %550, %549 : vector<16x128xf32>
    %c144_201 = arith.constant 144 : index
    %c0_202 = arith.constant 0 : index
    %552 = vector.load %arg14[%c144_201, %c0_202] : memref<256x128xf32, #tpu.memory_space<vmem>>, vector<16x128xf32>
    tpu.vector_store %arg14[%c144_201, %c0_202], %551 {strides = array<i32>} : memref<256x128xf32, #tpu.memory_space<vmem>>, vector<16x128xf32>,
    %cst_203 = arith.constant 0.000000e+00 : f32
    %553 = vector.broadcast %cst_203 : f32 to vector<16x128xf32>
    %c240_204 = arith.constant 240 : index
    %c0_205 = arith.constant 0 : index
    %554 = vector.load %arg13[%c240_204, %c0_205] : memref<432x128xf32, #tpu.memory_space<vmem>>, vector<16x128xf32>
    %555 = vector.extract_strided_slice %21 {offsets = [0, 0], sizes = [1, 128], strides = [1, 1]} : vector<9x128xf32> to vector<1x128xf32>
    %556 = vector.broadcast %555 : vector<1x128xf32> to vector<16x128xf32>
    %557 = arith.mulf %554, %556 : vector<16x128xf32>
    %558 = arith.addf %553, %557 : vector<16x128xf32>
    %c241_206 = arith.constant 241 : index
    %c0_207 = arith.constant 0 : index
    %559 = vector.load %arg13[%c241_206, %c0_207] : memref<432x128xf32, #tpu.memory_space<vmem>>, vector<16x128xf32>
    %560 = vector.extract_strided_slice %21 {offsets = [1, 0], sizes = [1, 128], strides = [1, 1]} : vector<9x128xf32> to vector<1x128xf32>
    %561 = vector.broadcast %560 : vector<1x128xf32> to vector<16x128xf32>
    %562 = arith.mulf %559, %561 : vector<16x128xf32>
    %563 = arith.addf %558, %562 : vector<16x128xf32>
    %c242_208 = arith.constant 242 : index
    %c0_209 = arith.constant 0 : index
    %564 = vector.load %arg13[%c242_208, %c0_209] : memref<432x128xf32, #tpu.memory_space<vmem>>, vector<16x128xf32>
    %565 = vector.extract_strided_slice %21 {offsets = [2, 0], sizes = [1, 128], strides = [1, 1]} : vector<9x128xf32> to vector<1x128xf32>
    %566 = vector.broadcast %565 : vector<1x128xf32> to vector<16x128xf32>
    %567 = arith.mulf %564, %566 : vector<16x128xf32>
    %568 = arith.addf %563, %567 : vector<16x128xf32>
    %c264_210 = arith.constant 264 : index
    %c0_211 = arith.constant 0 : index
    %569 = vector.load %arg13[%c264_210, %c0_211] : memref<432x128xf32, #tpu.memory_space<vmem>>, vector<16x128xf32>
    %570 = vector.extract_strided_slice %21 {offsets = [3, 0], sizes = [1, 128], strides = [1, 1]} : vector<9x128xf32> to vector<1x128xf32>
    %571 = vector.broadcast %570 : vector<1x128xf32> to vector<16x128xf32>
    %572 = arith.mulf %569, %571 : vector<16x128xf32>
    %573 = arith.addf %568, %572 : vector<16x128xf32>
    %c265_212 = arith.constant 265 : index
    %c0_213 = arith.constant 0 : index
    %574 = vector.load %arg13[%c265_212, %c0_213] : memref<432x128xf32, #tpu.memory_space<vmem>>, vector<16x128xf32>
    %575 = vector.extract_strided_slice %21 {offsets = [4, 0], sizes = [1, 128], strides = [1, 1]} : vector<9x128xf32> to vector<1x128xf32>
    %576 = vector.broadcast %575 : vector<1x128xf32> to vector<16x128xf32>
    %577 = arith.mulf %574, %576 : vector<16x128xf32>
    %578 = arith.addf %573, %577 : vector<16x128xf32>
    %c266_214 = arith.constant 266 : index
    %c0_215 = arith.constant 0 : index
    %579 = vector.load %arg13[%c266_214, %c0_215] : memref<432x128xf32, #tpu.memory_space<vmem>>, vector<16x128xf32>
    %580 = vector.extract_strided_slice %21 {offsets = [5, 0], sizes = [1, 128], strides = [1, 1]} : vector<9x128xf32> to vector<1x128xf32>
    %581 = vector.broadcast %580 : vector<1x128xf32> to vector<16x128xf32>
    %582 = arith.mulf %579, %581 : vector<16x128xf32>
    %583 = arith.addf %578, %582 : vector<16x128xf32>
    %c288 = arith.constant 288 : index
    %c0_216 = arith.constant 0 : index
    %584 = vector.load %arg13[%c288, %c0_216] : memref<432x128xf32, #tpu.memory_space<vmem>>, vector<16x128xf32>
    %585 = vector.extract_strided_slice %21 {offsets = [6, 0], sizes = [1, 128], strides = [1, 1]} : vector<9x128xf32> to vector<1x128xf32>
    %586 = vector.broadcast %585 : vector<1x128xf32> to vector<16x128xf32>
    %587 = arith.mulf %584, %586 : vector<16x128xf32>
    %588 = arith.addf %583, %587 : vector<16x128xf32>
    %c289 = arith.constant 289 : index
    %c0_217 = arith.constant 0 : index
    %589 = vector.load %arg13[%c289, %c0_217] : memref<432x128xf32, #tpu.memory_space<vmem>>, vector<16x128xf32>
    %590 = vector.extract_strided_slice %21 {offsets = [7, 0], sizes = [1, 128], strides = [1, 1]} : vector<9x128xf32> to vector<1x128xf32>
    %591 = vector.broadcast %590 : vector<1x128xf32> to vector<16x128xf32>
    %592 = arith.mulf %589, %591 : vector<16x128xf32>
    %593 = arith.addf %588, %592 : vector<16x128xf32>
    %c290 = arith.constant 290 : index
    %c0_218 = arith.constant 0 : index
    %594 = vector.load %arg13[%c290, %c0_218] : memref<432x128xf32, #tpu.memory_space<vmem>>, vector<16x128xf32>
    %595 = vector.extract_strided_slice %21 {offsets = [8, 0], sizes = [1, 128], strides = [1, 1]} : vector<9x128xf32> to vector<1x128xf32>
    %596 = vector.broadcast %595 : vector<1x128xf32> to vector<16x128xf32>
    %597 = arith.mulf %594, %596 : vector<16x128xf32>
    %598 = arith.addf %593, %597 : vector<16x128xf32>
    %599 = vector.broadcast %22 : vector<1x128xf32> to vector<16x128xf32>
    %600 = arith.addf %598, %599 : vector<16x128xf32>
    %cst_219 = arith.constant 0.000000e+00 : f32
    %cst_220 = arith.constant 6.000000e+00 : f32
    %601 = vector.broadcast %cst_219 : f32 to vector<16x128xf32>
    %602 = arith.maximumf %601, %600 : vector<16x128xf32>
    %603 = vector.broadcast %cst_220 : f32 to vector<16x128xf32>
    %604 = arith.minimumf %603, %602 : vector<16x128xf32>
    %c160 = arith.constant 160 : index
    %c0_221 = arith.constant 0 : index
    %605 = vector.load %arg14[%c160, %c0_221] : memref<256x128xf32, #tpu.memory_space<vmem>>, vector<16x128xf32>
    tpu.vector_store %arg14[%c160, %c0_221], %604 {strides = array<i32>} : memref<256x128xf32, #tpu.memory_space<vmem>>, vector<16x128xf32>,
    %cst_222 = arith.constant 0.000000e+00 : f32
    %606 = vector.broadcast %cst_222 : f32 to vector<16x128xf32>
    %c264_223 = arith.constant 264 : index
    %c0_224 = arith.constant 0 : index
    %607 = vector.load %arg13[%c264_223, %c0_224] : memref<432x128xf32, #tpu.memory_space<vmem>>, vector<16x128xf32>
    %608 = vector.extract_strided_slice %21 {offsets = [0, 0], sizes = [1, 128], strides = [1, 1]} : vector<9x128xf32> to vector<1x128xf32>
    %609 = vector.broadcast %608 : vector<1x128xf32> to vector<16x128xf32>
    %610 = arith.mulf %607, %609 : vector<16x128xf32>
    %611 = arith.addf %606, %610 : vector<16x128xf32>
    %c265_225 = arith.constant 265 : index
    %c0_226 = arith.constant 0 : index
    %612 = vector.load %arg13[%c265_225, %c0_226] : memref<432x128xf32, #tpu.memory_space<vmem>>, vector<16x128xf32>
    %613 = vector.extract_strided_slice %21 {offsets = [1, 0], sizes = [1, 128], strides = [1, 1]} : vector<9x128xf32> to vector<1x128xf32>
    %614 = vector.broadcast %613 : vector<1x128xf32> to vector<16x128xf32>
    %615 = arith.mulf %612, %614 : vector<16x128xf32>
    %616 = arith.addf %611, %615 : vector<16x128xf32>
    %c266_227 = arith.constant 266 : index
    %c0_228 = arith.constant 0 : index
    %617 = vector.load %arg13[%c266_227, %c0_228] : memref<432x128xf32, #tpu.memory_space<vmem>>, vector<16x128xf32>
    %618 = vector.extract_strided_slice %21 {offsets = [2, 0], sizes = [1, 128], strides = [1, 1]} : vector<9x128xf32> to vector<1x128xf32>
    %619 = vector.broadcast %618 : vector<1x128xf32> to vector<16x128xf32>
    %620 = arith.mulf %617, %619 : vector<16x128xf32>
    %621 = arith.addf %616, %620 : vector<16x128xf32>
    %c288_229 = arith.constant 288 : index
    %c0_230 = arith.constant 0 : index
    %622 = vector.load %arg13[%c288_229, %c0_230] : memref<432x128xf32, #tpu.memory_space<vmem>>, vector<16x128xf32>
    %623 = vector.extract_strided_slice %21 {offsets = [3, 0], sizes = [1, 128], strides = [1, 1]} : vector<9x128xf32> to vector<1x128xf32>
    %624 = vector.broadcast %623 : vector<1x128xf32> to vector<16x128xf32>
    %625 = arith.mulf %622, %624 : vector<16x128xf32>
    %626 = arith.addf %621, %625 : vector<16x128xf32>
    %c289_231 = arith.constant 289 : index
    %c0_232 = arith.constant 0 : index
    %627 = vector.load %arg13[%c289_231, %c0_232] : memref<432x128xf32, #tpu.memory_space<vmem>>, vector<16x128xf32>
    %628 = vector.extract_strided_slice %21 {offsets = [4, 0], sizes = [1, 128], strides = [1, 1]} : vector<9x128xf32> to vector<1x128xf32>
    %629 = vector.broadcast %628 : vector<1x128xf32> to vector<16x128xf32>
    %630 = arith.mulf %627, %629 : vector<16x128xf32>
    %631 = arith.addf %626, %630 : vector<16x128xf32>
    %c290_233 = arith.constant 290 : index
    %c0_234 = arith.constant 0 : index
    %632 = vector.load %arg13[%c290_233, %c0_234] : memref<432x128xf32, #tpu.memory_space<vmem>>, vector<16x128xf32>
    %633 = vector.extract_strided_slice %21 {offsets = [5, 0], sizes = [1, 128], strides = [1, 1]} : vector<9x128xf32> to vector<1x128xf32>
    %634 = vector.broadcast %633 : vector<1x128xf32> to vector<16x128xf32>
    %635 = arith.mulf %632, %634 : vector<16x128xf32>
    %636 = arith.addf %631, %635 : vector<16x128xf32>
    %c312 = arith.constant 312 : index
    %c0_235 = arith.constant 0 : index
    %637 = vector.load %arg13[%c312, %c0_235] : memref<432x128xf32, #tpu.memory_space<vmem>>, vector<16x128xf32>
    %638 = vector.extract_strided_slice %21 {offsets = [6, 0], sizes = [1, 128], strides = [1, 1]} : vector<9x128xf32> to vector<1x128xf32>
    %639 = vector.broadcast %638 : vector<1x128xf32> to vector<16x128xf32>
    %640 = arith.mulf %637, %639 : vector<16x128xf32>
    %641 = arith.addf %636, %640 : vector<16x128xf32>
    %c313 = arith.constant 313 : index
    %c0_236 = arith.constant 0 : index
    %642 = vector.load %arg13[%c313, %c0_236] : memref<432x128xf32, #tpu.memory_space<vmem>>, vector<16x128xf32>
    %643 = vector.extract_strided_slice %21 {offsets = [7, 0], sizes = [1, 128], strides = [1, 1]} : vector<9x128xf32> to vector<1x128xf32>
    %644 = vector.broadcast %643 : vector<1x128xf32> to vector<16x128xf32>
    %645 = arith.mulf %642, %644 : vector<16x128xf32>
    %646 = arith.addf %641, %645 : vector<16x128xf32>
    %c314 = arith.constant 314 : index
    %c0_237 = arith.constant 0 : index
    %647 = vector.load %arg13[%c314, %c0_237] : memref<432x128xf32, #tpu.memory_space<vmem>>, vector<16x128xf32>
    %648 = vector.extract_strided_slice %21 {offsets = [8, 0], sizes = [1, 128], strides = [1, 1]} : vector<9x128xf32> to vector<1x128xf32>
    %649 = vector.broadcast %648 : vector<1x128xf32> to vector<16x128xf32>
    %650 = arith.mulf %647, %649 : vector<16x128xf32>
    %651 = arith.addf %646, %650 : vector<16x128xf32>
    %652 = vector.broadcast %22 : vector<1x128xf32> to vector<16x128xf32>
    %653 = arith.addf %651, %652 : vector<16x128xf32>
    %cst_238 = arith.constant 0.000000e+00 : f32
    %cst_239 = arith.constant 6.000000e+00 : f32
    %654 = vector.broadcast %cst_238 : f32 to vector<16x128xf32>
    %655 = arith.maximumf %654, %653 : vector<16x128xf32>
    %656 = vector.broadcast %cst_239 : f32 to vector<16x128xf32>
    %657 = arith.minimumf %656, %655 : vector<16x128xf32>
    %c176 = arith.constant 176 : index
    %c0_240 = arith.constant 0 : index
    %658 = vector.load %arg14[%c176, %c0_240] : memref<256x128xf32, #tpu.memory_space<vmem>>, vector<16x128xf32>
    tpu.vector_store %arg14[%c176, %c0_240], %657 {strides = array<i32>} : memref<256x128xf32, #tpu.memory_space<vmem>>, vector<16x128xf32>,
    %cst_241 = arith.constant 0.000000e+00 : f32
    %659 = vector.broadcast %cst_241 : f32 to vector<16x128xf32>
    %c288_242 = arith.constant 288 : index
    %c0_243 = arith.constant 0 : index
    %660 = vector.load %arg13[%c288_242, %c0_243] : memref<432x128xf32, #tpu.memory_space<vmem>>, vector<16x128xf32>
    %661 = vector.extract_strided_slice %21 {offsets = [0, 0], sizes = [1, 128], strides = [1, 1]} : vector<9x128xf32> to vector<1x128xf32>
    %662 = vector.broadcast %661 : vector<1x128xf32> to vector<16x128xf32>
    %663 = arith.mulf %660, %662 : vector<16x128xf32>
    %664 = arith.addf %659, %663 : vector<16x128xf32>
    %c289_244 = arith.constant 289 : index
    %c0_245 = arith.constant 0 : index
    %665 = vector.load %arg13[%c289_244, %c0_245] : memref<432x128xf32, #tpu.memory_space<vmem>>, vector<16x128xf32>
    %666 = vector.extract_strided_slice %21 {offsets = [1, 0], sizes = [1, 128], strides = [1, 1]} : vector<9x128xf32> to vector<1x128xf32>
    %667 = vector.broadcast %666 : vector<1x128xf32> to vector<16x128xf32>
    %668 = arith.mulf %665, %667 : vector<16x128xf32>
    %669 = arith.addf %664, %668 : vector<16x128xf32>
    %c290_246 = arith.constant 290 : index
    %c0_247 = arith.constant 0 : index
    %670 = vector.load %arg13[%c290_246, %c0_247] : memref<432x128xf32, #tpu.memory_space<vmem>>, vector<16x128xf32>
    %671 = vector.extract_strided_slice %21 {offsets = [2, 0], sizes = [1, 128], strides = [1, 1]} : vector<9x128xf32> to vector<1x128xf32>
    %672 = vector.broadcast %671 : vector<1x128xf32> to vector<16x128xf32>
    %673 = arith.mulf %670, %672 : vector<16x128xf32>
    %674 = arith.addf %669, %673 : vector<16x128xf32>
    %c312_248 = arith.constant 312 : index
    %c0_249 = arith.constant 0 : index
    %675 = vector.load %arg13[%c312_248, %c0_249] : memref<432x128xf32, #tpu.memory_space<vmem>>, vector<16x128xf32>
    %676 = vector.extract_strided_slice %21 {offsets = [3, 0], sizes = [1, 128], strides = [1, 1]} : vector<9x128xf32> to vector<1x128xf32>
    %677 = vector.broadcast %676 : vector<1x128xf32> to vector<16x128xf32>
    %678 = arith.mulf %675, %677 : vector<16x128xf32>
    %679 = arith.addf %674, %678 : vector<16x128xf32>
    %c313_250 = arith.constant 313 : index
    %c0_251 = arith.constant 0 : index
    %680 = vector.load %arg13[%c313_250, %c0_251] : memref<432x128xf32, #tpu.memory_space<vmem>>, vector<16x128xf32>
    %681 = vector.extract_strided_slice %21 {offsets = [4, 0], sizes = [1, 128], strides = [1, 1]} : vector<9x128xf32> to vector<1x128xf32>
    %682 = vector.broadcast %681 : vector<1x128xf32> to vector<16x128xf32>
    %683 = arith.mulf %680, %682 : vector<16x128xf32>
    %684 = arith.addf %679, %683 : vector<16x128xf32>
    %c314_252 = arith.constant 314 : index
    %c0_253 = arith.constant 0 : index
    %685 = vector.load %arg13[%c314_252, %c0_253] : memref<432x128xf32, #tpu.memory_space<vmem>>, vector<16x128xf32>
    %686 = vector.extract_strided_slice %21 {offsets = [5, 0], sizes = [1, 128], strides = [1, 1]} : vector<9x128xf32> to vector<1x128xf32>
    %687 = vector.broadcast %686 : vector<1x128xf32> to vector<16x128xf32>
    %688 = arith.mulf %685, %687 : vector<16x128xf32>
    %689 = arith.addf %684, %688 : vector<16x128xf32>
    %c336 = arith.constant 336 : index
    %c0_254 = arith.constant 0 : index
    %690 = vector.load %arg13[%c336, %c0_254] : memref<432x128xf32, #tpu.memory_space<vmem>>, vector<16x128xf32>
    %691 = vector.extract_strided_slice %21 {offsets = [6, 0], sizes = [1, 128], strides = [1, 1]} : vector<9x128xf32> to vector<1x128xf32>
    %692 = vector.broadcast %691 : vector<1x128xf32> to vector<16x128xf32>
    %693 = arith.mulf %690, %692 : vector<16x128xf32>
    %694 = arith.addf %689, %693 : vector<16x128xf32>
    %c337 = arith.constant 337 : index
    %c0_255 = arith.constant 0 : index
    %695 = vector.load %arg13[%c337, %c0_255] : memref<432x128xf32, #tpu.memory_space<vmem>>, vector<16x128xf32>
    %696 = vector.extract_strided_slice %21 {offsets = [7, 0], sizes = [1, 128], strides = [1, 1]} : vector<9x128xf32> to vector<1x128xf32>
    %697 = vector.broadcast %696 : vector<1x128xf32> to vector<16x128xf32>
    %698 = arith.mulf %695, %697 : vector<16x128xf32>
    %699 = arith.addf %694, %698 : vector<16x128xf32>
    %c338 = arith.constant 338 : index
    %c0_256 = arith.constant 0 : index
    %700 = vector.load %arg13[%c338, %c0_256] : memref<432x128xf32, #tpu.memory_space<vmem>>, vector<16x128xf32>
    %701 = vector.extract_strided_slice %21 {offsets = [8, 0], sizes = [1, 128], strides = [1, 1]} : vector<9x128xf32> to vector<1x128xf32>
    %702 = vector.broadcast %701 : vector<1x128xf32> to vector<16x128xf32>
    %703 = arith.mulf %700, %702 : vector<16x128xf32>
    %704 = arith.addf %699, %703 : vector<16x128xf32>
    %705 = vector.broadcast %22 : vector<1x128xf32> to vector<16x128xf32>
    %706 = arith.addf %704, %705 : vector<16x128xf32>
    %cst_257 = arith.constant 0.000000e+00 : f32
    %cst_258 = arith.constant 6.000000e+00 : f32
    %707 = vector.broadcast %cst_257 : f32 to vector<16x128xf32>
    %708 = arith.maximumf %707, %706 : vector<16x128xf32>
    %709 = vector.broadcast %cst_258 : f32 to vector<16x128xf32>
    %710 = arith.minimumf %709, %708 : vector<16x128xf32>
    %c192_259 = arith.constant 192 : index
    %c0_260 = arith.constant 0 : index
    %711 = vector.load %arg14[%c192_259, %c0_260] : memref<256x128xf32, #tpu.memory_space<vmem>>, vector<16x128xf32>
    tpu.vector_store %arg14[%c192_259, %c0_260], %710 {strides = array<i32>} : memref<256x128xf32, #tpu.memory_space<vmem>>, vector<16x128xf32>,
    %cst_261 = arith.constant 0.000000e+00 : f32
    %712 = vector.broadcast %cst_261 : f32 to vector<16x128xf32>
    %c312_262 = arith.constant 312 : index
    %c0_263 = arith.constant 0 : index
    %713 = vector.load %arg13[%c312_262, %c0_263] : memref<432x128xf32, #tpu.memory_space<vmem>>, vector<16x128xf32>
    %714 = vector.extract_strided_slice %21 {offsets = [0, 0], sizes = [1, 128], strides = [1, 1]} : vector<9x128xf32> to vector<1x128xf32>
    %715 = vector.broadcast %714 : vector<1x128xf32> to vector<16x128xf32>
    %716 = arith.mulf %713, %715 : vector<16x128xf32>
    %717 = arith.addf %712, %716 : vector<16x128xf32>
    %c313_264 = arith.constant 313 : index
    %c0_265 = arith.constant 0 : index
    %718 = vector.load %arg13[%c313_264, %c0_265] : memref<432x128xf32, #tpu.memory_space<vmem>>, vector<16x128xf32>
    %719 = vector.extract_strided_slice %21 {offsets = [1, 0], sizes = [1, 128], strides = [1, 1]} : vector<9x128xf32> to vector<1x128xf32>
    %720 = vector.broadcast %719 : vector<1x128xf32> to vector<16x128xf32>
    %721 = arith.mulf %718, %720 : vector<16x128xf32>
    %722 = arith.addf %717, %721 : vector<16x128xf32>
    %c314_266 = arith.constant 314 : index
    %c0_267 = arith.constant 0 : index
    %723 = vector.load %arg13[%c314_266, %c0_267] : memref<432x128xf32, #tpu.memory_space<vmem>>, vector<16x128xf32>
    %724 = vector.extract_strided_slice %21 {offsets = [2, 0], sizes = [1, 128], strides = [1, 1]} : vector<9x128xf32> to vector<1x128xf32>
    %725 = vector.broadcast %724 : vector<1x128xf32> to vector<16x128xf32>
    %726 = arith.mulf %723, %725 : vector<16x128xf32>
    %727 = arith.addf %722, %726 : vector<16x128xf32>
    %c336_268 = arith.constant 336 : index
    %c0_269 = arith.constant 0 : index
    %728 = vector.load %arg13[%c336_268, %c0_269] : memref<432x128xf32, #tpu.memory_space<vmem>>, vector<16x128xf32>
    %729 = vector.extract_strided_slice %21 {offsets = [3, 0], sizes = [1, 128], strides = [1, 1]} : vector<9x128xf32> to vector<1x128xf32>
    %730 = vector.broadcast %729 : vector<1x128xf32> to vector<16x128xf32>
    %731 = arith.mulf %728, %730 : vector<16x128xf32>
    %732 = arith.addf %727, %731 : vector<16x128xf32>
    %c337_270 = arith.constant 337 : index
    %c0_271 = arith.constant 0 : index
    %733 = vector.load %arg13[%c337_270, %c0_271] : memref<432x128xf32, #tpu.memory_space<vmem>>, vector<16x128xf32>
    %734 = vector.extract_strided_slice %21 {offsets = [4, 0], sizes = [1, 128], strides = [1, 1]} : vector<9x128xf32> to vector<1x128xf32>
    %735 = vector.broadcast %734 : vector<1x128xf32> to vector<16x128xf32>
    %736 = arith.mulf %733, %735 : vector<16x128xf32>
    %737 = arith.addf %732, %736 : vector<16x128xf32>
    %c338_272 = arith.constant 338 : index
    %c0_273 = arith.constant 0 : index
    %738 = vector.load %arg13[%c338_272, %c0_273] : memref<432x128xf32, #tpu.memory_space<vmem>>, vector<16x128xf32>
    %739 = vector.extract_strided_slice %21 {offsets = [5, 0], sizes = [1, 128], strides = [1, 1]} : vector<9x128xf32> to vector<1x128xf32>
    %740 = vector.broadcast %739 : vector<1x128xf32> to vector<16x128xf32>
    %741 = arith.mulf %738, %740 : vector<16x128xf32>
    %742 = arith.addf %737, %741 : vector<16x128xf32>
    %c360 = arith.constant 360 : index
    %c0_274 = arith.constant 0 : index
    %743 = vector.load %arg13[%c360, %c0_274] : memref<432x128xf32, #tpu.memory_space<vmem>>, vector<16x128xf32>
    %744 = vector.extract_strided_slice %21 {offsets = [6, 0], sizes = [1, 128], strides = [1, 1]} : vector<9x128xf32> to vector<1x128xf32>
    %745 = vector.broadcast %744 : vector<1x128xf32> to vector<16x128xf32>
    %746 = arith.mulf %743, %745 : vector<16x128xf32>
    %747 = arith.addf %742, %746 : vector<16x128xf32>
    %c361 = arith.constant 361 : index
    %c0_275 = arith.constant 0 : index
    %748 = vector.load %arg13[%c361, %c0_275] : memref<432x128xf32, #tpu.memory_space<vmem>>, vector<16x128xf32>
    %749 = vector.extract_strided_slice %21 {offsets = [7, 0], sizes = [1, 128], strides = [1, 1]} : vector<9x128xf32> to vector<1x128xf32>
    %750 = vector.broadcast %749 : vector<1x128xf32> to vector<16x128xf32>
    %751 = arith.mulf %748, %750 : vector<16x128xf32>
    %752 = arith.addf %747, %751 : vector<16x128xf32>
    %c362 = arith.constant 362 : index
    %c0_276 = arith.constant 0 : index
    %753 = vector.load %arg13[%c362, %c0_276] : memref<432x128xf32, #tpu.memory_space<vmem>>, vector<16x128xf32>
    %754 = vector.extract_strided_slice %21 {offsets = [8, 0], sizes = [1, 128], strides = [1, 1]} : vector<9x128xf32> to vector<1x128xf32>
    %755 = vector.broadcast %754 : vector<1x128xf32> to vector<16x128xf32>
    %756 = arith.mulf %753, %755 : vector<16x128xf32>
    %757 = arith.addf %752, %756 : vector<16x128xf32>
    %758 = vector.broadcast %22 : vector<1x128xf32> to vector<16x128xf32>
    %759 = arith.addf %757, %758 : vector<16x128xf32>
    %cst_277 = arith.constant 0.000000e+00 : f32
    %cst_278 = arith.constant 6.000000e+00 : f32
    %760 = vector.broadcast %cst_277 : f32 to vector<16x128xf32>
    %761 = arith.maximumf %760, %759 : vector<16x128xf32>
    %762 = vector.broadcast %cst_278 : f32 to vector<16x128xf32>
    %763 = arith.minimumf %762, %761 : vector<16x128xf32>
    %c208 = arith.constant 208 : index
    %c0_279 = arith.constant 0 : index
    %764 = vector.load %arg14[%c208, %c0_279] : memref<256x128xf32, #tpu.memory_space<vmem>>, vector<16x128xf32>
    tpu.vector_store %arg14[%c208, %c0_279], %763 {strides = array<i32>} : memref<256x128xf32, #tpu.memory_space<vmem>>, vector<16x128xf32>,
    %cst_280 = arith.constant 0.000000e+00 : f32
    %765 = vector.broadcast %cst_280 : f32 to vector<16x128xf32>
    %c336_281 = arith.constant 336 : index
    %c0_282 = arith.constant 0 : index
    %766 = vector.load %arg13[%c336_281, %c0_282] : memref<432x128xf32, #tpu.memory_space<vmem>>, vector<16x128xf32>
    %767 = vector.extract_strided_slice %21 {offsets = [0, 0], sizes = [1, 128], strides = [1, 1]} : vector<9x128xf32> to vector<1x128xf32>
    %768 = vector.broadcast %767 : vector<1x128xf32> to vector<16x128xf32>
    %769 = arith.mulf %766, %768 : vector<16x128xf32>
    %770 = arith.addf %765, %769 : vector<16x128xf32>
    %c337_283 = arith.constant 337 : index
    %c0_284 = arith.constant 0 : index
    %771 = vector.load %arg13[%c337_283, %c0_284] : memref<432x128xf32, #tpu.memory_space<vmem>>, vector<16x128xf32>
    %772 = vector.extract_strided_slice %21 {offsets = [1, 0], sizes = [1, 128], strides = [1, 1]} : vector<9x128xf32> to vector<1x128xf32>
    %773 = vector.broadcast %772 : vector<1x128xf32> to vector<16x128xf32>
    %774 = arith.mulf %771, %773 : vector<16x128xf32>
    %775 = arith.addf %770, %774 : vector<16x128xf32>
    %c338_285 = arith.constant 338 : index
    %c0_286 = arith.constant 0 : index
    %776 = vector.load %arg13[%c338_285, %c0_286] : memref<432x128xf32, #tpu.memory_space<vmem>>, vector<16x128xf32>
    %777 = vector.extract_strided_slice %21 {offsets = [2, 0], sizes = [1, 128], strides = [1, 1]} : vector<9x128xf32> to vector<1x128xf32>
    %778 = vector.broadcast %777 : vector<1x128xf32> to vector<16x128xf32>
    %779 = arith.mulf %776, %778 : vector<16x128xf32>
    %780 = arith.addf %775, %779 : vector<16x128xf32>
    %c360_287 = arith.constant 360 : index
    %c0_288 = arith.constant 0 : index
    %781 = vector.load %arg13[%c360_287, %c0_288] : memref<432x128xf32, #tpu.memory_space<vmem>>, vector<16x128xf32>
    %782 = vector.extract_strided_slice %21 {offsets = [3, 0], sizes = [1, 128], strides = [1, 1]} : vector<9x128xf32> to vector<1x128xf32>
    %783 = vector.broadcast %782 : vector<1x128xf32> to vector<16x128xf32>
    %784 = arith.mulf %781, %783 : vector<16x128xf32>
    %785 = arith.addf %780, %784 : vector<16x128xf32>
    %c361_289 = arith.constant 361 : index
    %c0_290 = arith.constant 0 : index
    %786 = vector.load %arg13[%c361_289, %c0_290] : memref<432x128xf32, #tpu.memory_space<vmem>>, vector<16x128xf32>
    %787 = vector.extract_strided_slice %21 {offsets = [4, 0], sizes = [1, 128], strides = [1, 1]} : vector<9x128xf32> to vector<1x128xf32>
    %788 = vector.broadcast %787 : vector<1x128xf32> to vector<16x128xf32>
    %789 = arith.mulf %786, %788 : vector<16x128xf32>
    %790 = arith.addf %785, %789 : vector<16x128xf32>
    %c362_291 = arith.constant 362 : index
    %c0_292 = arith.constant 0 : index
    %791 = vector.load %arg13[%c362_291, %c0_292] : memref<432x128xf32, #tpu.memory_space<vmem>>, vector<16x128xf32>
    %792 = vector.extract_strided_slice %21 {offsets = [5, 0], sizes = [1, 128], strides = [1, 1]} : vector<9x128xf32> to vector<1x128xf32>
    %793 = vector.broadcast %792 : vector<1x128xf32> to vector<16x128xf32>
    %794 = arith.mulf %791, %793 : vector<16x128xf32>
    %795 = arith.addf %790, %794 : vector<16x128xf32>
    %c384 = arith.constant 384 : index
    %c0_293 = arith.constant 0 : index
    %796 = vector.load %arg13[%c384, %c0_293] : memref<432x128xf32, #tpu.memory_space<vmem>>, vector<16x128xf32>
    %797 = vector.extract_strided_slice %21 {offsets = [6, 0], sizes = [1, 128], strides = [1, 1]} : vector<9x128xf32> to vector<1x128xf32>
    %798 = vector.broadcast %797 : vector<1x128xf32> to vector<16x128xf32>
    %799 = arith.mulf %796, %798 : vector<16x128xf32>
    %800 = arith.addf %795, %799 : vector<16x128xf32>
    %c385 = arith.constant 385 : index
    %c0_294 = arith.constant 0 : index
    %801 = vector.load %arg13[%c385, %c0_294] : memref<432x128xf32, #tpu.memory_space<vmem>>, vector<16x128xf32>
    %802 = vector.extract_strided_slice %21 {offsets = [7, 0], sizes = [1, 128], strides = [1, 1]} : vector<9x128xf32> to vector<1x128xf32>
    %803 = vector.broadcast %802 : vector<1x128xf32> to vector<16x128xf32>
    %804 = arith.mulf %801, %803 : vector<16x128xf32>
    %805 = arith.addf %800, %804 : vector<16x128xf32>
    %c386 = arith.constant 386 : index
    %c0_295 = arith.constant 0 : index
    %806 = vector.load %arg13[%c386, %c0_295] : memref<432x128xf32, #tpu.memory_space<vmem>>, vector<16x128xf32>
    %807 = vector.extract_strided_slice %21 {offsets = [8, 0], sizes = [1, 128], strides = [1, 1]} : vector<9x128xf32> to vector<1x128xf32>
    %808 = vector.broadcast %807 : vector<1x128xf32> to vector<16x128xf32>
    %809 = arith.mulf %806, %808 : vector<16x128xf32>
    %810 = arith.addf %805, %809 : vector<16x128xf32>
    %811 = vector.broadcast %22 : vector<1x128xf32> to vector<16x128xf32>
    %812 = arith.addf %810, %811 : vector<16x128xf32>
    %cst_296 = arith.constant 0.000000e+00 : f32
    %cst_297 = arith.constant 6.000000e+00 : f32
    %813 = vector.broadcast %cst_296 : f32 to vector<16x128xf32>
    %814 = arith.maximumf %813, %812 : vector<16x128xf32>
    %815 = vector.broadcast %cst_297 : f32 to vector<16x128xf32>
    %816 = arith.minimumf %815, %814 : vector<16x128xf32>
    %c224 = arith.constant 224 : index
    %c0_298 = arith.constant 0 : index
    %817 = vector.load %arg14[%c224, %c0_298] : memref<256x128xf32, #tpu.memory_space<vmem>>, vector<16x128xf32>
    tpu.vector_store %arg14[%c224, %c0_298], %816 {strides = array<i32>} : memref<256x128xf32, #tpu.memory_space<vmem>>, vector<16x128xf32>,
    %cst_299 = arith.constant 0.000000e+00 : f32
    %818 = vector.broadcast %cst_299 : f32 to vector<16x128xf32>
    %c360_300 = arith.constant 360 : index
    %c0_301 = arith.constant 0 : index
    %819 = vector.load %arg13[%c360_300, %c0_301] : memref<432x128xf32, #tpu.memory_space<vmem>>, vector<16x128xf32>
    %820 = vector.extract_strided_slice %21 {offsets = [0, 0], sizes = [1, 128], strides = [1, 1]} : vector<9x128xf32> to vector<1x128xf32>
    %821 = vector.broadcast %820 : vector<1x128xf32> to vector<16x128xf32>
    %822 = arith.mulf %819, %821 : vector<16x128xf32>
    %823 = arith.addf %818, %822 : vector<16x128xf32>
    %c361_302 = arith.constant 361 : index
    %c0_303 = arith.constant 0 : index
    %824 = vector.load %arg13[%c361_302, %c0_303] : memref<432x128xf32, #tpu.memory_space<vmem>>, vector<16x128xf32>
    %825 = vector.extract_strided_slice %21 {offsets = [1, 0], sizes = [1, 128], strides = [1, 1]} : vector<9x128xf32> to vector<1x128xf32>
    %826 = vector.broadcast %825 : vector<1x128xf32> to vector<16x128xf32>
    %827 = arith.mulf %824, %826 : vector<16x128xf32>
    %828 = arith.addf %823, %827 : vector<16x128xf32>
    %c362_304 = arith.constant 362 : index
    %c0_305 = arith.constant 0 : index
    %829 = vector.load %arg13[%c362_304, %c0_305] : memref<432x128xf32, #tpu.memory_space<vmem>>, vector<16x128xf32>
    %830 = vector.extract_strided_slice %21 {offsets = [2, 0], sizes = [1, 128], strides = [1, 1]} : vector<9x128xf32> to vector<1x128xf32>
    %831 = vector.broadcast %830 : vector<1x128xf32> to vector<16x128xf32>
    %832 = arith.mulf %829, %831 : vector<16x128xf32>
    %833 = arith.addf %828, %832 : vector<16x128xf32>
    %c384_306 = arith.constant 384 : index
    %c0_307 = arith.constant 0 : index
    %834 = vector.load %arg13[%c384_306, %c0_307] : memref<432x128xf32, #tpu.memory_space<vmem>>, vector<16x128xf32>
    %835 = vector.extract_strided_slice %21 {offsets = [3, 0], sizes = [1, 128], strides = [1, 1]} : vector<9x128xf32> to vector<1x128xf32>
    %836 = vector.broadcast %835 : vector<1x128xf32> to vector<16x128xf32>
    %837 = arith.mulf %834, %836 : vector<16x128xf32>
    %838 = arith.addf %833, %837 : vector<16x128xf32>
    %c385_308 = arith.constant 385 : index
    %c0_309 = arith.constant 0 : index
    %839 = vector.load %arg13[%c385_308, %c0_309] : memref<432x128xf32, #tpu.memory_space<vmem>>, vector<16x128xf32>
    %840 = vector.extract_strided_slice %21 {offsets = [4, 0], sizes = [1, 128], strides = [1, 1]} : vector<9x128xf32> to vector<1x128xf32>
    %841 = vector.broadcast %840 : vector<1x128xf32> to vector<16x128xf32>
    %842 = arith.mulf %839, %841 : vector<16x128xf32>
    %843 = arith.addf %838, %842 : vector<16x128xf32>
    %c386_310 = arith.constant 386 : index
    %c0_311 = arith.constant 0 : index
    %844 = vector.load %arg13[%c386_310, %c0_311] : memref<432x128xf32, #tpu.memory_space<vmem>>, vector<16x128xf32>
    %845 = vector.extract_strided_slice %21 {offsets = [5, 0], sizes = [1, 128], strides = [1, 1]} : vector<9x128xf32> to vector<1x128xf32>
    %846 = vector.broadcast %845 : vector<1x128xf32> to vector<16x128xf32>
    %847 = arith.mulf %844, %846 : vector<16x128xf32>
    %848 = arith.addf %843, %847 : vector<16x128xf32>
    %c408 = arith.constant 408 : index
    %c0_312 = arith.constant 0 : index
    %849 = vector.load %arg13[%c408, %c0_312] : memref<432x128xf32, #tpu.memory_space<vmem>>, vector<16x128xf32>
    %850 = vector.extract_strided_slice %21 {offsets = [6, 0], sizes = [1, 128], strides = [1, 1]} : vector<9x128xf32> to vector<1x128xf32>
    %851 = vector.broadcast %850 : vector<1x128xf32> to vector<16x128xf32>
    %852 = arith.mulf %849, %851 : vector<16x128xf32>
    %853 = arith.addf %848, %852 : vector<16x128xf32>
    %c409 = arith.constant 409 : index
    %c0_313 = arith.constant 0 : index
    %854 = vector.load %arg13[%c409, %c0_313] : memref<432x128xf32, #tpu.memory_space<vmem>>, vector<16x128xf32>
    %855 = vector.extract_strided_slice %21 {offsets = [7, 0], sizes = [1, 128], strides = [1, 1]} : vector<9x128xf32> to vector<1x128xf32>
    %856 = vector.broadcast %855 : vector<1x128xf32> to vector<16x128xf32>
    %857 = arith.mulf %854, %856 : vector<16x128xf32>
    %858 = arith.addf %853, %857 : vector<16x128xf32>
    %c410 = arith.constant 410 : index
    %c0_314 = arith.constant 0 : index
    %859 = vector.load %arg13[%c410, %c0_314] : memref<432x128xf32, #tpu.memory_space<vmem>>, vector<16x128xf32>
    %860 = vector.extract_strided_slice %21 {offsets = [8, 0], sizes = [1, 128], strides = [1, 1]} : vector<9x128xf32> to vector<1x128xf32>
    %861 = vector.broadcast %860 : vector<1x128xf32> to vector<16x128xf32>
    %862 = arith.mulf %859, %861 : vector<16x128xf32>
    %863 = arith.addf %858, %862 : vector<16x128xf32>
    %864 = vector.broadcast %22 : vector<1x128xf32> to vector<16x128xf32>
    %865 = arith.addf %863, %864 : vector<16x128xf32>
    %cst_315 = arith.constant 0.000000e+00 : f32
    %cst_316 = arith.constant 6.000000e+00 : f32
    %866 = vector.broadcast %cst_315 : f32 to vector<16x128xf32>
    %867 = arith.maximumf %866, %865 : vector<16x128xf32>
    %868 = vector.broadcast %cst_316 : f32 to vector<16x128xf32>
    %869 = arith.minimumf %868, %867 : vector<16x128xf32>
    %c240_317 = arith.constant 240 : index
    %c0_318 = arith.constant 0 : index
    %870 = vector.load %arg14[%c240_317, %c0_318] : memref<256x128xf32, #tpu.memory_space<vmem>>, vector<16x128xf32>
    tpu.vector_store %arg14[%c240_317, %c0_318], %869 {strides = array<i32>} : memref<256x128xf32, #tpu.memory_space<vmem>>, vector<16x128xf32>,
    %c0_319 = arith.constant 0 : index
    %c0_320 = arith.constant 0 : index
    %871 = vector.load %arg14[%c0_319, %c0_320] : memref<256x128xf32, #tpu.memory_space<vmem>>, vector<256x128xf32>
    %c0_321 = arith.constant 0 : index
    %c0_322 = arith.constant 0 : index
    %872 = vector.load %arg8[%c0_321, %c0_322] : memref<128x128xf32, #tpu.memory_space<vmem>>, vector<128x128xf32>
    %cst_323 = arith.constant dense<0.000000e+00> : vector<256x128xf32>
    %873 = tpu.matmul %871, %872, %cst_323 {dimension_numbers = #tpu.dot_dimension_numbers<[1], [0], [0], [1], [0, 0, 1, 1], [], []>} : vector<256x128xf32>, vector<128x128xf32>, vector<256x128xf32> -> vector<256x128xf32>
    %c0_324 = arith.constant 0 : index
    %c0_325 = arith.constant 0 : index
    %874 = vector.load %arg9[%c0_324, %c0_325] : memref<1x128xf32, #tpu.memory_space<vmem>>, vector<1x128xf32>
    %875 = vector.broadcast %874 : vector<1x128xf32> to vector<256x128xf32>
    %876 = arith.addf %873, %875 : vector<256x128xf32>
    %c16_i32 = arith.constant 16 : i32
    %877 = arith.muli %arg1, %c16_i32 : i32
    %c0_i32_326 = arith.constant 0 : i32
    %878 = arith.addi %877, %c0_i32_326 : i32
    %c0_327 = arith.constant 0 : index
    %879 = arith.index_cast %878 : i32 to index
    %c0_328 = arith.constant 0 : index
    %c0_329 = arith.constant 0 : index
    %880 = vector.load %arg2[%c0_327, %879, %c0_328, %c0_329] : memref<1x16x16x8xf32, #tpu.memory_space<vmem>>, vector<1x1x16x8xf32>
    %881 = vector.shape_cast %880 : vector<1x1x16x8xf32> to vector<16x8xf32>
    %c16_i32_330 = arith.constant 16 : i32
    %882 = arith.muli %arg1, %c16_i32_330 : i32
    %c1_i32 = arith.constant 1 : i32
    %883 = arith.addi %882, %c1_i32 : i32
    %c0_331 = arith.constant 0 : index
    %884 = arith.index_cast %883 : i32 to index
    %c0_332 = arith.constant 0 : index
    %c0_333 = arith.constant 0 : index
    %885 = vector.load %arg2[%c0_331, %884, %c0_332, %c0_333] : memref<1x16x16x8xf32, #tpu.memory_space<vmem>>, vector<1x1x16x8xf32>
    %886 = vector.shape_cast %885 : vector<1x1x16x8xf32> to vector<16x8xf32>
    %c16_i32_334 = arith.constant 16 : i32
    %887 = arith.muli %arg1, %c16_i32_334 : i32
    %c2_i32 = arith.constant 2 : i32
    %888 = arith.addi %887, %c2_i32 : i32
    %c0_335 = arith.constant 0 : index
    %889 = arith.index_cast %888 : i32 to index
    %c0_336 = arith.constant 0 : index
    %c0_337 = arith.constant 0 : index
    %890 = vector.load %arg2[%c0_335, %889, %c0_336, %c0_337] : memref<1x16x16x8xf32, #tpu.memory_space<vmem>>, vector<1x1x16x8xf32>
    %891 = vector.shape_cast %890 : vector<1x1x16x8xf32> to vector<16x8xf32>
    %c16_i32_338 = arith.constant 16 : i32
    %892 = arith.muli %arg1, %c16_i32_338 : i32
    %c3_i32 = arith.constant 3 : i32
    %893 = arith.addi %892, %c3_i32 : i32
    %c0_339 = arith.constant 0 : index
    %894 = arith.index_cast %893 : i32 to index
    %c0_340 = arith.constant 0 : index
    %c0_341 = arith.constant 0 : index
    %895 = vector.load %arg2[%c0_339, %894, %c0_340, %c0_341] : memref<1x16x16x8xf32, #tpu.memory_space<vmem>>, vector<1x1x16x8xf32>
    %896 = vector.shape_cast %895 : vector<1x1x16x8xf32> to vector<16x8xf32>
    %c16_i32_342 = arith.constant 16 : i32
    %897 = arith.muli %arg1, %c16_i32_342 : i32
    %c4_i32 = arith.constant 4 : i32
    %898 = arith.addi %897, %c4_i32 : i32
    %c0_343 = arith.constant 0 : index
    %899 = arith.index_cast %898 : i32 to index
    %c0_344 = arith.constant 0 : index
    %c0_345 = arith.constant 0 : index
    %900 = vector.load %arg2[%c0_343, %899, %c0_344, %c0_345] : memref<1x16x16x8xf32, #tpu.memory_space<vmem>>, vector<1x1x16x8xf32>
    %901 = vector.shape_cast %900 : vector<1x1x16x8xf32> to vector<16x8xf32>
    %c16_i32_346 = arith.constant 16 : i32
    %902 = arith.muli %arg1, %c16_i32_346 : i32
    %c5_i32 = arith.constant 5 : i32
    %903 = arith.addi %902, %c5_i32 : i32
    %c0_347 = arith.constant 0 : index
    %904 = arith.index_cast %903 : i32 to index
    %c0_348 = arith.constant 0 : index
    %c0_349 = arith.constant 0 : index
    %905 = vector.load %arg2[%c0_347, %904, %c0_348, %c0_349] : memref<1x16x16x8xf32, #tpu.memory_space<vmem>>, vector<1x1x16x8xf32>
    %906 = vector.shape_cast %905 : vector<1x1x16x8xf32> to vector<16x8xf32>
    %c16_i32_350 = arith.constant 16 : i32
    %907 = arith.muli %arg1, %c16_i32_350 : i32
    %c6_i32 = arith.constant 6 : i32
    %908 = arith.addi %907, %c6_i32 : i32
    %c0_351 = arith.constant 0 : index
    %909 = arith.index_cast %908 : i32 to index
    %c0_352 = arith.constant 0 : index
    %c0_353 = arith.constant 0 : index
    %910 = vector.load %arg2[%c0_351, %909, %c0_352, %c0_353] : memref<1x16x16x8xf32, #tpu.memory_space<vmem>>, vector<1x1x16x8xf32>
    %911 = vector.shape_cast %910 : vector<1x1x16x8xf32> to vector<16x8xf32>
    %c16_i32_354 = arith.constant 16 : i32
    %912 = arith.muli %arg1, %c16_i32_354 : i32
    %c7_i32 = arith.constant 7 : i32
    %913 = arith.addi %912, %c7_i32 : i32
    %c0_355 = arith.constant 0 : index
    %914 = arith.index_cast %913 : i32 to index
    %c0_356 = arith.constant 0 : index
    %c0_357 = arith.constant 0 : index
    %915 = vector.load %arg2[%c0_355, %914, %c0_356, %c0_357] : memref<1x16x16x8xf32, #tpu.memory_space<vmem>>, vector<1x1x16x8xf32>
    %916 = vector.shape_cast %915 : vector<1x1x16x8xf32> to vector<16x8xf32>
    %c16_i32_358 = arith.constant 16 : i32
    %917 = arith.muli %arg1, %c16_i32_358 : i32
    %c8_i32 = arith.constant 8 : i32
    %918 = arith.addi %917, %c8_i32 : i32
    %c0_359 = arith.constant 0 : index
    %919 = arith.index_cast %918 : i32 to index
    %c0_360 = arith.constant 0 : index
    %c0_361 = arith.constant 0 : index
    %920 = vector.load %arg2[%c0_359, %919, %c0_360, %c0_361] : memref<1x16x16x8xf32, #tpu.memory_space<vmem>>, vector<1x1x16x8xf32>
    %921 = vector.shape_cast %920 : vector<1x1x16x8xf32> to vector<16x8xf32>
    %c16_i32_362 = arith.constant 16 : i32
    %922 = arith.muli %arg1, %c16_i32_362 : i32
    %c9_i32 = arith.constant 9 : i32
    %923 = arith.addi %922, %c9_i32 : i32
    %c0_363 = arith.constant 0 : index
    %924 = arith.index_cast %923 : i32 to index
    %c0_364 = arith.constant 0 : index
    %c0_365 = arith.constant 0 : index
    %925 = vector.load %arg2[%c0_363, %924, %c0_364, %c0_365] : memref<1x16x16x8xf32, #tpu.memory_space<vmem>>, vector<1x1x16x8xf32>
    %926 = vector.shape_cast %925 : vector<1x1x16x8xf32> to vector<16x8xf32>
    %c16_i32_366 = arith.constant 16 : i32
    %927 = arith.muli %arg1, %c16_i32_366 : i32
    %c10_i32 = arith.constant 10 : i32
    %928 = arith.addi %927, %c10_i32 : i32
    %c0_367 = arith.constant 0 : index
    %929 = arith.index_cast %928 : i32 to index
    %c0_368 = arith.constant 0 : index
    %c0_369 = arith.constant 0 : index
    %930 = vector.load %arg2[%c0_367, %929, %c0_368, %c0_369] : memref<1x16x16x8xf32, #tpu.memory_space<vmem>>, vector<1x1x16x8xf32>
    %931 = vector.shape_cast %930 : vector<1x1x16x8xf32> to vector<16x8xf32>
    %c16_i32_370 = arith.constant 16 : i32
    %932 = arith.muli %arg1, %c16_i32_370 : i32
    %c11_i32 = arith.constant 11 : i32
    %933 = arith.addi %932, %c11_i32 : i32
    %c0_371 = arith.constant 0 : index
    %934 = arith.index_cast %933 : i32 to index
    %c0_372 = arith.constant 0 : index
    %c0_373 = arith.constant 0 : index
    %935 = vector.load %arg2[%c0_371, %934, %c0_372, %c0_373] : memref<1x16x16x8xf32, #tpu.memory_space<vmem>>, vector<1x1x16x8xf32>
    %936 = vector.shape_cast %935 : vector<1x1x16x8xf32> to vector<16x8xf32>
    %c16_i32_374 = arith.constant 16 : i32
    %937 = arith.muli %arg1, %c16_i32_374 : i32
    %c12_i32 = arith.constant 12 : i32
    %938 = arith.addi %937, %c12_i32 : i32
    %c0_375 = arith.constant 0 : index
    %939 = arith.index_cast %938 : i32 to index
    %c0_376 = arith.constant 0 : index
    %c0_377 = arith.constant 0 : index
    %940 = vector.load %arg2[%c0_375, %939, %c0_376, %c0_377] : memref<1x16x16x8xf32, #tpu.memory_space<vmem>>, vector<1x1x16x8xf32>
    %941 = vector.shape_cast %940 : vector<1x1x16x8xf32> to vector<16x8xf32>
    %c16_i32_378 = arith.constant 16 : i32
    %942 = arith.muli %arg1, %c16_i32_378 : i32
    %c13_i32 = arith.constant 13 : i32
    %943 = arith.addi %942, %c13_i32 : i32
    %c0_379 = arith.constant 0 : index
    %944 = arith.index_cast %943 : i32 to index
    %c0_380 = arith.constant 0 : index
    %c0_381 = arith.constant 0 : index
    %945 = vector.load %arg2[%c0_379, %944, %c0_380, %c0_381] : memref<1x16x16x8xf32, #tpu.memory_space<vmem>>, vector<1x1x16x8xf32>
    %946 = vector.shape_cast %945 : vector<1x1x16x8xf32> to vector<16x8xf32>
    %c16_i32_382 = arith.constant 16 : i32
    %947 = arith.muli %arg1, %c16_i32_382 : i32
    %c14_i32 = arith.constant 14 : i32
    %948 = arith.addi %947, %c14_i32 : i32
    %c0_383 = arith.constant 0 : index
    %949 = arith.index_cast %948 : i32 to index
    %c0_384 = arith.constant 0 : index
    %c0_385 = arith.constant 0 : index
    %950 = vector.load %arg2[%c0_383, %949, %c0_384, %c0_385] : memref<1x16x16x8xf32, #tpu.memory_space<vmem>>, vector<1x1x16x8xf32>
    %951 = vector.shape_cast %950 : vector<1x1x16x8xf32> to vector<16x8xf32>
    %c16_i32_386 = arith.constant 16 : i32
    %952 = arith.muli %arg1, %c16_i32_386 : i32
    %c15_i32 = arith.constant 15 : i32
    %953 = arith.addi %952, %c15_i32 : i32
    %c0_387 = arith.constant 0 : index
    %954 = arith.index_cast %953 : i32 to index
    %c0_388 = arith.constant 0 : index
    %c0_389 = arith.constant 0 : index
    %955 = vector.load %arg2[%c0_387, %954, %c0_388, %c0_389] : memref<1x16x16x8xf32, #tpu.memory_space<vmem>>, vector<1x1x16x8xf32>
    %956 = vector.shape_cast %955 : vector<1x1x16x8xf32> to vector<16x8xf32>
    %957 = tpu.concatenate %881, %886, %891, %896, %901, %906, %911, %916, %921, %926, %931, %936, %941, %946, %951, %956 in 0 : vector<16x8xf32>, vector<16x8xf32>, vector<16x8xf32>, vector<16x8xf32>, vector<16x8xf32>, vector<16x8xf32>, vector<16x8xf32>, vector<16x8xf32>, vector<16x8xf32>, vector<16x8xf32>, vector<16x8xf32>, vector<16x8xf32>, vector<16x8xf32>, vector<16x8xf32>, vector<16x8xf32>, vector<16x8xf32> -> vector<256x8xf32>
    %c0_390 = arith.constant 0 : index
    %c0_391 = arith.constant 0 : index
    %958 = vector.load %arg10[%c0_390, %c0_391] : memref<8x128xf32, #tpu.memory_space<vmem>>, vector<8x128xf32>
    %cst_392 = arith.constant dense<0.000000e+00> : vector<256x128xf32>
    %959 = tpu.matmul %957, %958, %cst_392 {dimension_numbers = #tpu.dot_dimension_numbers<[1], [0], [0], [1], [0, 0, 1, 1], [], []>} : vector<256x8xf32>, vector<8x128xf32>, vector<256x128xf32> -> vector<256x128xf32>
    %960 = arith.addf %876, %959 : vector<256x128xf32>
    %c0_393 = arith.constant 0 : index
    %c0_394 = arith.constant 0 : index
    %c0_395 = arith.constant 0 : index
    %961 = vector.load %arg11[%c0_393, %c0_394, %c0_395] : memref<1x256x128xf32, #tpu.memory_space<vmem>>, vector<1x256x128xf32>
    %962 = vector.shape_cast %961 : vector<1x256x128xf32> to vector<256x128xf32>
    %963 = vector.shape_cast %960 : vector<256x128xf32> to vector<1x256x128xf32>
    tpu.vector_store %arg11[%c0_393, %c0_394, %c0_395], %963 {strides = array<i32>} : memref<1x256x128xf32, #tpu.memory_space<vmem>>, vector<1x256x128xf32>,
    return
  }
  func.func @transform_0(%arg0: i32, %arg1: i32) -> (i32, i32, i32, i32) {
    %c0_i32 = arith.constant 0 : i32
    %c0_i32_0 = arith.constant 0 : i32
    %c0_i32_1 = arith.constant 0 : i32
    %c0_i32_2 = arith.constant 0 : i32
    return %arg0, %c0_i32, %c0_i32_0, %c0_i32_1 : i32, i32, i32, i32
  }
  func.func @transform_1(%arg0: i32, %arg1: i32) -> (i32, i32) {
    %c0_i32 = arith.constant 0 : i32
    %c0_i32_0 = arith.constant 0 : i32
    %c0_i32_1 = arith.constant 0 : i32
    return %c0_i32, %c0_i32_0 : i32, i32
  }
  func.func @transform_2(%arg0: i32, %arg1: i32) -> (i32, i32) {
    %c0_i32 = arith.constant 0 : i32
    %c0_i32_0 = arith.constant 0 : i32
    %c0_i32_1 = arith.constant 0 : i32
    return %c0_i32, %c0_i32_0 : i32, i32
  }
  func.func @transform_3(%arg0: i32, %arg1: i32) -> (i32, i32) {
    %c0_i32 = arith.constant 0 : i32
    %c0_i32_0 = arith.constant 0 : i32
    %c0_i32_1 = arith.constant 0 : i32
    return %c0_i32, %c0_i32_0 : i32, i32
  }
  func.func @transform_4(%arg0: i32, %arg1: i32) -> (i32, i32) {
    %c0_i32 = arith.constant 0 : i32
    %c0_i32_0 = arith.constant 0 : i32
    %c0_i32_1 = arith.constant 0 : i32
    return %c0_i32, %c0_i32_0 : i32, i32
  }
  func.func @transform_5(%arg0: i32, %arg1: i32) -> (i32, i32) {
    %c0_i32 = arith.constant 0 : i32
    %c0_i32_0 = arith.constant 0 : i32
    %c0_i32_1 = arith.constant 0 : i32
    return %c0_i32, %c0_i32_0 : i32, i32
  }
  func.func @transform_6(%arg0: i32, %arg1: i32) -> (i32, i32) {
    %c0_i32 = arith.constant 0 : i32
    %c0_i32_0 = arith.constant 0 : i32
    %c0_i32_1 = arith.constant 0 : i32
    return %c0_i32, %c0_i32_0 : i32, i32
  }
  func.func @transform_7(%arg0: i32, %arg1: i32) -> (i32, i32) {
    %c0_i32 = arith.constant 0 : i32
    %c0_i32_0 = arith.constant 0 : i32
    %c0_i32_1 = arith.constant 0 : i32
    return %c0_i32, %c0_i32_0 : i32, i32
  }
  func.func @transform_8(%arg0: i32, %arg1: i32) -> (i32, i32) {
    %c0_i32 = arith.constant 0 : i32
    %c0_i32_0 = arith.constant 0 : i32
    %c0_i32_1 = arith.constant 0 : i32
    return %c0_i32, %c0_i32_0 : i32, i32
  }
  func.func @transform_9(%arg0: i32, %arg1: i32) -> (i32, i32, i32) {
    %c0_i32 = arith.constant 0 : i32
    %c0_i32_0 = arith.constant 0 : i32
    return %arg0, %arg1, %c0_i32 : i32, i32, i32
  }
}

</mosaic_0001>

<llo_original>
// kernel: inverted_residual_forward.1
$region0: #{inverted_residual_forward.1}
  #allocation0 [shape = 'u32[]', space=smem, size = 0x4, offset = 0x4, fixed_abs, tag = 'smem constant byte address 0x4 - core index']
  #allocation1 [shape = 'u32[72,128]{1,0:T(1,128)}', space=vmem, size = 0x9000, scoped, tag = 'internal scratch']
  #allocation2 [shape = 'f32[432,8]{1,0:T(8,128)}', space=vmem, size = 0x36000, scoped, tag = 'scratch operand']
  #allocation3 [shape = 'f32[432,128]{1,0:T(8,128)}', space=vmem, size = 0x36000, scoped, tag = 'scratch operand']
  #allocation4 [shape = 'f32[256,128]{1,0:T(8,128)}', space=vmem, size = 0x20000, scoped, tag = 'scratch operand']
  %s0 = inlined_call_operand.vmem [shape: f32[2,16,16,8], index: 0, kind: input, shape index: {}]
  %s1 = inlined_call_operand.vmem [shape: f32[432,1], index: 1, kind: input, shape index: {}]
  %s2 = inlined_call_operand.vmem [shape: f32[8,128], index: 2, kind: input, shape index: {}]
  %s3 = inlined_call_operand.vmem [shape: f32[1,128], index: 3, kind: input, shape index: {}]
  %s4 = inlined_call_operand.vmem [shape: f32[9,128], index: 4, kind: input, shape index: {}]
  %s5 = inlined_call_operand.vmem [shape: f32[1,128], index: 5, kind: input, shape index: {}]
  %s6 = inlined_call_operand.vmem [shape: f32[128,128], index: 6, kind: input, shape index: {}]
  %s7 = inlined_call_operand.vmem [shape: f32[1,128], index: 7, kind: input, shape index: {}]
  %s8 = inlined_call_operand.vmem [shape: f32[8,128], index: 8, kind: input, shape index: {}]
  %s9 = inlined_call_operand.vmem [shape: f32[2,256,128], index: 9, kind: output, shape index: {}]
  %s10 = sld [smem:[#allocation0]]
  $region73: #{inverted_residual_forward.1} parent=0
    _
  %s12 = ssub.s32 1, %s10
  %s13 = scalar_select 0, %s12, %s10
  loop: start=0, step=1, limit=4
  $region2: #{inverted_residual_forward.1} parent=0 // loop_pre_header
    _
  $region3: #{inverted_residual_forward.1} parent=0 // loop_header
    %s15 = sphi 0, %s19
    %p16 = scmp.ge.s32.totalorder %s15, 4
    %s22 = sphi 0, %s34
    %s23 = sphi 0, %s30
    %s24 = sphi 0, %s22
    %s25 = sphi 0, %s23
    %s26 = sphi 0, %s24
    %s27 = sphi 0, %s25
    %s37 = sphi 0, %s39
    %s40 = sphi 0, %s37
    %s41 = sphi 0, %s40
    %s57 = sphi 0, %s41
    %s61 = sphi 0, %s61
    %s63 = sphi 0, %s61
    %s64 = sphi 0, %s63
    %s78 = sphi 0, %s64
    %s82 = sphi 0, %s82
    %s84 = sphi 0, %s82
    %s85 = sphi 0, %s84
    %s99 = sphi 0, %s85
    %s103 = sphi 0, %s103
    %s105 = sphi 0, %s103
    %s106 = sphi 0, %s105
    %s120 = sphi 0, %s106
    %s124 = sphi 0, %s124
    %s126 = sphi 0, %s124
    %s127 = sphi 0, %s126
    %s141 = sphi 0, %s127
    %s145 = sphi 0, %s145
    %s147 = sphi 0, %s145
    %s148 = sphi 0, %s147
    %s162 = sphi 0, %s148
    %s166 = sphi 0, %s166
    %s168 = sphi 0, %s166
    %s169 = sphi 0, %s168
    %s183 = sphi 0, %s169
    %s187 = sphi 0, %s187
    %s189 = sphi 0, %s187
    %s190 = sphi 0, %s189
    %s204 = sphi 0, %s190
    %s208 = sphi 0, %s208
    %s210 = sphi 0, %s208
    %s211 = sphi 0, %s210
    %s225 = sphi 0, %s211
    %s233 = sphi 0, %s235
    %s236 = sphi 0, %s233
    %s237 = sphi 0, %s236
    %s253 = sphi 0, %s237
  $region4: #{inverted_residual_forward.1} parent=0 // loop_header_branch
    %18 = sbr.rel (%p16) target = $region8
  $region5: #{inverted_residual_forward.1} parent=0 // loop_body
    %s20 = ssub.s32 %s15, 1
    %s21 = ssub.s32 %s15, 2
    %s28 = sadd.s32 1, %s23
    %p29 = scmp.ge.s32.totalorder %s28, 1
    %s30 = scalar_select %p29, 0, %s28
    %s31 = sadd.s32 1, %s22
    %s32 = scalar_select %p29, %s31, %s22
    %p33 = scmp.ge.s32.totalorder %s32, 2
    %s34 = scalar_select %p33, 0, %s32
    %s35 = ssub.s32 %s22, %s34
    %p36 = scmp.eq.s32.totalorder %s35, 0
    %s38 = sadd.s32 %s37, 1
    %s39 = scalar_select %p36, %s37, %s38
    %p42 = pneg %p36
    %p43 = scmp.eq.s32.totalorder %s15, 1
    %p44 = por %p42, %p43
    %p45 = scmp.ne.s32.totalorder %s37, %s40
    %p46 = scmp.eq.s32.totalorder %s15, 0
    %p47 = por %p45, %p46
    %p48 = scmp.ne.s32.totalorder %s37, %s40
    %p49 = scmp.eq.s32.totalorder %s20, 1
    %p50 = por %p48, %p49
    %p51 = scmp.ne.s32.totalorder %s40, %s41
    %p52 = scmp.eq.s32.totalorder %s20, 0
    %p53 = por %p51, %p52
    %p54 = scmp.ne.s32.totalorder %s40, %s41
    %p55 = scmp.eq.s32.totalorder %s21, 1
    %p56 = por %p54, %p55
    %p58 = scmp.ne.s32.totalorder %s41, %s57
    %p59 = scmp.eq.s32.totalorder %s21, 0
    %p60 = por %p58, %p59
    %s62 = sadd.s32 %s61, 1
    %p65 = scmp.eq.s32.totalorder %s15, 1
    %p66 = scmp.ne.s32.totalorder %s61, %s63
    %p67 = scmp.eq.s32.totalorder %s15, 0
    %p68 = por %p66, %p67
    %p69 = scmp.ne.s32.totalorder %s61, %s63
    %p70 = scmp.eq.s32.totalorder %s20, 1
    %p71 = por %p69, %p70
    %p72 = scmp.ne.s32.totalorder %s63, %s64
    %p73 = scmp.eq.s32.totalorder %s20, 0
    %p74 = por %p72, %p73
    %p75 = scmp.ne.s32.totalorder %s63, %s64
    %p76 = scmp.eq.s32.totalorder %s21, 1
    %p77 = por %p75, %p76
    %p79 = scmp.ne.s32.totalorder %s64, %s78
    %p80 = scmp.eq.s32.totalorder %s21, 0
    %p81 = por %p79, %p80
    %s83 = sadd.s32 %s82, 1
    %p86 = scmp.eq.s32.totalorder %s15, 1
    %p87 = scmp.ne.s32.totalorder %s82, %s84
    %p88 = scmp.eq.s32.totalorder %s15, 0
    %p89 = por %p87, %p88
    %p90 = scmp.ne.s32.totalorder %s82, %s84
    %p91 = scmp.eq.s32.totalorder %s20, 1
    %p92 = por %p90, %p91
    %p93 = scmp.ne.s32.totalorder %s84, %s85
    %p94 = scmp.eq.s32.totalorder %s20, 0
    %p95 = por %p93, %p94
    %p96 = scmp.ne.s32.totalorder %s84, %s85
    %p97 = scmp.eq.s32.totalorder %s21, 1
    %p98 = por %p96, %p97
    %p100 = scmp.ne.s32.totalorder %s85, %s99
    %p101 = scmp.eq.s32.totalorder %s21, 0
    %p102 = por %p100, %p101
    %s104 = sadd.s32 %s103, 1
    %p107 = scmp.eq.s32.totalorder %s15, 1
    %p108 = scmp.ne.s32.totalorder %s103, %s105
    %p109 = scmp.eq.s32.totalorder %s15, 0
    %p110 = por %p108, %p109
    %p111 = scmp.ne.s32.totalorder %s103, %s105
    %p112 = scmp.eq.s32.totalorder %s20, 1
    %p113 = por %p111, %p112
    %p114 = scmp.ne.s32.totalorder %s105, %s106
    %p115 = scmp.eq.s32.totalorder %s20, 0
    %p116 = por %p114, %p115
    %p117 = scmp.ne.s32.totalorder %s105, %s106
    %p118 = scmp.eq.s32.totalorder %s21, 1
    %p119 = por %p117, %p118
    %p121 = scmp.ne.s32.totalorder %s106, %s120
    %p122 = scmp.eq.s32.totalorder %s21, 0
    %p123 = por %p121, %p122
    %s125 = sadd.s32 %s124, 1
    %p128 = scmp.eq.s32.totalorder %s15, 1
    %p129 = scmp.ne.s32.totalorder %s124, %s126
    %p130 = scmp.eq.s32.totalorder %s15, 0
    %p131 = por %p129, %p130
    %p132 = scmp.ne.s32.totalorder %s124, %s126
    %p133 = scmp.eq.s32.totalorder %s20, 1
    %p134 = por %p132, %p133
    %p135 = scmp.ne.s32.totalorder %s126, %s127
    %p136 = scmp.eq.s32.totalorder %s20, 0
    %p137 = por %p135, %p136
    %p138 = scmp.ne.s32.totalorder %s126, %s127
    %p139 = scmp.eq.s32.totalorder %s21, 1
    %p140 = por %p138, %p139
    %p142 = scmp.ne.s32.totalorder %s127, %s141
    %p143 = scmp.eq.s32.totalorder %s21, 0
    %p144 = por %p142, %p143
    %s146 = sadd.s32 %s145, 1
    %p149 = scmp.eq.s32.totalorder %s15, 1
    %p150 = scmp.ne.s32.totalorder %s145, %s147
    %p151 = scmp.eq.s32.totalorder %s15, 0
    %p152 = por %p150, %p151
    %p153 = scmp.ne.s32.totalorder %s145, %s147
    %p154 = scmp.eq.s32.totalorder %s20, 1
    %p155 = por %p153, %p154
    %p156 = scmp.ne.s32.totalorder %s147, %s148
    %p157 = scmp.eq.s32.totalorder %s20, 0
    %p158 = por %p156, %p157
    %p159 = scmp.ne.s32.totalorder %s147, %s148
    %p160 = scmp.eq.s32.totalorder %s21, 1
    %p161 = por %p159, %p160
    %p163 = scmp.ne.s32.totalorder %s148, %s162
    %p164 = scmp.eq.s32.totalorder %s21, 0
    %p165 = por %p163, %p164
    %s167 = sadd.s32 %s166, 1
    %p170 = scmp.eq.s32.totalorder %s15, 1
    %p171 = scmp.ne.s32.totalorder %s166, %s168
    %p172 = scmp.eq.s32.totalorder %s15, 0
    %p173 = por %p171, %p172
    %p174 = scmp.ne.s32.totalorder %s166, %s168
    %p175 = scmp.eq.s32.totalorder %s20, 1
    %p176 = por %p174, %p175
    %p177 = scmp.ne.s32.totalorder %s168, %s169
    %p178 = scmp.eq.s32.totalorder %s20, 0
    %p179 = por %p177, %p178
    %p180 = scmp.ne.s32.totalorder %s168, %s169
    %p181 = scmp.eq.s32.totalorder %s21, 1
    %p182 = por %p180, %p181
    %p184 = scmp.ne.s32.totalorder %s169, %s183
    %p185 = scmp.eq.s32.totalorder %s21, 0
    %p186 = por %p184, %p185
    %s188 = sadd.s32 %s187, 1
    %p191 = scmp.eq.s32.totalorder %s15, 1
    %p192 = scmp.ne.s32.totalorder %s187, %s189
    %p193 = scmp.eq.s32.totalorder %s15, 0
    %p194 = por %p192, %p193
    %p195 = scmp.ne.s32.totalorder %s187, %s189
    %p196 = scmp.eq.s32.totalorder %s20, 1
    %p197 = por %p195, %p196
    %p198 = scmp.ne.s32.totalorder %s189, %s190
    %p199 = scmp.eq.s32.totalorder %s20, 0
    %p200 = por %p198, %p199
    %p201 = scmp.ne.s32.totalorder %s189, %s190
    %p202 = scmp.eq.s32.totalorder %s21, 1
    %p203 = por %p201, %p202
    %p205 = scmp.ne.s32.totalorder %s190, %s204
    %p206 = scmp.eq.s32.totalorder %s21, 0
    %p207 = por %p205, %p206
    %s209 = sadd.s32 %s208, 1
    %p212 = scmp.eq.s32.totalorder %s15, 1
    %p213 = scmp.ne.s32.totalorder %s208, %s210
    %p214 = scmp.eq.s32.totalorder %s15, 0
    %p215 = por %p213, %p214
    %p216 = scmp.ne.s32.totalorder %s208, %s210
    %p217 = scmp.eq.s32.totalorder %s20, 1
    %p218 = por %p216, %p217
    %p219 = scmp.ne.s32.totalorder %s210, %s211
    %p220 = scmp.eq.s32.totalorder %s20, 0
    %p221 = por %p219, %p220
    %p222 = scmp.ne.s32.totalorder %s210, %s211
    %p223 = scmp.eq.s32.totalorder %s21, 1
    %p224 = por %p222, %p223
    %p226 = scmp.ne.s32.totalorder %s211, %s225
    %p227 = scmp.eq.s32.totalorder %s21, 0
    %p228 = por %p226, %p227
    %s229 = ssub.s32 %s22, %s34
    %s230 = ssub.s32 %s23, %s30
    %s231 = sor.u32 %s229, %s230
    %p232 = scmp.eq.s32.totalorder %s231, 0
    %s234 = sadd.s32 %s233, 1
    %s235 = scalar_select %p232, %s233, %s234
    %p238 = pneg %p232
    %p239 = scmp.eq.s32.totalorder %s15, 1
    %p240 = por %p238, %p239
    %p241 = scmp.ne.s32.totalorder %s233, %s236
    %p242 = scmp.eq.s32.totalorder %s15, 0
    %p243 = por %p241, %p242
    %p244 = scmp.ne.s32.totalorder %s233, %s236
    %p245 = scmp.eq.s32.totalorder %s20, 1
    %p246 = por %p244, %p245
    %p247 = scmp.ne.s32.totalorder %s236, %s237
    %p248 = scmp.eq.s32.totalorder %s20, 0
    %p249 = por %p247, %p248
    %p250 = scmp.ne.s32.totalorder %s236, %s237
    %p251 = scmp.eq.s32.totalorder %s21, 1
    %p252 = por %p250, %p251
    %p254 = scmp.ne.s32.totalorder %s237, %s253
    %p255 = scmp.eq.s32.totalorder %s21, 0
    %p256 = por %p254, %p255
    %p257 = scmp.le.s32.totalorder 1, %s15
    %p258 = scmp.lt.s32.totalorder %s15, 3
    %p259 = pnand %p257, %p258
    %p260 = pneg %p259
    // Predicated region
    $region9: #{inverted_residual_forward.1} parent=5 // pred_check
      _
    $region10: #{inverted_residual_forward.1} parent=5 // pred_check_branch
      %262 = sbr.rel (%p259) target = $region12
    $region11: #{inverted_residual_forward.1} parent=5 // pred_region
      %s263 = ssub.s32 %s15, 1
      // Predicated region
      $region13: #{inverted_residual_forward.1} parent=11 // pred_check
        %p264 = pneg %p74
      $region14: #{inverted_residual_forward.1} parent=11 // pred_check_branch
        %266 = sbr.rel (%p264) target = $region16
      $region15: #{inverted_residual_forward.1} parent=11 // pred_region
        _
      $region16: #{inverted_residual_forward.1} parent=11 // pred_fallthru
        _
      // Predicated region
      $region17: #{inverted_residual_forward.1} parent=11 // pred_check
        %p267 = pneg %p95
      $region18: #{inverted_residual_forward.1} parent=11 // pred_check_branch
        %269 = sbr.rel (%p267) target = $region20
      $region19: #{inverted_residual_forward.1} parent=11 // pred_region
        _
      $region20: #{inverted_residual_forward.1} parent=11 // pred_fallthru
        _
      // Predicated region
      $region21: #{inverted_residual_forward.1} parent=11 // pred_check
        %p270 = pneg %p116
      $region22: #{inverted_residual_forward.1} parent=11 // pred_check_branch
        %272 = sbr.rel (%p270) target = $region24
      $region23: #{inverted_residual_forward.1} parent=11 // pred_region
        _
      $region24: #{inverted_residual_forward.1} parent=11 // pred_fallthru
        _
      // Predicated region
      $region25: #{inverted_residual_forward.1} parent=11 // pred_check
        %p273 = pneg %p137
      $region26: #{inverted_residual_forward.1} parent=11 // pred_check_branch
        %275 = sbr.rel (%p273) target = $region28
      $region27: #{inverted_residual_forward.1} parent=11 // pred_region
        _
      $region28: #{inverted_residual_forward.1} parent=11 // pred_fallthru
        _
      // Predicated region
      $region29: #{inverted_residual_forward.1} parent=11 // pred_check
        %p276 = pneg %p158
      $region30: #{inverted_residual_forward.1} parent=11 // pred_check_branch
        %278 = sbr.rel (%p276) target = $region32
      $region31: #{inverted_residual_forward.1} parent=11 // pred_region
        _
      $region32: #{inverted_residual_forward.1} parent=11 // pred_fallthru
        _
      // Predicated region
      $region33: #{inverted_residual_forward.1} parent=11 // pred_check
        %p279 = pneg %p179
      $region34: #{inverted_residual_forward.1} parent=11 // pred_check_branch
        %281 = sbr.rel (%p279) target = $region36
      $region35: #{inverted_residual_forward.1} parent=11 // pred_region
        _
      $region36: #{inverted_residual_forward.1} parent=11 // pred_fallthru
        _
      // Predicated region
      $region37: #{inverted_residual_forward.1} parent=11 // pred_check
        %p282 = pneg %p200
      $region38: #{inverted_residual_forward.1} parent=11 // pred_check_branch
        %284 = sbr.rel (%p282) target = $region40
      $region39: #{inverted_residual_forward.1} parent=11 // pred_region
        _
      $region40: #{inverted_residual_forward.1} parent=11 // pred_fallthru
        _
      // Predicated region
      $region41: #{inverted_residual_forward.1} parent=11 // pred_check
        %p285 = pneg %p221
      $region42: #{inverted_residual_forward.1} parent=11 // pred_check_branch
        %287 = sbr.rel (%p285) target = $region44
      $region43: #{inverted_residual_forward.1} parent=11 // pred_region
        _
      $region44: #{inverted_residual_forward.1} parent=11 // pred_fallthru
        _
    $region12: #{inverted_residual_forward.1} parent=5 // pred_fallthru
      _
    %p288 = scmp.lt.s32.totalorder %s15, 2
    // Predicated region
    $region45: #{inverted_residual_forward.1} parent=5 // pred_check
      %p289 = pneg %p288
    $region46: #{inverted_residual_forward.1} parent=5 // pred_check_branch
      %291 = sbr.rel (%p289) target = $region48
    $region47: #{inverted_residual_forward.1} parent=5 // pred_region
      // Predicated region
      $region49: #{inverted_residual_forward.1} parent=47 // pred_check
        %p292 = pneg %p47
      $region50: #{inverted_residual_forward.1} parent=47 // pred_check_branch
        %294 = sbr.rel (%p292) target = $region52
      $region51: #{inverted_residual_forward.1} parent=47 // pred_region
        %p295 = scmp.lt.s32.totalorder %s22, 1
        %s296 = scalar_select %p295, %s22, 1
        %s297 = smul.addr %s296, 32
        %s298 = smul.addr %s297, 8
        %s299 = scalar_lea.vmem %s0, %s298
      $region52: #{inverted_residual_forward.1} parent=47 // pred_fallthru
        _
    $region48: #{inverted_residual_forward.1} parent=5 // pred_fallthru
      _
    %p300 = scmp.le.s32.totalorder 1, %s15
    %p301 = scmp.lt.s32.totalorder %s15, 3
    %p302 = pnand %p300, %p301
    %p303 = pneg %p302
    // Predicated region
    $region53: #{inverted_residual_forward.1} parent=5 // pred_check
      _
    $region54: #{inverted_residual_forward.1} parent=5 // pred_check_branch
      %305 = sbr.rel (%p302) target = $region56
    $region55: #{inverted_residual_forward.1} parent=5 // pred_region
      %s306 = ssub.s32 %s15, 1
      %p307 = scmp.lt.s32.totalorder %s24, 1
      %s308 = scalar_select %p307, %s24, 1
      %s309 = smul.addr %s308, 32
      %s310 = smul.addr %s309, 8
      %s311 = scalar_lea.vmem %s0, %s310
      %p312 = pneg %p53
      %p313 = pneg %p50
      %p314 = pneg %p74
      %p315 = pneg %p71
      %p316 = pneg %p95
      %p317 = pneg %p92
      %p318 = pneg %p116
      %p319 = pneg %p113
      %p320 = pneg %p137
      %p321 = pneg %p134
      %p322 = pneg %p158
      %p323 = pneg %p155
      %p324 = pneg %p179
      %p325 = pneg %p176
      %p326 = pneg %p200
      %p327 = pneg %p197
      %p328 = pneg %p221
      %p329 = pneg %p218
      %p330 = pneg %p249
      %p331 = pneg %p246
      %s332 = smul.u32 32, %s25
      %p333 = scmp.lt.s32.totalorder %s24, 1
      %s334 = scalar_select %p333, %s24, 1
      %p335 = scmp.lt.s32.totalorder %s332, 31
      %s336 = scalar_select %p335, %s332, 31
      %s337 = smul.addr %s334, 32
      %s338 = sadd.s32 %s336, %s337
      %s339 = smul.addr %s338, 8
      %s340 = scalar_lea.vmem %s9, %s339
      %p341 = scmp.lt.s32.totalorder %s24, 1
      %s342 = scalar_select %p341, %s24, 1
      %s343 = smul.addr %s342, 32
      %s344 = smul.addr %s343, 8
      %s345 = scalar_lea.vmem %s0, %s344
      %s346 = smul.u32 32, %s25
      %p347 = scmp.lt.s32.totalorder %s24, 1
      %s348 = scalar_select %p347, %s24, 1
      %p349 = scmp.lt.s32.totalorder %s346, 31
      %s350 = scalar_select %p349, %s346, 31
      %s351 = smul.addr %s348, 32
      %s352 = sadd.s32 %s350, %s351
      %s353 = smul.addr %s352, 8
      %s354 = scalar_lea.vmem %s9, %s353
      %s355 = smul.u32 32, %s25
      %p356 = scmp.eq.s32.totalorder %s25, 0
      // Predicated region
      $region57: #{inverted_residual_forward.1} parent=55 // pred_check
        %p357 = pneg %p356
      $region58: #{inverted_residual_forward.1} parent=55 // pred_check_branch
        %359 = sbr.rel (%p357) target = $region60
      $region59: #{inverted_residual_forward.1} parent=55 // pred_region
        %vm360 = vcmask 64512
        %361 = vst.msk [vmem:[#allocation2] sm:$0xff] %vm360, 0.0
        %362 = vst.msk [vmem:[#allocation2 + $0x8] sm:$0xff] %vm360, 0.0
        %363 = vst.msk [vmem:[#allocation2 + $0x10] sm:$0xff] %vm360, 0.0
        %vm364 = vcmask 57344
        %365 = vst.msk [vmem:[#allocation2 + $0x18] sm:$0x1] %vm364, 0.0
        %v366 = vld [vmem:[%s345] sm:$0xff]
        %v367 = vld [vmem:[%s345 + $0x8] sm:$0xff]
        %368 = vst.msk [vmem:[#allocation2 + $0x19] sm:$0xff] %vm360, %v366
        %369 = vst.msk [vmem:[#allocation2 + $0x21] sm:$0xff] %vm360, %v367
        %370 = vst.msk [vmem:[#allocation2 + $0x29] sm:$0xff] %vm360, 0.0
        %s371 = scalar_lea.vmem %s345, 16
        %v372 = vld [vmem:[%s371] sm:$0xff]
        %v373 = vld [vmem:[%s371 + $0x8] sm:$0xff]
        %374 = vst.msk [vmem:[#allocation2 + $0x31] sm:$0xff] %vm360, %v372
        %375 = vst.msk [vmem:[#allocation2 + $0x39] sm:$0xff] %vm360, %v373
        %376 = vst.msk [vmem:[#allocation2 + $0x41] sm:$0xff] %vm360, 0.0
        %s377 = scalar_lea.vmem %s345, 32
        %v378 = vld [vmem:[%s377] sm:$0xff]
        %v379 = vld [vmem:[%s377 + $0x8] sm:$0xff]
        %380 = vst.msk [vmem:[#allocation2 + $0x49] sm:$0xff] %vm360, %v378
        %381 = vst.msk [vmem:[#allocation2 + $0x51] sm:$0xff] %vm360, %v379
        %382 = vst.msk [vmem:[#allocation2 + $0x59] sm:$0xff] %vm360, 0.0
        %s383 = scalar_lea.vmem %s345, 48
        %v384 = vld [vmem:[%s383] sm:$0xff]
        %v385 = vld [vmem:[%s383 + $0x8] sm:$0xff]
        %386 = vst.msk [vmem:[#allocation2 + $0x61] sm:$0xff] %vm360, %v384
        %387 = vst.msk [vmem:[#allocation2 + $0x69] sm:$0xff] %vm360, %v385
        %388 = vst.msk [vmem:[#allocation2 + $0x71] sm:$0xff] %vm360, 0.0
        %s389 = scalar_lea.vmem %s345, 64
        %v390 = vld [vmem:[%s389] sm:$0xff]
        %v391 = vld [vmem:[%s389 + $0x8] sm:$0xff]
        %392 = vst.msk [vmem:[#allocation2 + $0x79] sm:$0xff] %vm360, %v390
        %393 = vst.msk [vmem:[#allocation2 + $0x81] sm:$0xff] %vm360, %v391
        %394 = vst.msk [vmem:[#allocation2 + $0x89] sm:$0xff] %vm360, 0.0
        %s395 = scalar_lea.vmem %s345, 80
        %v396 = vld [vmem:[%s395] sm:$0xff]
        %v397 = vld [vmem:[%s395 + $0x8] sm:$0xff]
        %398 = vst.msk [vmem:[#allocation2 + $0x91] sm:$0xff] %vm360, %v396
        %399 = vst.msk [vmem:[#allocation2 + $0x99] sm:$0xff] %vm360, %v397
        %400 = vst.msk [vmem:[#allocation2 + $0xa1] sm:$0xff] %vm360, 0.0
        %s401 = scalar_lea.vmem %s345, 96
        %v402 = vld [vmem:[%s401] sm:$0xff]
        %v403 = vld [vmem:[%s401 + $0x8] sm:$0xff]
        %404 = vst.msk [vmem:[#allocation2 + $0xa9] sm:$0xff] %vm360, %v402
        %405 = vst.msk [vmem:[#allocation2 + $0xb1] sm:$0xff] %vm360, %v403
        %406 = vst.msk [vmem:[#allocation2 + $0xb9] sm:$0xff] %vm360, 0.0
        %s407 = scalar_lea.vmem %s345, 112
        %v408 = vld [vmem:[%s407] sm:$0xff]
        %v409 = vld [vmem:[%s407 + $0x8] sm:$0xff]
        %410 = vst.msk [vmem:[#allocation2 + $0xc1] sm:$0xff] %vm360, %v408
        %411 = vst.msk [vmem:[#allocation2 + $0xc9] sm:$0xff] %vm360, %v409
        %412 = vst.msk [vmem:[#allocation2 + $0xd1] sm:$0xff] %vm360, 0.0
        %s413 = scalar_lea.vmem %s345, 128
        %v414 = vld [vmem:[%s413] sm:$0xff]
        %v415 = vld [vmem:[%s413 + $0x8] sm:$0xff]
        %416 = vst.msk [vmem:[#allocation2 + $0xd9] sm:$0xff] %vm360, %v414
        %417 = vst.msk [vmem:[#allocation2 + $0xe1] sm:$0xff] %vm360, %v415
        %418 = vst.msk [vmem:[#allocation2 + $0xe9] sm:$0xff] %vm360, 0.0
        %s419 = scalar_lea.vmem %s345, 144
        %v420 = vld [vmem:[%s419] sm:$0xff]
        %v421 = vld [vmem:[%s419 + $0x8] sm:$0xff]
        %422 = vst.msk [vmem:[#allocation2 + $0xf1] sm:$0xff] %vm360, %v420
        %423 = vst.msk [vmem:[#allocation2 + $0xf9] sm:$0xff] %vm360, %v421
        %424 = vst.msk [vmem:[#allocation2 + $0x101] sm:$0xff] %vm360, 0.0
        %s425 = scalar_lea.vmem %s345, 160
        %v426 = vld [vmem:[%s425] sm:$0xff]
        %v427 = vld [vmem:[%s425 + $0x8] sm:$0xff]
        %428 = vst.msk [vmem:[#allocation2 + $0x109] sm:$0xff] %vm360, %v426
        %429 = vst.msk [vmem:[#allocation2 + $0x111] sm:$0xff] %vm360, %v427
        %430 = vst.msk [vmem:[#allocation2 + $0x119] sm:$0xff] %vm360, 0.0
        %s431 = scalar_lea.vmem %s345, 176
        %v432 = vld [vmem:[%s431] sm:$0xff]
        %v433 = vld [vmem:[%s431 + $0x8] sm:$0xff]
        %434 = vst.msk [vmem:[#allocation2 + $0x121] sm:$0xff] %vm360, %v432
        %435 = vst.msk [vmem:[#allocation2 + $0x129] sm:$0xff] %vm360, %v433
        %436 = vst.msk [vmem:[#allocation2 + $0x131] sm:$0xff] %vm360, 0.0
        %s437 = scalar_lea.vmem %s345, 192
        %v438 = vld [vmem:[%s437] sm:$0xff]
        %v439 = vld [vmem:[%s437 + $0x8] sm:$0xff]
        %440 = vst.msk [vmem:[#allocation2 + $0x139] sm:$0xff] %vm360, %v438
        %441 = vst.msk [vmem:[#allocation2 + $0x141] sm:$0xff] %vm360, %v439
        %442 = vst.msk [vmem:[#allocation2 + $0x149] sm:$0xff] %vm360, 0.0
        %s443 = scalar_lea.vmem %s345, 208
        %v444 = vld [vmem:[%s443] sm:$0xff]
        %v445 = vld [vmem:[%s443 + $0x8] sm:$0xff]
        %446 = vst.msk [vmem:[#allocation2 + $0x151] sm:$0xff] %vm360, %v444
        %447 = vst.msk [vmem:[#allocation2 + $0x159] sm:$0xff] %vm360, %v445
        %448 = vst.msk [vmem:[#allocation2 + $0x161] sm:$0xff] %vm360, 0.0
        %s449 = scalar_lea.vmem %s345, 224
        %v450 = vld [vmem:[%s449] sm:$0xff]
        %v451 = vld [vmem:[%s449 + $0x8] sm:$0xff]
        %452 = vst.msk [vmem:[#allocation2 + $0x169] sm:$0xff] %vm360, %v450
        %453 = vst.msk [vmem:[#allocation2 + $0x171] sm:$0xff] %vm360, %v451
        %454 = vst.msk [vmem:[#allocation2 + $0x179] sm:$0xff] %vm360, 0.0
        %s455 = scalar_lea.vmem %s345, 240
        %v456 = vld [vmem:[%s455] sm:$0xff]
        %v457 = vld [vmem:[%s455 + $0x8] sm:$0xff]
        %458 = vst.msk [vmem:[#allocation2 + $0x181] sm:$0xff] %vm360, %v456
        %459 = vst.msk [vmem:[#allocation2 + $0x189] sm:$0xff] %vm360, %v457
        %460 = vst.msk [vmem:[#allocation2 + $0x191] sm:$0xff] %vm360, 0.0
        %461 = vst.msk [vmem:[#allocation2 + $0x199] sm:$0xff] %vm360, 0.0
        %462 = vst.msk [vmem:[#allocation2 + $0x1a1] sm:$0xff] %vm360, 0.0
        %vm463 = vcmask 63488
        %464 = vst.msk [vmem:[#allocation2 + $0x1a9] sm:$0x7f] %vm463, 0.0
      $region60: #{inverted_residual_forward.1} parent=55 // pred_fallthru
        _
      %s465 = smul.u32 %s25, 384
      %s466 = scalar_lea.vmem [#allocation2], %s465
      %v467 = vld [vmem:[%s466] sm:$0xff]
      %v468 = vld [vmem:[%s466 + $0x8] sm:$0xff]
      %v469 = vld [vmem:[%s466 + $0x10] sm:$0xff]
      %v470 = vld [vmem:[%s466 + $0x18] sm:$0xff]
      %v471 = vld [vmem:[%s466 + $0x20] sm:$0xff]
      %v472 = vld [vmem:[%s466 + $0x28] sm:$0xff]
      %v473 = vld [vmem:[%s466 + $0x30] sm:$0xff]
      %v474 = vld [vmem:[%s466 + $0x38] sm:$0xff]
      %v475 = vld [vmem:[%s466 + $0x40] sm:$0xff]
      %v476 = vld [vmem:[%s466 + $0x48] sm:$0xff]
      %v477 = vld [vmem:[%s466 + $0x50] sm:$0xff]
      %v478 = vld [vmem:[%s466 + $0x58] sm:$0xff]
      %v479 = vld [vmem:[%s466 + $0x60] sm:$0xff]
      %v480 = vld [vmem:[%s466 + $0x68] sm:$0xff]
      %v481 = vld [vmem:[%s466 + $0x70] sm:$0xff]
      %v482 = vld [vmem:[%s466 + $0x78] sm:$0xff]
      %v483 = vld [vmem:[%s466 + $0x80] sm:$0xff]
      %v484 = vld [vmem:[%s466 + $0x88] sm:$0xff]
      %v485 = vld [vmem:[%s466 + $0x90] sm:$0xff]
      %v486 = vld [vmem:[%s466 + $0x98] sm:$0xff]
      %v487 = vld [vmem:[%s466 + $0xa0] sm:$0xff]
      %v488 = vld [vmem:[%s466 + $0xa8] sm:$0xff]
      %v489 = vld [vmem:[%s466 + $0xb0] sm:$0xff]
      %v490 = vld [vmem:[%s466 + $0xb8] sm:$0xff]
      %v491 = vld [vmem:[%s466 + $0xc0] sm:$0xff]
      %v492 = vld [vmem:[%s466 + $0xc8] sm:$0xff]
      %v493 = vld [vmem:[%s466 + $0xd0] sm:$0xff]
      %v494 = vld [vmem:[%s466 + $0xd8] sm:$0xff]
      %v495 = vld [vmem:[%s466 + $0xe0] sm:$0xff]
      %v496 = vld [vmem:[%s466 + $0xe8] sm:$0xff]
      %v497 = vld [vmem:[%s466 + $0xf0] sm:$0xff]
      %v498 = vld [vmem:[%s466 + $0xf8] sm:$0xff]
      %v499 = vld [vmem:[%s466 + $0x100] sm:$0xff]
      %v500 = vld [vmem:[%s466 + $0x108] sm:$0xff]
      %v501 = vld [vmem:[%s466 + $0x110] sm:$0xff]
      %v502 = vld [vmem:[%s466 + $0x118] sm:$0xff]
      %v503 = vld [vmem:[%s466 + $0x120] sm:$0xff]
      %v504 = vld [vmem:[%s466 + $0x128] sm:$0xff]
      %v505 = vld [vmem:[%s466 + $0x130] sm:$0xff]
      %v506 = vld [vmem:[%s466 + $0x138] sm:$0xff]
      %v507 = vld [vmem:[%s466 + $0x140] sm:$0xff]
      %v508 = vld [vmem:[%s466 + $0x148] sm:$0xff]
      %v509 = vld [vmem:[%s466 + $0x150] sm:$0xff]
      %v510 = vld [vmem:[%s466 + $0x158] sm:$0xff]
      %v511 = vld [vmem:[%s466 + $0x160] sm:$0xff]
      %v512 = vld [vmem:[%s466 + $0x168] sm:$0xff]
      %v513 = vld [vmem:[%s466 + $0x170] sm:$0xff]
      %v514 = vld [vmem:[%s466 + $0x178] sm:$0xff]
      %v515 = vld [vmem:[%s466 + $0x180] sm:$0xff]
      %v516 = vld [vmem:[%s466 + $0x188] sm:$0xff]
      %v517 = vld [vmem:[%s466 + $0x190] sm:$0xff]
      %v518 = vld [vmem:[%s466 + $0x198] sm:$0xff]
      %v519 = vld [vmem:[%s466 + $0x1a0] sm:$0xff]
      %v520 = vld [vmem:[%s466 + $0x1a8] sm:$0xff]
      %v521 = vld [vmem:[%s2] sm:$0xff]
      %v522 = vld [vmem:[%s3] sm:$0x1]
      %v524 = vperm.slane %v522, 0
      %vm526 = vcmask 64512
      %v528 = vsel %vm526, %v467, 0
      %v531 = vsel %vm526, %v468, 0
      %v534 = vsel %vm526, %v469, 0
      %v537 = vsel %vm526, %v470, 0
      %v540 = vsel %vm526, %v471, 0
      %v543 = vsel %vm526, %v472, 0
      %v546 = vsel %vm526, %v473, 0
      %v549 = vsel %vm526, %v474, 0
      %v552 = vsel %vm526, %v475, 0
      %v555 = vsel %vm526, %v476, 0
      %v558 = vsel %vm526, %v477, 0
      %v561 = vsel %vm526, %v478, 0
      %v564 = vsel %vm526, %v479, 0
      %v567 = vsel %vm526, %v480, 0
      %v570 = vsel %vm526, %v481, 0
      %v573 = vsel %vm526, %v482, 0
      %v576 = vsel %vm526, %v483, 0
      %v579 = vsel %vm526, %v484, 0
      %v582 = vsel %vm526, %v485, 0
      %v585 = vsel %vm526, %v486, 0
      %v588 = vsel %vm526, %v487, 0
      %v591 = vsel %vm526, %v488, 0
      %v594 = vsel %vm526, %v489, 0
      %v597 = vsel %vm526, %v490, 0
      %v600 = vsel %vm526, %v491, 0
      %v603 = vsel %vm526, %v492, 0
      %v606 = vsel %vm526, %v493, 0
      %v609 = vsel %vm526, %v494, 0
      %v612 = vsel %vm526, %v495, 0
      %v615 = vsel %vm526, %v496, 0
      %v618 = vsel %vm526, %v497, 0
      %v621 = vsel %vm526, %v498, 0
      %v624 = vsel %vm526, %v499, 0
      %v627 = vsel %vm526, %v500, 0
      %v630 = vsel %vm526, %v501, 0
      %v633 = vsel %vm526, %v502, 0
      %v636 = vsel %vm526, %v503, 0
      %v639 = vsel %vm526, %v504, 0
      %v642 = vsel %vm526, %v505, 0
      %v645 = vsel %vm526, %v506, 0
      %v648 = vsel %vm526, %v507, 0
      %v651 = vsel %vm526, %v508, 0
      %v654 = vsel %vm526, %v509, 0
      %v657 = vsel %vm526, %v510, 0
      %v660 = vsel %vm526, %v511, 0
      %v663 = vsel %vm526, %v512, 0
      %v666 = vsel %vm526, %v513, 0
      %v669 = vsel %vm526, %v514, 0
      %v672 = vsel %vm526, %v515, 0
      %v675 = vsel %vm526, %v516, 0
      %v678 = vsel %vm526, %v517, 0
      %v681 = vsel %vm526, %v518, 0
      %v684 = vsel %vm526, %v519, 0
      %v687 = vsel %vm526, %v520, 0
      %689 = vmatpush.msra.mxu0 0.0
      %690 = vmatpush.msra.mxu0 0.0
      %691 = vmatpush.msra.mxu0 0.0
      %692 = vmatpush.msra.mxu0 0.0
      %693 = vmatpush.msra.mxu0 0.0
      %694 = vmatpush.msra.mxu0 0.0
      %695 = vmatpush.msra.mxu0 0.0
      %696 = vmatpush.msra.mxu0 0.0
      %697 = vmatpush.msra.mxu0 0.0
      %698 = vmatpush.msra.mxu0 0.0
      %699 = vmatpush.msra.mxu0 0.0
      %700 = vmatpush.msra.mxu0 0.0
      %701 = vmatpush.msra.mxu0 0.0
      %702 = vmatpush.msra.mxu0 0.0
      %703 = vmatpush.msra.mxu0 0.0
      %704 = vmatpush.msra.mxu0 %v521
      %705 = vmatmul.f32.gmra.mxu0 %v528
      %v706 = vpop.f32.mrf.mxu0
      %v707 = vadd.f32 %v524, %v706
      %708 = vmatmul.f32.gmra.mxu0 %v531
      %v709 = vpop.f32.mrf.mxu0
      %v710 = vadd.f32 %v524, %v709
      %711 = vmatmul.f32.gmra.mxu0 %v534
      %v712 = vpop.f32.mrf.mxu0
      %v713 = vadd.f32 %v524, %v712
      %714 = vmatmul.f32.gmra.mxu0 %v537
      %v715 = vpop.f32.mrf.mxu0
      %v716 = vadd.f32 %v524, %v715
      %717 = vmatmul.f32.gmra.mxu0 %v540
      %v718 = vpop.f32.mrf.mxu0
      %v719 = vadd.f32 %v524, %v718
      %720 = vmatmul.f32.gmra.mxu0 %v543
      %v721 = vpop.f32.mrf.mxu0
      %v722 = vadd.f32 %v524, %v721
      %723 = vmatmul.f32.gmra.mxu0 %v546
      %v724 = vpop.f32.mrf.mxu0
      %v725 = vadd.f32 %v524, %v724
      %726 = vmatmul.f32.gmra.mxu0 %v549
      %v727 = vpop.f32.mrf.mxu0
      %v728 = vadd.f32 %v524, %v727
      %729 = vmatmul.f32.gmra.mxu0 %v552
      %v730 = vpop.f32.mrf.mxu0
      %v731 = vadd.f32 %v524, %v730
      %732 = vmatmul.f32.gmra.mxu0 %v555
      %v733 = vpop.f32.mrf.mxu0
      %v734 = vadd.f32 %v524, %v733
      %735 = vmatmul.f32.gmra.mxu0 %v558
      %v736 = vpop.f32.mrf.mxu0
      %v737 = vadd.f32 %v524, %v736
      %738 = vmatmul.f32.gmra.mxu0 %v561
      %v739 = vpop.f32.mrf.mxu0
      %v740 = vadd.f32 %v524, %v739
      %741 = vmatmul.f32.gmra.mxu0 %v564
      %v742 = vpop.f32.mrf.mxu0
      %v743 = vadd.f32 %v524, %v742
      %744 = vmatmul.f32.gmra.mxu0 %v567
      %v745 = vpop.f32.mrf.mxu0
      %v746 = vadd.f32 %v524, %v745
      %747 = vmatmul.f32.gmra.mxu0 %v570
      %v748 = vpop.f32.mrf.mxu0
      %v749 = vadd.f32 %v524, %v748
      %750 = vmatmul.f32.gmra.mxu0 %v573
      %v751 = vpop.f32.mrf.mxu0
      %v752 = vadd.f32 %v524, %v751
      %753 = vmatmul.f32.gmra.mxu0 %v576
      %v754 = vpop.f32.mrf.mxu0
      %v755 = vadd.f32 %v524, %v754
      %756 = vmatmul.f32.gmra.mxu0 %v579
      %v757 = vpop.f32.mrf.mxu0
      %v758 = vadd.f32 %v524, %v757
      %759 = vmatmul.f32.gmra.mxu0 %v582
      %v760 = vpop.f32.mrf.mxu0
      %v761 = vadd.f32 %v524, %v760
      %762 = vmatmul.f32.gmra.mxu0 %v585
      %v763 = vpop.f32.mrf.mxu0
      %v764 = vadd.f32 %v524, %v763
      %765 = vmatmul.f32.gmra.mxu0 %v588
      %v766 = vpop.f32.mrf.mxu0
      %v767 = vadd.f32 %v524, %v766
      %768 = vmatmul.f32.gmra.mxu0 %v591
      %v769 = vpop.f32.mrf.mxu0
      %v770 = vadd.f32 %v524, %v769
      %771 = vmatmul.f32.gmra.mxu0 %v594
      %v772 = vpop.f32.mrf.mxu0
      %v773 = vadd.f32 %v524, %v772
      %774 = vmatmul.f32.gmra.mxu0 %v597
      %v775 = vpop.f32.mrf.mxu0
      %v776 = vadd.f32 %v524, %v775
      %777 = vmatmul.f32.gmra.mxu0 %v600
      %v778 = vpop.f32.mrf.mxu0
      %v779 = vadd.f32 %v524, %v778
      %780 = vmatmul.f32.gmra.mxu0 %v603
      %v781 = vpop.f32.mrf.mxu0
      %v782 = vadd.f32 %v524, %v781
      %783 = vmatmul.f32.gmra.mxu0 %v606
      %v784 = vpop.f32.mrf.mxu0
      %v785 = vadd.f32 %v524, %v784
      %786 = vmatmul.f32.gmra.mxu0 %v609
      %v787 = vpop.f32.mrf.mxu0
      %v788 = vadd.f32 %v524, %v787
      %789 = vmatmul.f32.gmra.mxu0 %v612
      %v790 = vpop.f32.mrf.mxu0
      %v791 = vadd.f32 %v524, %v790
      %792 = vmatmul.f32.gmra.mxu0 %v615
      %v793 = vpop.f32.mrf.mxu0
      %v794 = vadd.f32 %v524, %v793
      %795 = vmatmul.f32.gmra.mxu0 %v618
      %v796 = vpop.f32.mrf.mxu0
      %v797 = vadd.f32 %v524, %v796
      %798 = vmatmul.f32.gmra.mxu0 %v621
      %v799 = vpop.f32.mrf.mxu0
      %v800 = vadd.f32 %v524, %v799
      %801 = vmatmul.f32.gmra.mxu0 %v624
      %v802 = vpop.f32.mrf.mxu0
      %v803 = vadd.f32 %v524, %v802
      %804 = vmatmul.f32.gmra.mxu0 %v627
      %v805 = vpop.f32.mrf.mxu0
      %v806 = vadd.f32 %v524, %v805
      %807 = vmatmul.f32.gmra.mxu0 %v630
      %v808 = vpop.f32.mrf.mxu0
      %v809 = vadd.f32 %v524, %v808
      %810 = vmatmul.f32.gmra.mxu0 %v633
      %v811 = vpop.f32.mrf.mxu0
      %v812 = vadd.f32 %v524, %v811
      %813 = vmatmul.f32.gmra.mxu0 %v636
      %v814 = vpop.f32.mrf.mxu0
      %v815 = vadd.f32 %v524, %v814
      %816 = vmatmul.f32.gmra.mxu0 %v639
      %v817 = vpop.f32.mrf.mxu0
      %v818 = vadd.f32 %v524, %v817
      %819 = vmatmul.f32.gmra.mxu0 %v642
      %v820 = vpop.f32.mrf.mxu0
      %v821 = vadd.f32 %v524, %v820
      %822 = vmatmul.f32.gmra.mxu0 %v645
      %v823 = vpop.f32.mrf.mxu0
      %v824 = vadd.f32 %v524, %v823
      %825 = vmatmul.f32.gmra.mxu0 %v648
      %v826 = vpop.f32.mrf.mxu0
      %v827 = vadd.f32 %v524, %v826
      %828 = vmatmul.f32.gmra.mxu0 %v651
      %v829 = vpop.f32.mrf.mxu0
      %v830 = vadd.f32 %v524, %v829
      %831 = vmatmul.f32.gmra.mxu0 %v654
      %v832 = vpop.f32.mrf.mxu0
      %v833 = vadd.f32 %v524, %v832
      %834 = vmatmul.f32.gmra.mxu0 %v657
      %v835 = vpop.f32.mrf.mxu0
      %v836 = vadd.f32 %v524, %v835
      %837 = vmatmul.f32.gmra.mxu0 %v660
      %v838 = vpop.f32.mrf.mxu0
      %v839 = vadd.f32 %v524, %v838
      %840 = vmatmul.f32.gmra.mxu0 %v663
      %v841 = vpop.f32.mrf.mxu0
      %v842 = vadd.f32 %v524, %v841
      %843 = vmatmul.f32.gmra.mxu0 %v666
      %v844 = vpop.f32.mrf.mxu0
      %v845 = vadd.f32 %v524, %v844
      %846 = vmatmul.f32.gmra.mxu0 %v669
      %v847 = vpop.f32.mrf.mxu0
      %v848 = vadd.f32 %v524, %v847
      %849 = vmatmul.f32.gmra.mxu0 %v672
      %v850 = vpop.f32.mrf.mxu0
      %v851 = vadd.f32 %v524, %v850
      %852 = vmatmul.f32.gmra.mxu0 %v675
      %v853 = vpop.f32.mrf.mxu0
      %v854 = vadd.f32 %v524, %v853
      %855 = vmatmul.f32.gmra.mxu0 %v678
      %v856 = vpop.f32.mrf.mxu0
      %v857 = vadd.f32 %v524, %v856
      %858 = vmatmul.f32.gmra.mxu0 %v681
      %v859 = vpop.f32.mrf.mxu0
      %v860 = vadd.f32 %v524, %v859
      %861 = vmatmul.f32.gmra.mxu0 %v684
      %v862 = vpop.f32.mrf.mxu0
      %v863 = vadd.f32 %v524, %v862
      %864 = vmatmul.f32.gmra.mxu0 %v687
      %v865 = vpop.f32.mrf.mxu0
      %v866 = vadd.f32 %v524, %v865
      %867 = vdwg.mxu0
      %v868 = vmax.f32 %v707, 0.0
      %v869 = vmax.f32 %v710, 0.0
      %v870 = vmax.f32 %v713, 0.0
      %v871 = vmax.f32 %v716, 0.0
      %v872 = vmax.f32 %v719, 0.0
      %v873 = vmax.f32 %v722, 0.0
      %v874 = vmax.f32 %v725, 0.0
      %v875 = vmax.f32 %v728, 0.0
      %v876 = vmax.f32 %v731, 0.0
      %v877 = vmax.f32 %v734, 0.0
      %v878 = vmax.f32 %v737, 0.0
      %v879 = vmax.f32 %v740, 0.0
      %v880 = vmax.f32 %v743, 0.0
      %v881 = vmax.f32 %v746, 0.0
      %v882 = vmax.f32 %v749, 0.0
      %v883 = vmax.f32 %v752, 0.0
      %v884 = vmax.f32 %v755, 0.0
      %v885 = vmax.f32 %v758, 0.0
      %v886 = vmax.f32 %v761, 0.0
      %v887 = vmax.f32 %v764, 0.0
      %v888 = vmax.f32 %v767, 0.0
      %v889 = vmax.f32 %v770, 0.0
      %v890 = vmax.f32 %v773, 0.0
      %v891 = vmax.f32 %v776, 0.0
      %v892 = vmax.f32 %v779, 0.0
      %v893 = vmax.f32 %v782, 0.0
      %v894 = vmax.f32 %v785, 0.0
      %v895 = vmax.f32 %v788, 0.0
      %v896 = vmax.f32 %v791, 0.0
      %v897 = vmax.f32 %v794, 0.0
      %v898 = vmax.f32 %v797, 0.0
      %v899 = vmax.f32 %v800, 0.0
      %v900 = vmax.f32 %v803, 0.0
      %v901 = vmax.f32 %v806, 0.0
      %v902 = vmax.f32 %v809, 0.0
      %v903 = vmax.f32 %v812, 0.0
      %v904 = vmax.f32 %v815, 0.0
      %v905 = vmax.f32 %v818, 0.0
      %v906 = vmax.f32 %v821, 0.0
      %v907 = vmax.f32 %v824, 0.0
      %v908 = vmax.f32 %v827, 0.0
      %v909 = vmax.f32 %v830, 0.0
      %v910 = vmax.f32 %v833, 0.0
      %v911 = vmax.f32 %v836, 0.0
      %v912 = vmax.f32 %v839, 0.0
      %v913 = vmax.f32 %v842, 0.0
      %v914 = vmax.f32 %v845, 0.0
      %v915 = vmax.f32 %v848, 0.0
      %v916 = vmax.f32 %v851, 0.0
      %v917 = vmax.f32 %v854, 0.0
      %v918 = vmax.f32 %v857, 0.0
      %v919 = vmax.f32 %v860, 0.0
      %v920 = vmax.f32 %v863, 0.0
      %v921 = vmax.f32 %v866, 0.0
      %v922 = vmin.f32 %v868, 6.0
      %v923 = vmin.f32 %v869, 6.0
      %v924 = vmin.f32 %v870, 6.0
      %v925 = vmin.f32 %v871, 6.0
      %v926 = vmin.f32 %v872, 6.0
      %v927 = vmin.f32 %v873, 6.0
      %v928 = vmin.f32 %v874, 6.0
      %v929 = vmin.f32 %v875, 6.0
      %v930 = vmin.f32 %v876, 6.0
      %v931 = vmin.f32 %v877, 6.0
      %v932 = vmin.f32 %v878, 6.0
      %v933 = vmin.f32 %v879, 6.0
      %v934 = vmin.f32 %v880, 6.0
      %v935 = vmin.f32 %v881, 6.0
      %v936 = vmin.f32 %v882, 6.0
      %v937 = vmin.f32 %v883, 6.0
      %v938 = vmin.f32 %v884, 6.0
      %v939 = vmin.f32 %v885, 6.0
      %v940 = vmin.f32 %v886, 6.0
      %v941 = vmin.f32 %v887, 6.0
      %v942 = vmin.f32 %v888, 6.0
      %v943 = vmin.f32 %v889, 6.0
      %v944 = vmin.f32 %v890, 6.0
      %v945 = vmin.f32 %v891, 6.0
      %v946 = vmin.f32 %v892, 6.0
      %v947 = vmin.f32 %v893, 6.0
      %v948 = vmin.f32 %v894, 6.0
      %v949 = vmin.f32 %v895, 6.0
      %v950 = vmin.f32 %v896, 6.0
      %v951 = vmin.f32 %v897, 6.0
      %v952 = vmin.f32 %v898, 6.0
      %v953 = vmin.f32 %v899, 6.0
      %v954 = vmin.f32 %v900, 6.0
      %v955 = vmin.f32 %v901, 6.0
      %v956 = vmin.f32 %v902, 6.0
      %v957 = vmin.f32 %v903, 6.0
      %v958 = vmin.f32 %v904, 6.0
      %v959 = vmin.f32 %v905, 6.0
      %v960 = vmin.f32 %v906, 6.0
      %v961 = vmin.f32 %v907, 6.0
      %v962 = vmin.f32 %v908, 6.0
      %v963 = vmin.f32 %v909, 6.0
      %v964 = vmin.f32 %v910, 6.0
      %v965 = vmin.f32 %v911, 6.0
      %v966 = vmin.f32 %v912, 6.0
      %v967 = vmin.f32 %v913, 6.0
      %v968 = vmin.f32 %v914, 6.0
      %v969 = vmin.f32 %v915, 6.0
      %v970 = vmin.f32 %v916, 6.0
      %v971 = vmin.f32 %v917, 6.0
      %v972 = vmin.f32 %v918, 6.0
      %v973 = vmin.f32 %v919, 6.0
      %v974 = vmin.f32 %v920, 6.0
      %v975 = vmin.f32 %v921, 6.0
      %s976 = scalar_lea.vmem %s1, %s465
      %v977 = vld [vmem:[%s976] sm:$0xff]
      %v978 = vld [vmem:[%s976 + $0x8] sm:$0xff]
      %v979 = vld [vmem:[%s976 + $0x10] sm:$0xff]
      %v980 = vld [vmem:[%s976 + $0x18] sm:$0xff]
      %v981 = vld [vmem:[%s976 + $0x20] sm:$0xff]
      %v982 = vld [vmem:[%s976 + $0x28] sm:$0xff]
      %v983 = vld [vmem:[%s976 + $0x30] sm:$0xff]
      %v984 = vld [vmem:[%s976 + $0x38] sm:$0xff]
      %v985 = vld [vmem:[%s976 + $0x40] sm:$0xff]
      %v986 = vld [vmem:[%s976 + $0x48] sm:$0xff]
      %v987 = vld [vmem:[%s976 + $0x50] sm:$0xff]
      %v988 = vld [vmem:[%s976 + $0x58] sm:$0xff]
      %v989 = vld [vmem:[%s976 + $0x60] sm:$0xff]
      %v990 = vld [vmem:[%s976 + $0x68] sm:$0xff]
      %v991 = vld [vmem:[%s976 + $0x70] sm:$0xff]
      %v992 = vld [vmem:[%s976 + $0x78] sm:$0xff]
      %v993 = vld [vmem:[%s976 + $0x80] sm:$0xff]
      %v994 = vld [vmem:[%s976 + $0x88] sm:$0xff]
      %v995 = vld [vmem:[%s976 + $0x90] sm:$0xff]
      %v996 = vld [vmem:[%s976 + $0x98] sm:$0xff]
      %v997 = vld [vmem:[%s976 + $0xa0] sm:$0xff]
      %v998 = vld [vmem:[%s976 + $0xa8] sm:$0xff]
      %v999 = vld [vmem:[%s976 + $0xb0] sm:$0xff]
      %v1000 = vld [vmem:[%s976 + $0xb8] sm:$0xff]
      %v1001 = vld [vmem:[%s976 + $0xc0] sm:$0xff]
      %v1002 = vld [vmem:[%s976 + $0xc8] sm:$0xff]
      %v1003 = vld [vmem:[%s976 + $0xd0] sm:$0xff]
      %v1004 = vld [vmem:[%s976 + $0xd8] sm:$0xff]
      %v1005 = vld [vmem:[%s976 + $0xe0] sm:$0xff]
      %v1006 = vld [vmem:[%s976 + $0xe8] sm:$0xff]
      %v1007 = vld [vmem:[%s976 + $0xf0] sm:$0xff]
      %v1008 = vld [vmem:[%s976 + $0xf8] sm:$0xff]
      %v1009 = vld [vmem:[%s976 + $0x100] sm:$0xff]
      %v1010 = vld [vmem:[%s976 + $0x108] sm:$0xff]
      %v1011 = vld [vmem:[%s976 + $0x110] sm:$0xff]
      %v1012 = vld [vmem:[%s976 + $0x118] sm:$0xff]
      %v1013 = vld [vmem:[%s976 + $0x120] sm:$0xff]
      %v1014 = vld [vmem:[%s976 + $0x128] sm:$0xff]
      %v1015 = vld [vmem:[%s976 + $0x130] sm:$0xff]
      %v1016 = vld [vmem:[%s976 + $0x138] sm:$0xff]
      %v1017 = vld [vmem:[%s976 + $0x140] sm:$0xff]
      %v1018 = vld [vmem:[%s976 + $0x148] sm:$0xff]
      %v1019 = vld [vmem:[%s976 + $0x150] sm:$0xff]
      %v1020 = vld [vmem:[%s976 + $0x158] sm:$0xff]
      %v1021 = vld [vmem:[%s976 + $0x160] sm:$0xff]
      %v1022 = vld [vmem:[%s976 + $0x168] sm:$0xff]
      %v1023 = vld [vmem:[%s976 + $0x170] sm:$0xff]
      %v1024 = vld [vmem:[%s976 + $0x178] sm:$0xff]
      %v1025 = vld [vmem:[%s976 + $0x180] sm:$0xff]
      %v1026 = vld [vmem:[%s976 + $0x188] sm:$0xff]
      %v1027 = vld [vmem:[%s976 + $0x190] sm:$0xff]
      %v1028 = vld [vmem:[%s976 + $0x198] sm:$0xff]
      %v1029 = vld [vmem:[%s976 + $0x1a0] sm:$0xff]
      %v1030 = vld [vmem:[%s976 + $0x1a8] sm:$0xff]
      %1032 = vset.pattern.permute.xlu0 0
      %1033 = vperm.xlu0 %1032, %v977
      %v1034 = vpop.permute.xlu0 %1033
      %1037 = vset.pattern.permute.xlu0 0
      %1038 = vperm.xlu0 %1037, %v978
      %v1039 = vpop.permute.xlu0 %1038
      %1042 = vset.pattern.permute.xlu0 0
      %1043 = vperm.xlu0 %1042, %v979
      %v1044 = vpop.permute.xlu0 %1043
      %1047 = vset.pattern.permute.xlu0 0
      %1048 = vperm.xlu0 %1047, %v980
      %v1049 = vpop.permute.xlu0 %1048
      %1052 = vset.pattern.permute.xlu0 0
      %1053 = vperm.xlu0 %1052, %v981
      %v1054 = vpop.permute.xlu0 %1053
      %1057 = vset.pattern.permute.xlu0 0
      %1058 = vperm.xlu0 %1057, %v982
      %v1059 = vpop.permute.xlu0 %1058
      %1062 = vset.pattern.permute.xlu0 0
      %1063 = vperm.xlu0 %1062, %v983
      %v1064 = vpop.permute.xlu0 %1063
      %1067 = vset.pattern.permute.xlu0 0
      %1068 = vperm.xlu0 %1067, %v984
      %v1069 = vpop.permute.xlu0 %1068
      %1072 = vset.pattern.permute.xlu0 0
      %1073 = vperm.xlu0 %1072, %v985
      %v1074 = vpop.permute.xlu0 %1073
      %1077 = vset.pattern.permute.xlu0 0
      %1078 = vperm.xlu0 %1077, %v986
      %v1079 = vpop.permute.xlu0 %1078
      %1082 = vset.pattern.permute.xlu0 0
      %1083 = vperm.xlu0 %1082, %v987
      %v1084 = vpop.permute.xlu0 %1083
      %1087 = vset.pattern.permute.xlu0 0
      %1088 = vperm.xlu0 %1087, %v988
      %v1089 = vpop.permute.xlu0 %1088
      %1092 = vset.pattern.permute.xlu0 0
      %1093 = vperm.xlu0 %1092, %v989
      %v1094 = vpop.permute.xlu0 %1093
      %1097 = vset.pattern.permute.xlu0 0
      %1098 = vperm.xlu0 %1097, %v990
      %v1099 = vpop.permute.xlu0 %1098
      %1102 = vset.pattern.permute.xlu0 0
      %1103 = vperm.xlu0 %1102, %v991
      %v1104 = vpop.permute.xlu0 %1103
      %1107 = vset.pattern.permute.xlu0 0
      %1108 = vperm.xlu0 %1107, %v992
      %v1109 = vpop.permute.xlu0 %1108
      %1112 = vset.pattern.permute.xlu0 0
      %1113 = vperm.xlu0 %1112, %v993
      %v1114 = vpop.permute.xlu0 %1113
      %1117 = vset.pattern.permute.xlu0 0
      %1118 = vperm.xlu0 %1117, %v994
      %v1119 = vpop.permute.xlu0 %1118
      %1122 = vset.pattern.permute.xlu0 0
      %1123 = vperm.xlu0 %1122, %v995
      %v1124 = vpop.permute.xlu0 %1123
      %1127 = vset.pattern.permute.xlu0 0
      %1128 = vperm.xlu0 %1127, %v996
      %v1129 = vpop.permute.xlu0 %1128
      %1132 = vset.pattern.permute.xlu0 0
      %1133 = vperm.xlu0 %1132, %v997
      %v1134 = vpop.permute.xlu0 %1133
      %1137 = vset.pattern.permute.xlu0 0
      %1138 = vperm.xlu0 %1137, %v998
      %v1139 = vpop.permute.xlu0 %1138
      %1142 = vset.pattern.permute.xlu0 0
      %1143 = vperm.xlu0 %1142, %v999
      %v1144 = vpop.permute.xlu0 %1143
      %1147 = vset.pattern.permute.xlu0 0
      %1148 = vperm.xlu0 %1147, %v1000
      %v1149 = vpop.permute.xlu0 %1148
      %1152 = vset.pattern.permute.xlu0 0
      %1153 = vperm.xlu0 %1152, %v1001
      %v1154 = vpop.permute.xlu0 %1153
      %1157 = vset.pattern.permute.xlu0 0
      %1158 = vperm.xlu0 %1157, %v1002
      %v1159 = vpop.permute.xlu0 %1158
      %1162 = vset.pattern.permute.xlu0 0
      %1163 = vperm.xlu0 %1162, %v1003
      %v1164 = vpop.permute.xlu0 %1163
      %1167 = vset.pattern.permute.xlu0 0
      %1168 = vperm.xlu0 %1167, %v1004
      %v1169 = vpop.permute.xlu0 %1168
      %1172 = vset.pattern.permute.xlu0 0
      %1173 = vperm.xlu0 %1172, %v1005
      %v1174 = vpop.permute.xlu0 %1173
      %1177 = vset.pattern.permute.xlu0 0
      %1178 = vperm.xlu0 %1177, %v1006
      %v1179 = vpop.permute.xlu0 %1178
      %1182 = vset.pattern.permute.xlu0 0
      %1183 = vperm.xlu0 %1182, %v1007
      %v1184 = vpop.permute.xlu0 %1183
      %1187 = vset.pattern.permute.xlu0 0
      %1188 = vperm.xlu0 %1187, %v1008
      %v1189 = vpop.permute.xlu0 %1188
      %1192 = vset.pattern.permute.xlu0 0
      %1193 = vperm.xlu0 %1192, %v1009
      %v1194 = vpop.permute.xlu0 %1193
      %1197 = vset.pattern.permute.xlu0 0
      %1198 = vperm.xlu0 %1197, %v1010
      %v1199 = vpop.permute.xlu0 %1198
      %1202 = vset.pattern.permute.xlu0 0
      %1203 = vperm.xlu0 %1202, %v1011
      %v1204 = vpop.permute.xlu0 %1203
      %1207 = vset.pattern.permute.xlu0 0
      %1208 = vperm.xlu0 %1207, %v1012
      %v1209 = vpop.permute.xlu0 %1208
      %1212 = vset.pattern.permute.xlu0 0
      %1213 = vperm.xlu0 %1212, %v1013
      %v1214 = vpop.permute.xlu0 %1213
      %1217 = vset.pattern.permute.xlu0 0
      %1218 = vperm.xlu0 %1217, %v1014
      %v1219 = vpop.permute.xlu0 %1218
      %1222 = vset.pattern.permute.xlu0 0
      %1223 = vperm.xlu0 %1222, %v1015
      %v1224 = vpop.permute.xlu0 %1223
      %1227 = vset.pattern.permute.xlu0 0
      %1228 = vperm.xlu0 %1227, %v1016
      %v1229 = vpop.permute.xlu0 %1228
      %1232 = vset.pattern.permute.xlu0 0
      %1233 = vperm.xlu0 %1232, %v1017
      %v1234 = vpop.permute.xlu0 %1233
      %1237 = vset.pattern.permute.xlu0 0
      %1238 = vperm.xlu0 %1237, %v1018
      %v1239 = vpop.permute.xlu0 %1238
      %1242 = vset.pattern.permute.xlu0 0
      %1243 = vperm.xlu0 %1242, %v1019
      %v1244 = vpop.permute.xlu0 %1243
      %1247 = vset.pattern.permute.xlu0 0
      %1248 = vperm.xlu0 %1247, %v1020
      %v1249 = vpop.permute.xlu0 %1248
      %1252 = vset.pattern.permute.xlu0 0
      %1253 = vperm.xlu0 %1252, %v1021
      %v1254 = vpop.permute.xlu0 %1253
      %1257 = vset.pattern.permute.xlu0 0
      %1258 = vperm.xlu0 %1257, %v1022
      %v1259 = vpop.permute.xlu0 %1258
      %1262 = vset.pattern.permute.xlu0 0
      %1263 = vperm.xlu0 %1262, %v1023
      %v1264 = vpop.permute.xlu0 %1263
      %1267 = vset.pattern.permute.xlu0 0
      %1268 = vperm.xlu0 %1267, %v1024
      %v1269 = vpop.permute.xlu0 %1268
      %1272 = vset.pattern.permute.xlu0 0
      %1273 = vperm.xlu0 %1272, %v1025
      %v1274 = vpop.permute.xlu0 %1273
      %1277 = vset.pattern.permute.xlu0 0
      %1278 = vperm.xlu0 %1277, %v1026
      %v1279 = vpop.permute.xlu0 %1278
      %1282 = vset.pattern.permute.xlu0 0
      %1283 = vperm.xlu0 %1282, %v1027
      %v1284 = vpop.permute.xlu0 %1283
      %1287 = vset.pattern.permute.xlu0 0
      %1288 = vperm.xlu0 %1287, %v1028
      %v1289 = vpop.permute.xlu0 %1288
      %1292 = vset.pattern.permute.xlu0 0
      %1293 = vperm.xlu0 %1292, %v1029
      %v1294 = vpop.permute.xlu0 %1293
      %1297 = vset.pattern.permute.xlu0 0
      %1298 = vperm.xlu0 %1297, %v1030
      %v1299 = vpop.permute.xlu0 %1298
      %v1301 = vmul.f32 %v922, %v1034
      %v1302 = vmul.f32 %v923, %v1039
      %v1303 = vmul.f32 %v924, %v1044
      %v1304 = vmul.f32 %v925, %v1049
      %v1305 = vmul.f32 %v926, %v1054
      %v1306 = vmul.f32 %v927, %v1059
      %v1307 = vmul.f32 %v928, %v1064
      %v1308 = vmul.f32 %v929, %v1069
      %v1309 = vmul.f32 %v930, %v1074
      %v1310 = vmul.f32 %v931, %v1079
      %v1311 = vmul.f32 %v932, %v1084
      %v1312 = vmul.f32 %v933, %v1089
      %v1313 = vmul.f32 %v934, %v1094
      %v1314 = vmul.f32 %v935, %v1099
      %v1315 = vmul.f32 %v936, %v1104
      %v1316 = vmul.f32 %v937, %v1109
      %v1317 = vmul.f32 %v938, %v1114
      %v1318 = vmul.f32 %v939, %v1119
      %v1319 = vmul.f32 %v940, %v1124
      %v1320 = vmul.f32 %v941, %v1129
      %v1321 = vmul.f32 %v942, %v1134
      %v1322 = vmul.f32 %v943, %v1139
      %v1323 = vmul.f32 %v944, %v1144
      %v1324 = vmul.f32 %v945, %v1149
      %v1325 = vmul.f32 %v946, %v1154
      %v1326 = vmul.f32 %v947, %v1159
      %v1327 = vmul.f32 %v948, %v1164
      %v1328 = vmul.f32 %v949, %v1169
      %v1329 = vmul.f32 %v950, %v1174
      %v1330 = vmul.f32 %v951, %v1179
      %v1331 = vmul.f32 %v952, %v1184
      %v1332 = vmul.f32 %v953, %v1189
      %v1333 = vmul.f32 %v954, %v1194
      %v1334 = vmul.f32 %v955, %v1199
      %v1335 = vmul.f32 %v956, %v1204
      %v1336 = vmul.f32 %v957, %v1209
      %v1337 = vmul.f32 %v958, %v1214
      %v1338 = vmul.f32 %v959, %v1219
      %v1339 = vmul.f32 %v960, %v1224
      %v1340 = vmul.f32 %v961, %v1229
      %v1341 = vmul.f32 %v962, %v1234
      %v1342 = vmul.f32 %v963, %v1239
      %v1343 = vmul.f32 %v964, %v1244
      %v1344 = vmul.f32 %v965, %v1249
      %v1345 = vmul.f32 %v966, %v1254
      %v1346 = vmul.f32 %v967, %v1259
      %v1347 = vmul.f32 %v968, %v1264
      %v1348 = vmul.f32 %v969, %v1269
      %v1349 = vmul.f32 %v970, %v1274
      %v1350 = vmul.f32 %v971, %v1279
      %v1351 = vmul.f32 %v972, %v1284
      %v1352 = vmul.f32 %v973, %v1289
      %v1353 = vmul.f32 %v974, %v1294
      %v1354 = vmul.f32 %v975, %v1299
      %1355 = vst [vmem:[#allocation3] sm:$0xff] %v1301
      %1356 = vst [vmem:[#allocation3 + $0x8] sm:$0xff] %v1302
      %1357 = vst [vmem:[#allocation3 + $0x10] sm:$0xff] %v1303
      %1358 = vst [vmem:[#allocation3 + $0x18] sm:$0xff] %v1304
      %1359 = vst [vmem:[#allocation3 + $0x20] sm:$0xff] %v1305
      %1360 = vst [vmem:[#allocation3 + $0x28] sm:$0xff] %v1306
      %1361 = vst [vmem:[#allocation3 + $0x30] sm:$0xff] %v1307
      %1362 = vst [vmem:[#allocation3 + $0x38] sm:$0xff] %v1308
      %1363 = vst [vmem:[#allocation3 + $0x40] sm:$0xff] %v1309
      %1364 = vst [vmem:[#allocation3 + $0x48] sm:$0xff] %v1310
      %1365 = vst [vmem:[#allocation3 + $0x50] sm:$0xff] %v1311
      %1366 = vst [vmem:[#allocation3 + $0x58] sm:$0xff] %v1312
      %1367 = vst [vmem:[#allocation3 + $0x60] sm:$0xff] %v1313
      %1368 = vst [vmem:[#allocation3 + $0x68] sm:$0xff] %v1314
      %1369 = vst [vmem:[#allocation3 + $0x70] sm:$0xff] %v1315
      %1370 = vst [vmem:[#allocation3 + $0x78] sm:$0xff] %v1316
      %1371 = vst [vmem:[#allocation3 + $0x80] sm:$0xff] %v1317
      %1372 = vst [vmem:[#allocation3 + $0x88] sm:$0xff] %v1318
      %1373 = vst [vmem:[#allocation3 + $0x90] sm:$0xff] %v1319
      %1374 = vst [vmem:[#allocation3 + $0x98] sm:$0xff] %v1320
      %1375 = vst [vmem:[#allocation3 + $0xa0] sm:$0xff] %v1321
      %1376 = vst [vmem:[#allocation3 + $0xa8] sm:$0xff] %v1322
      %1377 = vst [vmem:[#allocation3 + $0xb0] sm:$0xff] %v1323
      %1378 = vst [vmem:[#allocation3 + $0xb8] sm:$0xff] %v1324
      %1379 = vst [vmem:[#allocation3 + $0xc0] sm:$0xff] %v1325
      %1380 = vst [vmem:[#allocation3 + $0xc8] sm:$0xff] %v1326
      %1381 = vst [vmem:[#allocation3 + $0xd0] sm:$0xff] %v1327
      %1382 = vst [vmem:[#allocation3 + $0xd8] sm:$0xff] %v1328
      %1383 = vst [vmem:[#allocation3 + $0xe0] sm:$0xff] %v1329
      %1384 = vst [vmem:[#allocation3 + $0xe8] sm:$0xff] %v1330
      %1385 = vst [vmem:[#allocation3 + $0xf0] sm:$0xff] %v1331
      %1386 = vst [vmem:[#allocation3 + $0xf8] sm:$0xff] %v1332
      %1387 = vst [vmem:[#allocation3 + $0x100] sm:$0xff] %v1333
      %1388 = vst [vmem:[#allocation3 + $0x108] sm:$0xff] %v1334
      %1389 = vst [vmem:[#allocation3 + $0x110] sm:$0xff] %v1335
      %1390 = vst [vmem:[#allocation3 + $0x118] sm:$0xff] %v1336
      %1391 = vst [vmem:[#allocation3 + $0x120] sm:$0xff] %v1337
      %1392 = vst [vmem:[#allocation3 + $0x128] sm:$0xff] %v1338
      %1393 = vst [vmem:[#allocation3 + $0x130] sm:$0xff] %v1339
      %1394 = vst [vmem:[#allocation3 + $0x138] sm:$0xff] %v1340
      %1395 = vst [vmem:[#allocation3 + $0x140] sm:$0xff] %v1341
      %1396 = vst [vmem:[#allocation3 + $0x148] sm:$0xff] %v1342
      %1397 = vst [vmem:[#allocation3 + $0x150] sm:$0xff] %v1343
      %1398 = vst [vmem:[#allocation3 + $0x158] sm:$0xff] %v1344
      %1399 = vst [vmem:[#allocation3 + $0x160] sm:$0xff] %v1345
      %1400 = vst [vmem:[#allocation3 + $0x168] sm:$0xff] %v1346
      %1401 = vst [vmem:[#allocation3 + $0x170] sm:$0xff] %v1347
      %1402 = vst [vmem:[#allocation3 + $0x178] sm:$0xff] %v1348
      %1403 = vst [vmem:[#allocation3 + $0x180] sm:$0xff] %v1349
      %1404 = vst [vmem:[#allocation3 + $0x188] sm:$0xff] %v1350
      %1405 = vst [vmem:[#allocation3 + $0x190] sm:$0xff] %v1351
      %1406 = vst [vmem:[#allocation3 + $0x198] sm:$0xff] %v1352
      %1407 = vst [vmem:[#allocation3 + $0x1a0] sm:$0xff] %v1353
      %1408 = vst [vmem:[#allocation3 + $0x1a8] sm:$0xff] %v1354
      %v1409 = vld [vmem:[%s4] sm:$0xff]
      %v1410 = vld [vmem:[%s4 + $0x8] sm:$0x1]
      %v1411 = vld [vmem:[%s5] sm:$0x1]
      %v1412 = vld [vmem:[#allocation3] sm:$0xff]
      %v1413 = vld [vmem:[#allocation3 + $0x8] sm:$0xff]
      %v1414 = vperm.slane %v1409, 0
      %v1415 = vmul.f32 %v1412, %v1414
      %v1416 = vmul.f32 %v1413, %v1414
      %v1417 = vadd.f32 %v1415, 0.0
      %v1418 = vadd.f32 %v1416, 0.0
      %v1419 = vld [vmem:[#allocation3 + $0x1] sm:$0xff]
      %v1420 = vld [vmem:[#allocation3 + $0x9] sm:$0xff]
      %v1421 = vperm.slane %v1409, 1
      %v1422 = vmul.f32 %v1419, %v1421
      %v1423 = vmul.f32 %v1420, %v1421
      %v1424 = vadd.f32 %v1417, %v1422
      %v1425 = vadd.f32 %v1418, %v1423
      %v1426 = vld [vmem:[#allocation3 + $0x2] sm:$0xff]
      %v1427 = vld [vmem:[#allocation3 + $0xa] sm:$0xff]
      %v1428 = vperm.slane %v1409, 2
      %v1429 = vmul.f32 %v1426, %v1428
      %v1430 = vmul.f32 %v1427, %v1428
      %v1431 = vadd.f32 %v1424, %v1429
      %v1432 = vadd.f32 %v1425, %v1430
      %v1433 = vld [vmem:[#allocation3 + $0x18] sm:$0xff]
      %v1434 = vld [vmem:[#allocation3 + $0x20] sm:$0xff]
      %v1435 = vperm.slane %v1409, 3
      %v1436 = vmul.f32 %v1433, %v1435
      %v1437 = vmul.f32 %v1434, %v1435
      %v1438 = vadd.f32 %v1431, %v1436
      %v1439 = vadd.f32 %v1432, %v1437
      %v1440 = vld [vmem:[#allocation3 + $0x19] sm:$0xff]
      %v1441 = vld [vmem:[#allocation3 + $0x21] sm:$0xff]
      %v1442 = vperm.slane %v1409, 4
      %v1443 = vmul.f32 %v1440, %v1442
      %v1444 = vmul.f32 %v1441, %v1442
      %v1445 = vadd.f32 %v1438, %v1443
      %v1446 = vadd.f32 %v1439, %v1444
      %v1447 = vld [vmem:[#allocation3 + $0x1a] sm:$0xff]
      %v1448 = vld [vmem:[#allocation3 + $0x22] sm:$0xff]
      %v1449 = vperm.slane %v1409, 5
      %v1450 = vmul.f32 %v1447, %v1449
      %v1451 = vmul.f32 %v1448, %v1449
      %v1452 = vadd.f32 %v1445, %v1450
      %v1453 = vadd.f32 %v1446, %v1451
      %v1454 = vld [vmem:[#allocation3 + $0x30] sm:$0xff]
      %v1455 = vld [vmem:[#allocation3 + $0x38] sm:$0xff]
      %v1456 = vperm.slane %v1409, 6
      %v1457 = vmul.f32 %v1454, %v1456
      %v1458 = vmul.f32 %v1455, %v1456
      %v1459 = vadd.f32 %v1452, %v1457
      %v1460 = vadd.f32 %v1453, %v1458
      %v1461 = vld [vmem:[#allocation3 + $0x31] sm:$0xff]
      %v1462 = vld [vmem:[#allocation3 + $0x39] sm:$0xff]
      %v1463 = vperm.slane %v1409, 7
      %v1464 = vmul.f32 %v1461, %v1463
      %v1465 = vmul.f32 %v1462, %v1463
      %v1466 = vadd.f32 %v1459, %v1464
      %v1467 = vadd.f32 %v1460, %v1465
      %v1468 = vld [vmem:[#allocation3 + $0x32] sm:$0xff]
      %v1469 = vld [vmem:[#allocation3 + $0x3a] sm:$0xff]
      %v1470 = vperm.slane %v1410, 0
      %v1471 = vmul.f32 %v1468, %v1470
      %v1472 = vmul.f32 %v1469, %v1470
      %v1473 = vadd.f32 %v1466, %v1471
      %v1474 = vadd.f32 %v1467, %v1472
      %v1476 = vperm.slane %v1411, 0
      %v1478 = vadd.f32 %v1473, %v1476
      %v1479 = vadd.f32 %v1474, %v1476
      %v1480 = vmax.f32 %v1478, 0.0
      %v1481 = vmax.f32 %v1479, 0.0
      %v1482 = vmin.f32 %v1480, 6.0
      %v1483 = vmin.f32 %v1481, 6.0
      %1484 = vst [vmem:[#allocation4] sm:$0xff] %v1482
      %1485 = vst [vmem:[#allocation4 + $0x8] sm:$0xff] %v1483
      %v1486 = vld [vmem:[#allocation3 + $0x18] sm:$0xff]
      %v1487 = vld [vmem:[#allocation3 + $0x20] sm:$0xff]
      %v1488 = vmul.f32 %v1486, %v1414
      %v1489 = vmul.f32 %v1487, %v1414
      %v1490 = vadd.f32 %v1488, 0.0
      %v1491 = vadd.f32 %v1489, 0.0
      %v1492 = vld [vmem:[#allocation3 + $0x19] sm:$0xff]
      %v1493 = vld [vmem:[#allocation3 + $0x21] sm:$0xff]
      %v1494 = vmul.f32 %v1492, %v1421
      %v1495 = vmul.f32 %v1493, %v1421
      %v1496 = vadd.f32 %v1490, %v1494
      %v1497 = vadd.f32 %v1491, %v1495
      %v1498 = vld [vmem:[#allocation3 + $0x1a] sm:$0xff]
      %v1499 = vld [vmem:[#allocation3 + $0x22] sm:$0xff]
      %v1500 = vmul.f32 %v1498, %v1428
      %v1501 = vmul.f32 %v1499, %v1428
      %v1502 = vadd.f32 %v1496, %v1500
      %v1503 = vadd.f32 %v1497, %v1501
      %v1504 = vld [vmem:[#allocation3 + $0x30] sm:$0xff]
      %v1505 = vld [vmem:[#allocation3 + $0x38] sm:$0xff]
      %v1506 = vmul.f32 %v1504, %v1435
      %v1507 = vmul.f32 %v1505, %v1435
      %v1508 = vadd.f32 %v1502, %v1506
      %v1509 = vadd.f32 %v1503, %v1507
      %v1510 = vld [vmem:[#allocation3 + $0x31] sm:$0xff]
      %v1511 = vld [vmem:[#allocation3 + $0x39] sm:$0xff]
      %v1512 = vmul.f32 %v1510, %v1442
      %v1513 = vmul.f32 %v1511, %v1442
      %v1514 = vadd.f32 %v1508, %v1512
      %v1515 = vadd.f32 %v1509, %v1513
      %v1516 = vld [vmem:[#allocation3 + $0x32] sm:$0xff]
      %v1517 = vld [vmem:[#allocation3 + $0x3a] sm:$0xff]
      %v1518 = vmul.f32 %v1516, %v1449
      %v1519 = vmul.f32 %v1517, %v1449
      %v1520 = vadd.f32 %v1514, %v1518
      %v1521 = vadd.f32 %v1515, %v1519
      %v1522 = vld [vmem:[#allocation3 + $0x48] sm:$0xff]
      %v1523 = vld [vmem:[#allocation3 + $0x50] sm:$0xff]
      %v1524 = vmul.f32 %v1522, %v1456
      %v1525 = vmul.f32 %v1523, %v1456
      %v1526 = vadd.f32 %v1520, %v1524
      %v1527 = vadd.f32 %v1521, %v1525
      %v1528 = vld [vmem:[#allocation3 + $0x49] sm:$0xff]
      %v1529 = vld [vmem:[#allocation3 + $0x51] sm:$0xff]
      %v1530 = vmul.f32 %v1528, %v1463
      %v1531 = vmul.f32 %v1529, %v1463
      %v1532 = vadd.f32 %v1526, %v1530
      %v1533 = vadd.f32 %v1527, %v1531
      %v1534 = vld [vmem:[#allocation3 + $0x4a] sm:$0xff]
      %v1535 = vld [vmem:[#allocation3 + $0x52] sm:$0xff]
      %v1536 = vmul.f32 %v1534, %v1470
      %v1537 = vmul.f32 %v1535, %v1470
      %v1538 = vadd.f32 %v1532, %v1536
      %v1539 = vadd.f32 %v1533, %v1537
      %v1540 = vadd.f32 %v1538, %v1476
      %v1541 = vadd.f32 %v1539, %v1476
      %v1542 = vmax.f32 %v1540, 0.0
      %v1543 = vmax.f32 %v1541, 0.0
      %v1544 = vmin.f32 %v1542, 6.0
      %v1545 = vmin.f32 %v1543, 6.0
      %1546 = vst [vmem:[#allocation4 + $0x10] sm:$0xff] %v1544
      %1547 = vst [vmem:[#allocation4 + $0x18] sm:$0xff] %v1545
      %v1548 = vld [vmem:[#allocation3 + $0x30] sm:$0xff]
      %v1549 = vld [vmem:[#allocation3 + $0x38] sm:$0xff]
      %v1550 = vmul.f32 %v1548, %v1414
      %v1551 = vmul.f32 %v1549, %v1414
      %v1552 = vadd.f32 %v1550, 0.0
      %v1553 = vadd.f32 %v1551, 0.0
      %v1554 = vld [vmem:[#allocation3 + $0x31] sm:$0xff]
      %v1555 = vld [vmem:[#allocation3 + $0x39] sm:$0xff]
      %v1556 = vmul.f32 %v1554, %v1421
      %v1557 = vmul.f32 %v1555, %v1421
      %v1558 = vadd.f32 %v1552, %v1556
      %v1559 = vadd.f32 %v1553, %v1557
      %v1560 = vld [vmem:[#allocation3 + $0x32] sm:$0xff]
      %v1561 = vld [vmem:[#allocation3 + $0x3a] sm:$0xff]
      %v1562 = vmul.f32 %v1560, %v1428
      %v1563 = vmul.f32 %v1561, %v1428
      %v1564 = vadd.f32 %v1558, %v1562
      %v1565 = vadd.f32 %v1559, %v1563
      %v1566 = vld [vmem:[#allocation3 + $0x48] sm:$0xff]
      %v1567 = vld [vmem:[#allocation3 + $0x50] sm:$0xff]
      %v1568 = vmul.f32 %v1566, %v1435
      %v1569 = vmul.f32 %v1567, %v1435
      %v1570 = vadd.f32 %v1564, %v1568
      %v1571 = vadd.f32 %v1565, %v1569
      %v1572 = vld [vmem:[#allocation3 + $0x49] sm:$0xff]
      %v1573 = vld [vmem:[#allocation3 + $0x51] sm:$0xff]
      %v1574 = vmul.f32 %v1572, %v1442
      %v1575 = vmul.f32 %v1573, %v1442
      %v1576 = vadd.f32 %v1570, %v1574
      %v1577 = vadd.f32 %v1571, %v1575
      %v1578 = vld [vmem:[#allocation3 + $0x4a] sm:$0xff]
      %v1579 = vld [vmem:[#allocation3 + $0x52] sm:$0xff]
      %v1580 = vmul.f32 %v1578, %v1449
      %v1581 = vmul.f32 %v1579, %v1449
      %v1582 = vadd.f32 %v1576, %v1580
      %v1583 = vadd.f32 %v1577, %v1581
      %v1584 = vld [vmem:[#allocation3 + $0x60] sm:$0xff]
      %v1585 = vld [vmem:[#allocation3 + $0x68] sm:$0xff]
      %v1586 = vmul.f32 %v1584, %v1456
      %v1587 = vmul.f32 %v1585, %v1456
      %v1588 = vadd.f32 %v1582, %v1586
      %v1589 = vadd.f32 %v1583, %v1587
      %v1590 = vld [vmem:[#allocation3 + $0x61] sm:$0xff]
      %v1591 = vld [vmem:[#allocation3 + $0x69] sm:$0xff]
      %v1592 = vmul.f32 %v1590, %v1463
      %v1593 = vmul.f32 %v1591, %v1463
      %v1594 = vadd.f32 %v1588, %v1592
      %v1595 = vadd.f32 %v1589, %v1593
      %v1596 = vld [vmem:[#allocation3 + $0x62] sm:$0xff]
      %v1597 = vld [vmem:[#allocation3 + $0x6a] sm:$0xff]
      %v1598 = vmul.f32 %v1596, %v1470
      %v1599 = vmul.f32 %v1597, %v1470
      %v1600 = vadd.f32 %v1594, %v1598
      %v1601 = vadd.f32 %v1595, %v1599
      %v1602 = vadd.f32 %v1600, %v1476
      %v1603 = vadd.f32 %v1601, %v1476
      %v1604 = vmax.f32 %v1602, 0.0
      %v1605 = vmax.f32 %v1603, 0.0
      %v1606 = vmin.f32 %v1604, 6.0
      %v1607 = vmin.f32 %v1605, 6.0
      %1608 = vst [vmem:[#allocation4 + $0x20] sm:$0xff] %v1606
      %1609 = vst [vmem:[#allocation4 + $0x28] sm:$0xff] %v1607
      %v1610 = vld [vmem:[#allocation3 + $0x48] sm:$0xff]
      %v1611 = vld [vmem:[#allocation3 + $0x50] sm:$0xff]
      %v1612 = vmul.f32 %v1610, %v1414
      %v1613 = vmul.f32 %v1611, %v1414
      %v1614 = vadd.f32 %v1612, 0.0
      %v1615 = vadd.f32 %v1613, 0.0
      %v1616 = vld [vmem:[#allocation3 + $0x49] sm:$0xff]
      %v1617 = vld [vmem:[#allocation3 + $0x51] sm:$0xff]
      %v1618 = vmul.f32 %v1616, %v1421
      %v1619 = vmul.f32 %v1617, %v1421
      %v1620 = vadd.f32 %v1614, %v1618
      %v1621 = vadd.f32 %v1615, %v1619
      %v1622 = vld [vmem:[#allocation3 + $0x4a] sm:$0xff]
      %v1623 = vld [vmem:[#allocation3 + $0x52] sm:$0xff]
      %v1624 = vmul.f32 %v1622, %v1428
      %v1625 = vmul.f32 %v1623, %v1428
      %v1626 = vadd.f32 %v1620, %v1624
      %v1627 = vadd.f32 %v1621, %v1625
      %v1628 = vld [vmem:[#allocation3 + $0x60] sm:$0xff]
      %v1629 = vld [vmem:[#allocation3 + $0x68] sm:$0xff]
      %v1630 = vmul.f32 %v1628, %v1435
      %v1631 = vmul.f32 %v1629, %v1435
      %v1632 = vadd.f32 %v1626, %v1630
      %v1633 = vadd.f32 %v1627, %v1631
      %v1634 = vld [vmem:[#allocation3 + $0x61] sm:$0xff]
      %v1635 = vld [vmem:[#allocation3 + $0x69] sm:$0xff]
      %v1636 = vmul.f32 %v1634, %v1442
      %v1637 = vmul.f32 %v1635, %v1442
      %v1638 = vadd.f32 %v1632, %v1636
      %v1639 = vadd.f32 %v1633, %v1637
      %v1640 = vld [vmem:[#allocation3 + $0x62] sm:$0xff]
      %v1641 = vld [vmem:[#allocation3 + $0x6a] sm:$0xff]
      %v1642 = vmul.f32 %v1640, %v1449
      %v1643 = vmul.f32 %v1641, %v1449
      %v1644 = vadd.f32 %v1638, %v1642
      %v1645 = vadd.f32 %v1639, %v1643
      %v1646 = vld [vmem:[#allocation3 + $0x78] sm:$0xff]
      %v1647 = vld [vmem:[#allocation3 + $0x80] sm:$0xff]
      %v1648 = vmul.f32 %v1646, %v1456
      %v1649 = vmul.f32 %v1647, %v1456
      %v1650 = vadd.f32 %v1644, %v1648
      %v1651 = vadd.f32 %v1645, %v1649
      %v1652 = vld [vmem:[#allocation3 + $0x79] sm:$0xff]
      %v1653 = vld [vmem:[#allocation3 + $0x81] sm:$0xff]
      %v1654 = vmul.f32 %v1652, %v1463
      %v1655 = vmul.f32 %v1653, %v1463
      %v1656 = vadd.f32 %v1650, %v1654
      %v1657 = vadd.f32 %v1651, %v1655
      %v1658 = vld [vmem:[#allocation3 + $0x7a] sm:$0xff]
      %v1659 = vld [vmem:[#allocation3 + $0x82] sm:$0xff]
      %v1660 = vmul.f32 %v1658, %v1470
      %v1661 = vmul.f32 %v1659, %v1470
      %v1662 = vadd.f32 %v1656, %v1660
      %v1663 = vadd.f32 %v1657, %v1661
      %v1664 = vadd.f32 %v1662, %v1476
      %v1665 = vadd.f32 %v1663, %v1476
      %v1666 = vmax.f32 %v1664, 0.0
      %v1667 = vmax.f32 %v1665, 0.0
      %v1668 = vmin.f32 %v1666, 6.0
      %v1669 = vmin.f32 %v1667, 6.0
      %1670 = vst [vmem:[#allocation4 + $0x30] sm:$0xff] %v1668
      %1671 = vst [vmem:[#allocation4 + $0x38] sm:$0xff] %v1669
      %v1672 = vld [vmem:[#allocation3 + $0x60] sm:$0xff]
      %v1673 = vld [vmem:[#allocation3 + $0x68] sm:$0xff]
      %v1674 = vmul.f32 %v1672, %v1414
      %v1675 = vmul.f32 %v1673, %v1414
      %v1676 = vadd.f32 %v1674, 0.0
      %v1677 = vadd.f32 %v1675, 0.0
      %v1678 = vld [vmem:[#allocation3 + $0x61] sm:$0xff]
      %v1679 = vld [vmem:[#allocation3 + $0x69] sm:$0xff]
      %v1680 = vmul.f32 %v1678, %v1421
      %v1681 = vmul.f32 %v1679, %v1421
      %v1682 = vadd.f32 %v1676, %v1680
      %v1683 = vadd.f32 %v1677, %v1681
      %v1684 = vld [vmem:[#allocation3 + $0x62] sm:$0xff]
      %v1685 = vld [vmem:[#allocation3 + $0x6a] sm:$0xff]
      %v1686 = vmul.f32 %v1684, %v1428
      %v1687 = vmul.f32 %v1685, %v1428
      %v1688 = vadd.f32 %v1682, %v1686
      %v1689 = vadd.f32 %v1683, %v1687
      %v1690 = vld [vmem:[#allocation3 + $0x78] sm:$0xff]
      %v1691 = vld [vmem:[#allocation3 + $0x80] sm:$0xff]
      %v1692 = vmul.f32 %v1690, %v1435
      %v1693 = vmul.f32 %v1691, %v1435
      %v1694 = vadd.f32 %v1688, %v1692
      %v1695 = vadd.f32 %v1689, %v1693
      %v1696 = vld [vmem:[#allocation3 + $0x79] sm:$0xff]
      %v1697 = vld [vmem:[#allocation3 + $0x81] sm:$0xff]
      %v1698 = vmul.f32 %v1696, %v1442
      %v1699 = vmul.f32 %v1697, %v1442
      %v1700 = vadd.f32 %v1694, %v1698
      %v1701 = vadd.f32 %v1695, %v1699
      %v1702 = vld [vmem:[#allocation3 + $0x7a] sm:$0xff]
      %v1703 = vld [vmem:[#allocation3 + $0x82] sm:$0xff]
      %v1704 = vmul.f32 %v1702, %v1449
      %v1705 = vmul.f32 %v1703, %v1449
      %v1706 = vadd.f32 %v1700, %v1704
      %v1707 = vadd.f32 %v1701, %v1705
      %v1708 = vld [vmem:[#allocation3 + $0x90] sm:$0xff]
      %v1709 = vld [vmem:[#allocation3 + $0x98] sm:$0xff]
      %v1710 = vmul.f32 %v1708, %v1456
      %v1711 = vmul.f32 %v1709, %v1456
      %v1712 = vadd.f32 %v1706, %v1710
      %v1713 = vadd.f32 %v1707, %v1711
      %v1714 = vld [vmem:[#allocation3 + $0x91] sm:$0xff]
      %v1715 = vld [vmem:[#allocation3 + $0x99] sm:$0xff]
      %v1716 = vmul.f32 %v1714, %v1463
      %v1717 = vmul.f32 %v1715, %v1463
      %v1718 = vadd.f32 %v1712, %v1716
      %v1719 = vadd.f32 %v1713, %v1717
      %v1720 = vld [vmem:[#allocation3 + $0x92] sm:$0xff]
      %v1721 = vld [vmem:[#allocation3 + $0x9a] sm:$0xff]
      %v1722 = vmul.f32 %v1720, %v1470
      %v1723 = vmul.f32 %v1721, %v1470
      %v1724 = vadd.f32 %v1718, %v1722
      %v1725 = vadd.f32 %v1719, %v1723
      %v1726 = vadd.f32 %v1724, %v1476
      %v1727 = vadd.f32 %v1725, %v1476
      %v1728 = vmax.f32 %v1726, 0.0
      %v1729 = vmax.f32 %v1727, 0.0
      %v1730 = vmin.f32 %v1728, 6.0
      %v1731 = vmin.f32 %v1729, 6.0
      %1732 = vst [vmem:[#allocation4 + $0x40] sm:$0xff] %v1730
      %1733 = vst [vmem:[#allocation4 + $0x48] sm:$0xff] %v1731
      %v1734 = vld [vmem:[#allocation3 + $0x78] sm:$0xff]
      %v1735 = vld [vmem:[#allocation3 + $0x80] sm:$0xff]
      %v1736 = vmul.f32 %v1734, %v1414
      %v1737 = vmul.f32 %v1735, %v1414
      %v1738 = vadd.f32 %v1736, 0.0
      %v1739 = vadd.f32 %v1737, 0.0
      %v1740 = vld [vmem:[#allocation3 + $0x79] sm:$0xff]
      %v1741 = vld [vmem:[#allocation3 + $0x81] sm:$0xff]
      %v1742 = vmul.f32 %v1740, %v1421
      %v1743 = vmul.f32 %v1741, %v1421
      %v1744 = vadd.f32 %v1738, %v1742
      %v1745 = vadd.f32 %v1739, %v1743
      %v1746 = vld [vmem:[#allocation3 + $0x7a] sm:$0xff]
      %v1747 = vld [vmem:[#allocation3 + $0x82] sm:$0xff]
      %v1748 = vmul.f32 %v1746, %v1428
      %v1749 = vmul.f32 %v1747, %v1428
      %v1750 = vadd.f32 %v1744, %v1748
      %v1751 = vadd.f32 %v1745, %v1749
      %v1752 = vld [vmem:[#allocation3 + $0x90] sm:$0xff]
      %v1753 = vld [vmem:[#allocation3 + $0x98] sm:$0xff]
      %v1754 = vmul.f32 %v1752, %v1435
      %v1755 = vmul.f32 %v1753, %v1435
      %v1756 = vadd.f32 %v1750, %v1754
      %v1757 = vadd.f32 %v1751, %v1755
      %v1758 = vld [vmem:[#allocation3 + $0x91] sm:$0xff]
      %v1759 = vld [vmem:[#allocation3 + $0x99] sm:$0xff]
      %v1760 = vmul.f32 %v1758, %v1442
      %v1761 = vmul.f32 %v1759, %v1442
      %v1762 = vadd.f32 %v1756, %v1760
      %v1763 = vadd.f32 %v1757, %v1761
      %v1764 = vld [vmem:[#allocation3 + $0x92] sm:$0xff]
      %v1765 = vld [vmem:[#allocation3 + $0x9a] sm:$0xff]
      %v1766 = vmul.f32 %v1764, %v1449
      %v1767 = vmul.f32 %v1765, %v1449
      %v1768 = vadd.f32 %v1762, %v1766
      %v1769 = vadd.f32 %v1763, %v1767
      %v1770 = vld [vmem:[#allocation3 + $0xa8] sm:$0xff]
      %v1771 = vld [vmem:[#allocation3 + $0xb0] sm:$0xff]
      %v1772 = vmul.f32 %v1770, %v1456
      %v1773 = vmul.f32 %v1771, %v1456
      %v1774 = vadd.f32 %v1768, %v1772
      %v1775 = vadd.f32 %v1769, %v1773
      %v1776 = vld [vmem:[#allocation3 + $0xa9] sm:$0xff]
      %v1777 = vld [vmem:[#allocation3 + $0xb1] sm:$0xff]
      %v1778 = vmul.f32 %v1776, %v1463
      %v1779 = vmul.f32 %v1777, %v1463
      %v1780 = vadd.f32 %v1774, %v1778
      %v1781 = vadd.f32 %v1775, %v1779
      %v1782 = vld [vmem:[#allocation3 + $0xaa] sm:$0xff]
      %v1783 = vld [vmem:[#allocation3 + $0xb2] sm:$0xff]
      %v1784 = vmul.f32 %v1782, %v1470
      %v1785 = vmul.f32 %v1783, %v1470
      %v1786 = vadd.f32 %v1780, %v1784
      %v1787 = vadd.f32 %v1781, %v1785
      %v1788 = vadd.f32 %v1786, %v1476
      %v1789 = vadd.f32 %v1787, %v1476
      %v1790 = vmax.f32 %v1788, 0.0
      %v1791 = vmax.f32 %v1789, 0.0
      %v1792 = vmin.f32 %v1790, 6.0
      %v1793 = vmin.f32 %v1791, 6.0
      %1794 = vst [vmem:[#allocation4 + $0x50] sm:$0xff] %v1792
      %1795 = vst [vmem:[#allocation4 + $0x58] sm:$0xff] %v1793
      %v1796 = vld [vmem:[#allocation3 + $0x90] sm:$0xff]
      %v1797 = vld [vmem:[#allocation3 + $0x98] sm:$0xff]
      %v1798 = vmul.f32 %v1796, %v1414
      %v1799 = vmul.f32 %v1797, %v1414
      %v1800 = vadd.f32 %v1798, 0.0
      %v1801 = vadd.f32 %v1799, 0.0
      %v1802 = vld [vmem:[#allocation3 + $0x91] sm:$0xff]
      %v1803 = vld [vmem:[#allocation3 + $0x99] sm:$0xff]
      %v1804 = vmul.f32 %v1802, %v1421
      %v1805 = vmul.f32 %v1803, %v1421
      %v1806 = vadd.f32 %v1800, %v1804
      %v1807 = vadd.f32 %v1801, %v1805
      %v1808 = vld [vmem:[#allocation3 + $0x92] sm:$0xff]
      %v1809 = vld [vmem:[#allocation3 + $0x9a] sm:$0xff]
      %v1810 = vmul.f32 %v1808, %v1428
      %v1811 = vmul.f32 %v1809, %v1428
      %v1812 = vadd.f32 %v1806, %v1810
      %v1813 = vadd.f32 %v1807, %v1811
      %v1814 = vld [vmem:[#allocation3 + $0xa8] sm:$0xff]
      %v1815 = vld [vmem:[#allocation3 + $0xb0] sm:$0xff]
      %v1816 = vmul.f32 %v1814, %v1435
      %v1817 = vmul.f32 %v1815, %v1435
      %v1818 = vadd.f32 %v1812, %v1816
      %v1819 = vadd.f32 %v1813, %v1817
      %v1820 = vld [vmem:[#allocation3 + $0xa9] sm:$0xff]
      %v1821 = vld [vmem:[#allocation3 + $0xb1] sm:$0xff]
      %v1822 = vmul.f32 %v1820, %v1442
      %v1823 = vmul.f32 %v1821, %v1442
      %v1824 = vadd.f32 %v1818, %v1822
      %v1825 = vadd.f32 %v1819, %v1823
      %v1826 = vld [vmem:[#allocation3 + $0xaa] sm:$0xff]
      %v1827 = vld [vmem:[#allocation3 + $0xb2] sm:$0xff]
      %v1828 = vmul.f32 %v1826, %v1449
      %v1829 = vmul.f32 %v1827, %v1449
      %v1830 = vadd.f32 %v1824, %v1828
      %v1831 = vadd.f32 %v1825, %v1829
      %v1832 = vld [vmem:[#allocation3 + $0xc0] sm:$0xff]
      %v1833 = vld [vmem:[#allocation3 + $0xc8] sm:$0xff]
      %v1834 = vmul.f32 %v1832, %v1456
      %v1835 = vmul.f32 %v1833, %v1456
      %v1836 = vadd.f32 %v1830, %v1834
      %v1837 = vadd.f32 %v1831, %v1835
      %v1838 = vld [vmem:[#allocation3 + $0xc1] sm:$0xff]
      %v1839 = vld [vmem:[#allocation3 + $0xc9] sm:$0xff]
      %v1840 = vmul.f32 %v1838, %v1463
      %v1841 = vmul.f32 %v1839, %v1463
      %v1842 = vadd.f32 %v1836, %v1840
      %v1843 = vadd.f32 %v1837, %v1841
      %v1844 = vld [vmem:[#allocation3 + $0xc2] sm:$0xff]
      %v1845 = vld [vmem:[#allocation3 + $0xca] sm:$0xff]
      %v1846 = vmul.f32 %v1844, %v1470
      %v1847 = vmul.f32 %v1845, %v1470
      %v1848 = vadd.f32 %v1842, %v1846
      %v1849 = vadd.f32 %v1843, %v1847
      %v1850 = vadd.f32 %v1848, %v1476
      %v1851 = vadd.f32 %v1849, %v1476
      %v1852 = vmax.f32 %v1850, 0.0
      %v1853 = vmax.f32 %v1851, 0.0
      %v1854 = vmin.f32 %v1852, 6.0
      %v1855 = vmin.f32 %v1853, 6.0
      %1856 = vst [vmem:[#allocation4 + $0x60] sm:$0xff] %v1854
      %1857 = vst [vmem:[#allocation4 + $0x68] sm:$0xff] %v1855
      %v1858 = vld [vmem:[#allocation3 + $0xa8] sm:$0xff]
      %v1859 = vld [vmem:[#allocation3 + $0xb0] sm:$0xff]
      %v1860 = vmul.f32 %v1858, %v1414
      %v1861 = vmul.f32 %v1859, %v1414
      %v1862 = vadd.f32 %v1860, 0.0
      %v1863 = vadd.f32 %v1861, 0.0
      %v1864 = vld [vmem:[#allocation3 + $0xa9] sm:$0xff]
      %v1865 = vld [vmem:[#allocation3 + $0xb1] sm:$0xff]
      %v1866 = vmul.f32 %v1864, %v1421
      %v1867 = vmul.f32 %v1865, %v1421
      %v1868 = vadd.f32 %v1862, %v1866
      %v1869 = vadd.f32 %v1863, %v1867
      %v1870 = vld [vmem:[#allocation3 + $0xaa] sm:$0xff]
      %v1871 = vld [vmem:[#allocation3 + $0xb2] sm:$0xff]
      %v1872 = vmul.f32 %v1870, %v1428
      %v1873 = vmul.f32 %v1871, %v1428
      %v1874 = vadd.f32 %v1868, %v1872
      %v1875 = vadd.f32 %v1869, %v1873
      %v1876 = vld [vmem:[#allocation3 + $0xc0] sm:$0xff]
      %v1877 = vld [vmem:[#allocation3 + $0xc8] sm:$0xff]
      %v1878 = vmul.f32 %v1876, %v1435
      %v1879 = vmul.f32 %v1877, %v1435
      %v1880 = vadd.f32 %v1874, %v1878
      %v1881 = vadd.f32 %v1875, %v1879
      %v1882 = vld [vmem:[#allocation3 + $0xc1] sm:$0xff]
      %v1883 = vld [vmem:[#allocation3 + $0xc9] sm:$0xff]
      %v1884 = vmul.f32 %v1882, %v1442
      %v1885 = vmul.f32 %v1883, %v1442
      %v1886 = vadd.f32 %v1880, %v1884
      %v1887 = vadd.f32 %v1881, %v1885
      %v1888 = vld [vmem:[#allocation3 + $0xc2] sm:$0xff]
      %v1889 = vld [vmem:[#allocation3 + $0xca] sm:$0xff]
      %v1890 = vmul.f32 %v1888, %v1449
      %v1891 = vmul.f32 %v1889, %v1449
      %v1892 = vadd.f32 %v1886, %v1890
      %v1893 = vadd.f32 %v1887, %v1891
      %v1894 = vld [vmem:[#allocation3 + $0xd8] sm:$0xff]
      %v1895 = vld [vmem:[#allocation3 + $0xe0] sm:$0xff]
      %v1896 = vmul.f32 %v1894, %v1456
      %v1897 = vmul.f32 %v1895, %v1456
      %v1898 = vadd.f32 %v1892, %v1896
      %v1899 = vadd.f32 %v1893, %v1897
      %v1900 = vld [vmem:[#allocation3 + $0xd9] sm:$0xff]
      %v1901 = vld [vmem:[#allocation3 + $0xe1] sm:$0xff]
      %v1902 = vmul.f32 %v1900, %v1463
      %v1903 = vmul.f32 %v1901, %v1463
      %v1904 = vadd.f32 %v1898, %v1902
      %v1905 = vadd.f32 %v1899, %v1903
      %v1906 = vld [vmem:[#allocation3 + $0xda] sm:$0xff]
      %v1907 = vld [vmem:[#allocation3 + $0xe2] sm:$0xff]
      %v1908 = vmul.f32 %v1906, %v1470
      %v1909 = vmul.f32 %v1907, %v1470
      %v1910 = vadd.f32 %v1904, %v1908
      %v1911 = vadd.f32 %v1905, %v1909
      %v1912 = vadd.f32 %v1910, %v1476
      %v1913 = vadd.f32 %v1911, %v1476
      %v1914 = vmax.f32 %v1912, 0.0
      %v1915 = vmax.f32 %v1913, 0.0
      %v1916 = vmin.f32 %v1914, 6.0
      %v1917 = vmin.f32 %v1915, 6.0
      %1918 = vst [vmem:[#allocation4 + $0x70] sm:$0xff] %v1916
      %1919 = vst [vmem:[#allocation4 + $0x78] sm:$0xff] %v1917
      %v1920 = vld [vmem:[#allocation3 + $0xc0] sm:$0xff]
      %v1921 = vld [vmem:[#allocation3 + $0xc8] sm:$0xff]
      %v1922 = vmul.f32 %v1920, %v1414
      %v1923 = vmul.f32 %v1921, %v1414
      %v1924 = vadd.f32 %v1922, 0.0
      %v1925 = vadd.f32 %v1923, 0.0
      %v1926 = vld [vmem:[#allocation3 + $0xc1] sm:$0xff]
      %v1927 = vld [vmem:[#allocation3 + $0xc9] sm:$0xff]
      %v1928 = vmul.f32 %v1926, %v1421
      %v1929 = vmul.f32 %v1927, %v1421
      %v1930 = vadd.f32 %v1924, %v1928
      %v1931 = vadd.f32 %v1925, %v1929
      %v1932 = vld [vmem:[#allocation3 + $0xc2] sm:$0xff]
      %v1933 = vld [vmem:[#allocation3 + $0xca] sm:$0xff]
      %v1934 = vmul.f32 %v1932, %v1428
      %v1935 = vmul.f32 %v1933, %v1428
      %v1936 = vadd.f32 %v1930, %v1934
      %v1937 = vadd.f32 %v1931, %v1935
      %v1938 = vld [vmem:[#allocation3 + $0xd8] sm:$0xff]
      %v1939 = vld [vmem:[#allocation3 + $0xe0] sm:$0xff]
      %v1940 = vmul.f32 %v1938, %v1435
      %v1941 = vmul.f32 %v1939, %v1435
      %v1942 = vadd.f32 %v1936, %v1940
      %v1943 = vadd.f32 %v1937, %v1941
      %v1944 = vld [vmem:[#allocation3 + $0xd9] sm:$0xff]
      %v1945 = vld [vmem:[#allocation3 + $0xe1] sm:$0xff]
      %v1946 = vmul.f32 %v1944, %v1442
      %v1947 = vmul.f32 %v1945, %v1442
      %v1948 = vadd.f32 %v1942, %v1946
      %v1949 = vadd.f32 %v1943, %v1947
      %v1950 = vld [vmem:[#allocation3 + $0xda] sm:$0xff]
      %v1951 = vld [vmem:[#allocation3 + $0xe2] sm:$0xff]
      %v1952 = vmul.f32 %v1950, %v1449
      %v1953 = vmul.f32 %v1951, %v1449
      %v1954 = vadd.f32 %v1948, %v1952
      %v1955 = vadd.f32 %v1949, %v1953
      %v1956 = vld [vmem:[#allocation3 + $0xf0] sm:$0xff]
      %v1957 = vld [vmem:[#allocation3 + $0xf8] sm:$0xff]
      %v1958 = vmul.f32 %v1956, %v1456
      %v1959 = vmul.f32 %v1957, %v1456
      %v1960 = vadd.f32 %v1954, %v1958
      %v1961 = vadd.f32 %v1955, %v1959
      %v1962 = vld [vmem:[#allocation3 + $0xf1] sm:$0xff]
      %v1963 = vld [vmem:[#allocation3 + $0xf9] sm:$0xff]
      %v1964 = vmul.f32 %v1962, %v1463
      %v1965 = vmul.f32 %v1963, %v1463
      %v1966 = vadd.f32 %v1960, %v1964
      %v1967 = vadd.f32 %v1961, %v1965
      %v1968 = vld [vmem:[#allocation3 + $0xf2] sm:$0xff]
      %v1969 = vld [vmem:[#allocation3 + $0xfa] sm:$0xff]
      %v1970 = vmul.f32 %v1968, %v1470
      %v1971 = vmul.f32 %v1969, %v1470
      %v1972 = vadd.f32 %v1966, %v1970
      %v1973 = vadd.f32 %v1967, %v1971
      %v1974 = vadd.f32 %v1972, %v1476
      %v1975 = vadd.f32 %v1973, %v1476
      %v1976 = vmax.f32 %v1974, 0.0
      %v1977 = vmax.f32 %v1975, 0.0
      %v1978 = vmin.f32 %v1976, 6.0
      %v1979 = vmin.f32 %v1977, 6.0
      %1980 = vst [vmem:[#allocation4 + $0x80] sm:$0xff] %v1978
      %1981 = vst [vmem:[#allocation4 + $0x88] sm:$0xff] %v1979
      %v1982 = vld [vmem:[#allocation3 + $0xd8] sm:$0xff]
      %v1983 = vld [vmem:[#allocation3 + $0xe0] sm:$0xff]
      %v1984 = vmul.f32 %v1982, %v1414
      %v1985 = vmul.f32 %v1983, %v1414
      %v1986 = vadd.f32 %v1984, 0.0
      %v1987 = vadd.f32 %v1985, 0.0
      %v1988 = vld [vmem:[#allocation3 + $0xd9] sm:$0xff]
      %v1989 = vld [vmem:[#allocation3 + $0xe1] sm:$0xff]
      %v1990 = vmul.f32 %v1988, %v1421
      %v1991 = vmul.f32 %v1989, %v1421
      %v1992 = vadd.f32 %v1986, %v1990
      %v1993 = vadd.f32 %v1987, %v1991
      %v1994 = vld [vmem:[#allocation3 + $0xda] sm:$0xff]
      %v1995 = vld [vmem:[#allocation3 + $0xe2] sm:$0xff]
      %v1996 = vmul.f32 %v1994, %v1428
      %v1997 = vmul.f32 %v1995, %v1428
      %v1998 = vadd.f32 %v1992, %v1996
      %v1999 = vadd.f32 %v1993, %v1997
      %v2000 = vld [vmem:[#allocation3 + $0xf0] sm:$0xff]
      %v2001 = vld [vmem:[#allocation3 + $0xf8] sm:$0xff]
      %v2002 = vmul.f32 %v2000, %v1435
      %v2003 = vmul.f32 %v2001, %v1435
      %v2004 = vadd.f32 %v1998, %v2002
      %v2005 = vadd.f32 %v1999, %v2003
      %v2006 = vld [vmem:[#allocation3 + $0xf1] sm:$0xff]
      %v2007 = vld [vmem:[#allocation3 + $0xf9] sm:$0xff]
      %v2008 = vmul.f32 %v2006, %v1442
      %v2009 = vmul.f32 %v2007, %v1442
      %v2010 = vadd.f32 %v2004, %v2008
      %v2011 = vadd.f32 %v2005, %v2009
      %v2012 = vld [vmem:[#allocation3 + $0xf2] sm:$0xff]
      %v2013 = vld [vmem:[#allocation3 + $0xfa] sm:$0xff]
      %v2014 = vmul.f32 %v2012, %v1449
      %v2015 = vmul.f32 %v2013, %v1449
      %v2016 = vadd.f32 %v2010, %v2014
      %v2017 = vadd.f32 %v2011, %v2015
      %v2018 = vld [vmem:[#allocation3 + $0x108] sm:$0xff]
      %v2019 = vld [vmem:[#allocation3 + $0x110] sm:$0xff]
      %v2020 = vmul.f32 %v2018, %v1456
      %v2021 = vmul.f32 %v2019, %v1456
      %v2022 = vadd.f32 %v2016, %v2020
      %v2023 = vadd.f32 %v2017, %v2021
      %v2024 = vld [vmem:[#allocation3 + $0x109] sm:$0xff]
      %v2025 = vld [vmem:[#allocation3 + $0x111] sm:$0xff]
      %v2026 = vmul.f32 %v2024, %v1463
      %v2027 = vmul.f32 %v2025, %v1463
      %v2028 = vadd.f32 %v2022, %v2026
      %v2029 = vadd.f32 %v2023, %v2027
      %v2030 = vld [vmem:[#allocation3 + $0x10a] sm:$0xff]
      %v2031 = vld [vmem:[#allocation3 + $0x112] sm:$0xff]
      %v2032 = vmul.f32 %v2030, %v1470
      %v2033 = vmul.f32 %v2031, %v1470
      %v2034 = vadd.f32 %v2028, %v2032
      %v2035 = vadd.f32 %v2029, %v2033
      %v2036 = vadd.f32 %v2034, %v1476
      %v2037 = vadd.f32 %v2035, %v1476
      %v2038 = vmax.f32 %v2036, 0.0
      %v2039 = vmax.f32 %v2037, 0.0
      %v2040 = vmin.f32 %v2038, 6.0
      %v2041 = vmin.f32 %v2039, 6.0
      %2042 = vst [vmem:[#allocation4 + $0x90] sm:$0xff] %v2040
      %2043 = vst [vmem:[#allocation4 + $0x98] sm:$0xff] %v2041
      %v2044 = vld [vmem:[#allocation3 + $0xf0] sm:$0xff]
      %v2045 = vld [vmem:[#allocation3 + $0xf8] sm:$0xff]
      %v2046 = vmul.f32 %v2044, %v1414
      %v2047 = vmul.f32 %v2045, %v1414
      %v2048 = vadd.f32 %v2046, 0.0
      %v2049 = vadd.f32 %v2047, 0.0
      %v2050 = vld [vmem:[#allocation3 + $0xf1] sm:$0xff]
      %v2051 = vld [vmem:[#allocation3 + $0xf9] sm:$0xff]
      %v2052 = vmul.f32 %v2050, %v1421
      %v2053 = vmul.f32 %v2051, %v1421
      %v2054 = vadd.f32 %v2048, %v2052
      %v2055 = vadd.f32 %v2049, %v2053
      %v2056 = vld [vmem:[#allocation3 + $0xf2] sm:$0xff]
      %v2057 = vld [vmem:[#allocation3 + $0xfa] sm:$0xff]
      %v2058 = vmul.f32 %v2056, %v1428
      %v2059 = vmul.f32 %v2057, %v1428
      %v2060 = vadd.f32 %v2054, %v2058
      %v2061 = vadd.f32 %v2055, %v2059
      %v2062 = vld [vmem:[#allocation3 + $0x108] sm:$0xff]
      %v2063 = vld [vmem:[#allocation3 + $0x110] sm:$0xff]
      %v2064 = vmul.f32 %v2062, %v1435
      %v2065 = vmul.f32 %v2063, %v1435
      %v2066 = vadd.f32 %v2060, %v2064
      %v2067 = vadd.f32 %v2061, %v2065
      %v2068 = vld [vmem:[#allocation3 + $0x109] sm:$0xff]
      %v2069 = vld [vmem:[#allocation3 + $0x111] sm:$0xff]
      %v2070 = vmul.f32 %v2068, %v1442
      %v2071 = vmul.f32 %v2069, %v1442
      %v2072 = vadd.f32 %v2066, %v2070
      %v2073 = vadd.f32 %v2067, %v2071
      %v2074 = vld [vmem:[#allocation3 + $0x10a] sm:$0xff]
      %v2075 = vld [vmem:[#allocation3 + $0x112] sm:$0xff]
      %v2076 = vmul.f32 %v2074, %v1449
      %v2077 = vmul.f32 %v2075, %v1449
      %v2078 = vadd.f32 %v2072, %v2076
      %v2079 = vadd.f32 %v2073, %v2077
      %v2080 = vld [vmem:[#allocation3 + $0x120] sm:$0xff]
      %v2081 = vld [vmem:[#allocation3 + $0x128] sm:$0xff]
      %v2082 = vmul.f32 %v2080, %v1456
      %v2083 = vmul.f32 %v2081, %v1456
      %v2084 = vadd.f32 %v2078, %v2082
      %v2085 = vadd.f32 %v2079, %v2083
      %v2086 = vld [vmem:[#allocation3 + $0x121] sm:$0xff]
      %v2087 = vld [vmem:[#allocation3 + $0x129] sm:$0xff]
      %v2088 = vmul.f32 %v2086, %v1463
      %v2089 = vmul.f32 %v2087, %v1463
      %v2090 = vadd.f32 %v2084, %v2088
      %v2091 = vadd.f32 %v2085, %v2089
      %v2092 = vld [vmem:[#allocation3 + $0x122] sm:$0xff]
      %v2093 = vld [vmem:[#allocation3 + $0x12a] sm:$0xff]
      %v2094 = vmul.f32 %v2092, %v1470
      %v2095 = vmul.f32 %v2093, %v1470
      %v2096 = vadd.f32 %v2090, %v2094
      %v2097 = vadd.f32 %v2091, %v2095
      %v2098 = vadd.f32 %v2096, %v1476
      %v2099 = vadd.f32 %v2097, %v1476
      %v2100 = vmax.f32 %v2098, 0.0
      %v2101 = vmax.f32 %v2099, 0.0
      %v2102 = vmin.f32 %v2100, 6.0
      %v2103 = vmin.f32 %v2101, 6.0
      %2104 = vst [vmem:[#allocation4 + $0xa0] sm:$0xff] %v2102
      %2105 = vst [vmem:[#allocation4 + $0xa8] sm:$0xff] %v2103
      %v2106 = vld [vmem:[#allocation3 + $0x108] sm:$0xff]
      %v2107 = vld [vmem:[#allocation3 + $0x110] sm:$0xff]
      %v2108 = vmul.f32 %v2106, %v1414
      %v2109 = vmul.f32 %v2107, %v1414
      %v2110 = vadd.f32 %v2108, 0.0
      %v2111 = vadd.f32 %v2109, 0.0
      %v2112 = vld [vmem:[#allocation3 + $0x109] sm:$0xff]
      %v2113 = vld [vmem:[#allocation3 + $0x111] sm:$0xff]
      %v2114 = vmul.f32 %v2112, %v1421
      %v2115 = vmul.f32 %v2113, %v1421
      %v2116 = vadd.f32 %v2110, %v2114
      %v2117 = vadd.f32 %v2111, %v2115
      %v2118 = vld [vmem:[#allocation3 + $0x10a] sm:$0xff]
      %v2119 = vld [vmem:[#allocation3 + $0x112] sm:$0xff]
      %v2120 = vmul.f32 %v2118, %v1428
      %v2121 = vmul.f32 %v2119, %v1428
      %v2122 = vadd.f32 %v2116, %v2120
      %v2123 = vadd.f32 %v2117, %v2121
      %v2124 = vld [vmem:[#allocation3 + $0x120] sm:$0xff]
      %v2125 = vld [vmem:[#allocation3 + $0x128] sm:$0xff]
      %v2126 = vmul.f32 %v2124, %v1435
      %v2127 = vmul.f32 %v2125, %v1435
      %v2128 = vadd.f32 %v2122, %v2126
      %v2129 = vadd.f32 %v2123, %v2127
      %v2130 = vld [vmem:[#allocation3 + $0x121] sm:$0xff]
      %v2131 = vld [vmem:[#allocation3 + $0x129] sm:$0xff]
      %v2132 = vmul.f32 %v2130, %v1442
      %v2133 = vmul.f32 %v2131, %v1442
      %v2134 = vadd.f32 %v2128, %v2132
      %v2135 = vadd.f32 %v2129, %v2133
      %v2136 = vld [vmem:[#allocation3 + $0x122] sm:$0xff]
      %v2137 = vld [vmem:[#allocation3 + $0x12a] sm:$0xff]
      %v2138 = vmul.f32 %v2136, %v1449
      %v2139 = vmul.f32 %v2137, %v1449
      %v2140 = vadd.f32 %v2134, %v2138
      %v2141 = vadd.f32 %v2135, %v2139
      %v2142 = vld [vmem:[#allocation3 + $0x138] sm:$0xff]
      %v2143 = vld [vmem:[#allocation3 + $0x140] sm:$0xff]
      %v2144 = vmul.f32 %v2142, %v1456
      %v2145 = vmul.f32 %v2143, %v1456
      %v2146 = vadd.f32 %v2140, %v2144
      %v2147 = vadd.f32 %v2141, %v2145
      %v2148 = vld [vmem:[#allocation3 + $0x139] sm:$0xff]
      %v2149 = vld [vmem:[#allocation3 + $0x141] sm:$0xff]
      %v2150 = vmul.f32 %v2148, %v1463
      %v2151 = vmul.f32 %v2149, %v1463
      %v2152 = vadd.f32 %v2146, %v2150
      %v2153 = vadd.f32 %v2147, %v2151
      %v2154 = vld [vmem:[#allocation3 + $0x13a] sm:$0xff]
      %v2155 = vld [vmem:[#allocation3 + $0x142] sm:$0xff]
      %v2156 = vmul.f32 %v2154, %v1470
      %v2157 = vmul.f32 %v2155, %v1470
      %v2158 = vadd.f32 %v2152, %v2156
      %v2159 = vadd.f32 %v2153, %v2157
      %v2160 = vadd.f32 %v2158, %v1476
      %v2161 = vadd.f32 %v2159, %v1476
      %v2162 = vmax.f32 %v2160, 0.0
      %v2163 = vmax.f32 %v2161, 0.0
      %v2164 = vmin.f32 %v2162, 6.0
      %v2165 = vmin.f32 %v2163, 6.0
      %2166 = vst [vmem:[#allocation4 + $0xb0] sm:$0xff] %v2164
      %2167 = vst [vmem:[#allocation4 + $0xb8] sm:$0xff] %v2165
      %v2168 = vld [vmem:[#allocation3 + $0x120] sm:$0xff]
      %v2169 = vld [vmem:[#allocation3 + $0x128] sm:$0xff]
      %v2170 = vmul.f32 %v2168, %v1414
      %v2171 = vmul.f32 %v2169, %v1414
      %v2172 = vadd.f32 %v2170, 0.0
      %v2173 = vadd.f32 %v2171, 0.0
      %v2174 = vld [vmem:[#allocation3 + $0x121] sm:$0xff]
      %v2175 = vld [vmem:[#allocation3 + $0x129] sm:$0xff]
      %v2176 = vmul.f32 %v2174, %v1421
      %v2177 = vmul.f32 %v2175, %v1421
      %v2178 = vadd.f32 %v2172, %v2176
      %v2179 = vadd.f32 %v2173, %v2177
      %v2180 = vld [vmem:[#allocation3 + $0x122] sm:$0xff]
      %v2181 = vld [vmem:[#allocation3 + $0x12a] sm:$0xff]
      %v2182 = vmul.f32 %v2180, %v1428
      %v2183 = vmul.f32 %v2181, %v1428
      %v2184 = vadd.f32 %v2178, %v2182
      %v2185 = vadd.f32 %v2179, %v2183
      %v2186 = vld [vmem:[#allocation3 + $0x138] sm:$0xff]
      %v2187 = vld [vmem:[#allocation3 + $0x140] sm:$0xff]
      %v2188 = vmul.f32 %v2186, %v1435
      %v2189 = vmul.f32 %v2187, %v1435
      %v2190 = vadd.f32 %v2184, %v2188
      %v2191 = vadd.f32 %v2185, %v2189
      %v2192 = vld [vmem:[#allocation3 + $0x139] sm:$0xff]
      %v2193 = vld [vmem:[#allocation3 + $0x141] sm:$0xff]
      %v2194 = vmul.f32 %v2192, %v1442
      %v2195 = vmul.f32 %v2193, %v1442
      %v2196 = vadd.f32 %v2190, %v2194
      %v2197 = vadd.f32 %v2191, %v2195
      %v2198 = vld [vmem:[#allocation3 + $0x13a] sm:$0xff]
      %v2199 = vld [vmem:[#allocation3 + $0x142] sm:$0xff]
      %v2200 = vmul.f32 %v2198, %v1449
      %v2201 = vmul.f32 %v2199, %v1449
      %v2202 = vadd.f32 %v2196, %v2200
      %v2203 = vadd.f32 %v2197, %v2201
      %v2204 = vld [vmem:[#allocation3 + $0x150] sm:$0xff]
      %v2205 = vld [vmem:[#allocation3 + $0x158] sm:$0xff]
      %v2206 = vmul.f32 %v2204, %v1456
      %v2207 = vmul.f32 %v2205, %v1456
      %v2208 = vadd.f32 %v2202, %v2206
      %v2209 = vadd.f32 %v2203, %v2207
      %v2210 = vld [vmem:[#allocation3 + $0x151] sm:$0xff]
      %v2211 = vld [vmem:[#allocation3 + $0x159] sm:$0xff]
      %v2212 = vmul.f32 %v2210, %v1463
      %v2213 = vmul.f32 %v2211, %v1463
      %v2214 = vadd.f32 %v2208, %v2212
      %v2215 = vadd.f32 %v2209, %v2213
      %v2216 = vld [vmem:[#allocation3 + $0x152] sm:$0xff]
      %v2217 = vld [vmem:[#allocation3 + $0x15a] sm:$0xff]
      %v2218 = vmul.f32 %v2216, %v1470
      %v2219 = vmul.f32 %v2217, %v1470
      %v2220 = vadd.f32 %v2214, %v2218
      %v2221 = vadd.f32 %v2215, %v2219
      %v2222 = vadd.f32 %v2220, %v1476
      %v2223 = vadd.f32 %v2221, %v1476
      %v2224 = vmax.f32 %v2222, 0.0
      %v2225 = vmax.f32 %v2223, 0.0
      %v2226 = vmin.f32 %v2224, 6.0
      %v2227 = vmin.f32 %v2225, 6.0
      %2228 = vst [vmem:[#allocation4 + $0xc0] sm:$0xff] %v2226
      %2229 = vst [vmem:[#allocation4 + $0xc8] sm:$0xff] %v2227
      %v2230 = vld [vmem:[#allocation3 + $0x138] sm:$0xff]
      %v2231 = vld [vmem:[#allocation3 + $0x140] sm:$0xff]
      %v2232 = vmul.f32 %v2230, %v1414
      %v2233 = vmul.f32 %v2231, %v1414
      %v2234 = vadd.f32 %v2232, 0.0
      %v2235 = vadd.f32 %v2233, 0.0
      %v2236 = vld [vmem:[#allocation3 + $0x139] sm:$0xff]
      %v2237 = vld [vmem:[#allocation3 + $0x141] sm:$0xff]
      %v2238 = vmul.f32 %v2236, %v1421
      %v2239 = vmul.f32 %v2237, %v1421
      %v2240 = vadd.f32 %v2234, %v2238
      %v2241 = vadd.f32 %v2235, %v2239
      %v2242 = vld [vmem:[#allocation3 + $0x13a] sm:$0xff]
      %v2243 = vld [vmem:[#allocation3 + $0x142] sm:$0xff]
      %v2244 = vmul.f32 %v2242, %v1428
      %v2245 = vmul.f32 %v2243, %v1428
      %v2246 = vadd.f32 %v2240, %v2244
      %v2247 = vadd.f32 %v2241, %v2245
      %v2248 = vld [vmem:[#allocation3 + $0x150] sm:$0xff]
      %v2249 = vld [vmem:[#allocation3 + $0x158] sm:$0xff]
      %v2250 = vmul.f32 %v2248, %v1435
      %v2251 = vmul.f32 %v2249, %v1435
      %v2252 = vadd.f32 %v2246, %v2250
      %v2253 = vadd.f32 %v2247, %v2251
      %v2254 = vld [vmem:[#allocation3 + $0x151] sm:$0xff]
      %v2255 = vld [vmem:[#allocation3 + $0x159] sm:$0xff]
      %v2256 = vmul.f32 %v2254, %v1442
      %v2257 = vmul.f32 %v2255, %v1442
      %v2258 = vadd.f32 %v2252, %v2256
      %v2259 = vadd.f32 %v2253, %v2257
      %v2260 = vld [vmem:[#allocation3 + $0x152] sm:$0xff]
      %v2261 = vld [vmem:[#allocation3 + $0x15a] sm:$0xff]
      %v2262 = vmul.f32 %v2260, %v1449
      %v2263 = vmul.f32 %v2261, %v1449
      %v2264 = vadd.f32 %v2258, %v2262
      %v2265 = vadd.f32 %v2259, %v2263
      %v2266 = vld [vmem:[#allocation3 + $0x168] sm:$0xff]
      %v2267 = vld [vmem:[#allocation3 + $0x170] sm:$0xff]
      %v2268 = vmul.f32 %v2266, %v1456
      %v2269 = vmul.f32 %v2267, %v1456
      %v2270 = vadd.f32 %v2264, %v2268
      %v2271 = vadd.f32 %v2265, %v2269
      %v2272 = vld [vmem:[#allocation3 + $0x169] sm:$0xff]
      %v2273 = vld [vmem:[#allocation3 + $0x171] sm:$0xff]
      %v2274 = vmul.f32 %v2272, %v1463
      %v2275 = vmul.f32 %v2273, %v1463
      %v2276 = vadd.f32 %v2270, %v2274
      %v2277 = vadd.f32 %v2271, %v2275
      %v2278 = vld [vmem:[#allocation3 + $0x16a] sm:$0xff]
      %v2279 = vld [vmem:[#allocation3 + $0x172] sm:$0xff]
      %v2280 = vmul.f32 %v2278, %v1470
      %v2281 = vmul.f32 %v2279, %v1470
      %v2282 = vadd.f32 %v2276, %v2280
      %v2283 = vadd.f32 %v2277, %v2281
      %v2284 = vadd.f32 %v2282, %v1476
      %v2285 = vadd.f32 %v2283, %v1476
      %v2286 = vmax.f32 %v2284, 0.0
      %v2287 = vmax.f32 %v2285, 0.0
      %v2288 = vmin.f32 %v2286, 6.0
      %v2289 = vmin.f32 %v2287, 6.0
      %2290 = vst [vmem:[#allocation4 + $0xd0] sm:$0xff] %v2288
      %2291 = vst [vmem:[#allocation4 + $0xd8] sm:$0xff] %v2289
      %v2292 = vld [vmem:[#allocation3 + $0x150] sm:$0xff]
      %v2293 = vld [vmem:[#allocation3 + $0x158] sm:$0xff]
      %v2294 = vmul.f32 %v2292, %v1414
      %v2295 = vmul.f32 %v2293, %v1414
      %v2296 = vadd.f32 %v2294, 0.0
      %v2297 = vadd.f32 %v2295, 0.0
      %v2298 = vld [vmem:[#allocation3 + $0x151] sm:$0xff]
      %v2299 = vld [vmem:[#allocation3 + $0x159] sm:$0xff]
      %v2300 = vmul.f32 %v2298, %v1421
      %v2301 = vmul.f32 %v2299, %v1421
      %v2302 = vadd.f32 %v2296, %v2300
      %v2303 = vadd.f32 %v2297, %v2301
      %v2304 = vld [vmem:[#allocation3 + $0x152] sm:$0xff]
      %v2305 = vld [vmem:[#allocation3 + $0x15a] sm:$0xff]
      %v2306 = vmul.f32 %v2304, %v1428
      %v2307 = vmul.f32 %v2305, %v1428
      %v2308 = vadd.f32 %v2302, %v2306
      %v2309 = vadd.f32 %v2303, %v2307
      %v2310 = vld [vmem:[#allocation3 + $0x168] sm:$0xff]
      %v2311 = vld [vmem:[#allocation3 + $0x170] sm:$0xff]
      %v2312 = vmul.f32 %v2310, %v1435
      %v2313 = vmul.f32 %v2311, %v1435
      %v2314 = vadd.f32 %v2308, %v2312
      %v2315 = vadd.f32 %v2309, %v2313
      %v2316 = vld [vmem:[#allocation3 + $0x169] sm:$0xff]
      %v2317 = vld [vmem:[#allocation3 + $0x171] sm:$0xff]
      %v2318 = vmul.f32 %v2316, %v1442
      %v2319 = vmul.f32 %v2317, %v1442
      %v2320 = vadd.f32 %v2314, %v2318
      %v2321 = vadd.f32 %v2315, %v2319
      %v2322 = vld [vmem:[#allocation3 + $0x16a] sm:$0xff]
      %v2323 = vld [vmem:[#allocation3 + $0x172] sm:$0xff]
      %v2324 = vmul.f32 %v2322, %v1449
      %v2325 = vmul.f32 %v2323, %v1449
      %v2326 = vadd.f32 %v2320, %v2324
      %v2327 = vadd.f32 %v2321, %v2325
      %v2328 = vld [vmem:[#allocation3 + $0x180] sm:$0xff]
      %v2329 = vld [vmem:[#allocation3 + $0x188] sm:$0xff]
      %v2330 = vmul.f32 %v2328, %v1456
      %v2331 = vmul.f32 %v2329, %v1456
      %v2332 = vadd.f32 %v2326, %v2330
      %v2333 = vadd.f32 %v2327, %v2331
      %v2334 = vld [vmem:[#allocation3 + $0x181] sm:$0xff]
      %v2335 = vld [vmem:[#allocation3 + $0x189] sm:$0xff]
      %v2336 = vmul.f32 %v2334, %v1463
      %v2337 = vmul.f32 %v2335, %v1463
      %v2338 = vadd.f32 %v2332, %v2336
      %v2339 = vadd.f32 %v2333, %v2337
      %v2340 = vld [vmem:[#allocation3 + $0x182] sm:$0xff]
      %v2341 = vld [vmem:[#allocation3 + $0x18a] sm:$0xff]
      %v2342 = vmul.f32 %v2340, %v1470
      %v2343 = vmul.f32 %v2341, %v1470
      %v2344 = vadd.f32 %v2338, %v2342
      %v2345 = vadd.f32 %v2339, %v2343
      %v2346 = vadd.f32 %v2344, %v1476
      %v2347 = vadd.f32 %v2345, %v1476
      %v2348 = vmax.f32 %v2346, 0.0
      %v2349 = vmax.f32 %v2347, 0.0
      %v2350 = vmin.f32 %v2348, 6.0
      %v2351 = vmin.f32 %v2349, 6.0
      %2352 = vst [vmem:[#allocation4 + $0xe0] sm:$0xff] %v2350
      %2353 = vst [vmem:[#allocation4 + $0xe8] sm:$0xff] %v2351
      %v2354 = vld [vmem:[#allocation3 + $0x168] sm:$0xff]
      %v2355 = vld [vmem:[#allocation3 + $0x170] sm:$0xff]
      %v2356 = vmul.f32 %v2354, %v1414
      %v2357 = vmul.f32 %v2355, %v1414
      %v2358 = vadd.f32 %v2356, 0.0
      %v2359 = vadd.f32 %v2357, 0.0
      %v2360 = vld [vmem:[#allocation3 + $0x169] sm:$0xff]
      %v2361 = vld [vmem:[#allocation3 + $0x171] sm:$0xff]
      %v2362 = vmul.f32 %v2360, %v1421
      %v2363 = vmul.f32 %v2361, %v1421
      %v2364 = vadd.f32 %v2358, %v2362
      %v2365 = vadd.f32 %v2359, %v2363
      %v2366 = vld [vmem:[#allocation3 + $0x16a] sm:$0xff]
      %v2367 = vld [vmem:[#allocation3 + $0x172] sm:$0xff]
      %v2368 = vmul.f32 %v2366, %v1428
      %v2369 = vmul.f32 %v2367, %v1428
      %v2370 = vadd.f32 %v2364, %v2368
      %v2371 = vadd.f32 %v2365, %v2369
      %v2372 = vld [vmem:[#allocation3 + $0x180] sm:$0xff]
      %v2373 = vld [vmem:[#allocation3 + $0x188] sm:$0xff]
      %v2374 = vmul.f32 %v2372, %v1435
      %v2375 = vmul.f32 %v2373, %v1435
      %v2376 = vadd.f32 %v2370, %v2374
      %v2377 = vadd.f32 %v2371, %v2375
      %v2378 = vld [vmem:[#allocation3 + $0x181] sm:$0xff]
      %v2379 = vld [vmem:[#allocation3 + $0x189] sm:$0xff]
      %v2380 = vmul.f32 %v2378, %v1442
      %v2381 = vmul.f32 %v2379, %v1442
      %v2382 = vadd.f32 %v2376, %v2380
      %v2383 = vadd.f32 %v2377, %v2381
      %v2384 = vld [vmem:[#allocation3 + $0x182] sm:$0xff]
      %v2385 = vld [vmem:[#allocation3 + $0x18a] sm:$0xff]
      %v2386 = vmul.f32 %v2384, %v1449
      %v2387 = vmul.f32 %v2385, %v1449
      %v2388 = vadd.f32 %v2382, %v2386
      %v2389 = vadd.f32 %v2383, %v2387
      %v2390 = vld [vmem:[#allocation3 + $0x198] sm:$0xff]
      %v2391 = vld [vmem:[#allocation3 + $0x1a0] sm:$0xff]
      %v2392 = vmul.f32 %v2390, %v1456
      %v2393 = vmul.f32 %v2391, %v1456
      %v2394 = vadd.f32 %v2388, %v2392
      %v2395 = vadd.f32 %v2389, %v2393
      %v2396 = vld [vmem:[#allocation3 + $0x199] sm:$0xff]
      %v2397 = vld [vmem:[#allocation3 + $0x1a1] sm:$0xff]
      %v2398 = vmul.f32 %v2396, %v1463
      %v2399 = vmul.f32 %v2397, %v1463
      %v2400 = vadd.f32 %v2394, %v2398
      %v2401 = vadd.f32 %v2395, %v2399
      %v2402 = vld [vmem:[#allocation3 + $0x19a] sm:$0xff]
      %v2403 = vld [vmem:[#allocation3 + $0x1a2] sm:$0xff]
      %v2404 = vmul.f32 %v2402, %v1470
      %v2405 = vmul.f32 %v2403, %v1470
      %v2406 = vadd.f32 %v2400, %v2404
      %v2407 = vadd.f32 %v2401, %v2405
      %v2408 = vadd.f32 %v2406, %v1476
      %v2409 = vadd.f32 %v2407, %v1476
      %v2410 = vmax.f32 %v2408, 0.0
      %v2411 = vmax.f32 %v2409, 0.0
      %v2412 = vmin.f32 %v2410, 6.0
      %v2413 = vmin.f32 %v2411, 6.0
      %2414 = vst [vmem:[#allocation4 + $0xf0] sm:$0xff] %v2412
      %2415 = vst [vmem:[#allocation4 + $0xf8] sm:$0xff] %v2413
      %v2416 = vld [vmem:[#allocation4] sm:$0xff]
      %v2417 = vld [vmem:[#allocation4 + $0x8] sm:$0xff]
      %v2418 = vld [vmem:[#allocation4 + $0x10] sm:$0xff]
      %v2419 = vld [vmem:[#allocation4 + $0x18] sm:$0xff]
      %v2420 = vld [vmem:[#allocation4 + $0x20] sm:$0xff]
      %v2421 = vld [vmem:[#allocation4 + $0x28] sm:$0xff]
      %v2422 = vld [vmem:[#allocation4 + $0x30] sm:$0xff]
      %v2423 = vld [vmem:[#allocation4 + $0x38] sm:$0xff]
      %v2424 = vld [vmem:[#allocation4 + $0x40] sm:$0xff]
      %v2425 = vld [vmem:[#allocation4 + $0x48] sm:$0xff]
      %v2426 = vld [vmem:[#allocation4 + $0x50] sm:$0xff]
      %v2427 = vld [vmem:[#allocation4 + $0x58] sm:$0xff]
      %v2428 = vld [vmem:[#allocation4 + $0x60] sm:$0xff]
      %v2429 = vld [vmem:[#allocation4 + $0x68] sm:$0xff]
      %v2430 = vld [vmem:[#allocation4 + $0x70] sm:$0xff]
      %v2431 = vld [vmem:[#allocation4 + $0x78] sm:$0xff]
      %v2432 = vld [vmem:[#allocation4 + $0x80] sm:$0xff]
      %v2433 = vld [vmem:[#allocation4 + $0x88] sm:$0xff]
      %v2434 = vld [vmem:[#allocation4 + $0x90] sm:$0xff]
      %v2435 = vld [vmem:[#allocation4 + $0x98] sm:$0xff]
      %v2436 = vld [vmem:[#allocation4 + $0xa0] sm:$0xff]
      %v2437 = vld [vmem:[#allocation4 + $0xa8] sm:$0xff]
      %v2438 = vld [vmem:[#allocation4 + $0xb0] sm:$0xff]
      %v2439 = vld [vmem:[#allocation4 + $0xb8] sm:$0xff]
      %v2440 = vld [vmem:[#allocation4 + $0xc0] sm:$0xff]
      %v2441 = vld [vmem:[#allocation4 + $0xc8] sm:$0xff]
      %v2442 = vld [vmem:[#allocation4 + $0xd0] sm:$0xff]
      %v2443 = vld [vmem:[#allocation4 + $0xd8] sm:$0xff]
      %v2444 = vld [vmem:[#allocation4 + $0xe0] sm:$0xff]
      %v2445 = vld [vmem:[#allocation4 + $0xe8] sm:$0xff]
      %v2446 = vld [vmem:[#allocation4 + $0xf0] sm:$0xff]
      %v2447 = vld [vmem:[#allocation4 + $0xf8] sm:$0xff]
      %v2448 = vld [vmem:[%s6] sm:$0xff]
      %v2449 = vld [vmem:[%s6 + $0x8] sm:$0xff]
      %v2450 = vld [vmem:[%s6 + $0x10] sm:$0xff]
      %v2451 = vld [vmem:[%s6 + $0x18] sm:$0xff]
      %v2452 = vld [vmem:[%s6 + $0x20] sm:$0xff]
      %v2453 = vld [vmem:[%s6 + $0x28] sm:$0xff]
      %v2454 = vld [vmem:[%s6 + $0x30] sm:$0xff]
      %v2455 = vld [vmem:[%s6 + $0x38] sm:$0xff]
      %v2456 = vld [vmem:[%s6 + $0x40] sm:$0xff]
      %v2457 = vld [vmem:[%s6 + $0x48] sm:$0xff]
      %v2458 = vld [vmem:[%s6 + $0x50] sm:$0xff]
      %v2459 = vld [vmem:[%s6 + $0x58] sm:$0xff]
      %v2460 = vld [vmem:[%s6 + $0x60] sm:$0xff]
      %v2461 = vld [vmem:[%s6 + $0x68] sm:$0xff]
      %v2462 = vld [vmem:[%s6 + $0x70] sm:$0xff]
      %v2463 = vld [vmem:[%s6 + $0x78] sm:$0xff]
      %v2464 = vld [vmem:[%s7] sm:$0x1]
      %v2466 = vperm.slane %v2464, 0
      %2468 = vmatpush.msra.mxu0 %v2463
      %2469 = vmatpush.msra.mxu0 %v2462
      %2470 = vmatpush.msra.mxu0 %v2461
      %2471 = vmatpush.msra.mxu0 %v2460
      %2472 = vmatpush.msra.mxu0 %v2459
      %2473 = vmatpush.msra.mxu0 %v2458
      %2474 = vmatpush.msra.mxu0 %v2457
      %2475 = vmatpush.msra.mxu0 %v2456
      %2476 = vmatpush.msra.mxu0 %v2455
      %2477 = vmatpush.msra.mxu0 %v2454
      %2478 = vmatpush.msra.mxu0 %v2453
      %2479 = vmatpush.msra.mxu0 %v2452
      %2480 = vmatpush.msra.mxu0 %v2451
      %2481 = vmatpush.msra.mxu0 %v2450
      %2482 = vmatpush.msra.mxu0 %v2449
      %2483 = vmatpush.msra.mxu0 %v2448
      %2484 = vmatmul.f32.gmra.mxu0 %v2416
      %v2485 = vpop.f32.mrf.mxu0
      %v2486 = vadd.f32 %v2466, %v2485
      %2487 = vmatmul.f32.gmra.mxu0 %v2417
      %v2488 = vpop.f32.mrf.mxu0
      %v2489 = vadd.f32 %v2466, %v2488
      %2490 = vmatmul.f32.gmra.mxu0 %v2418
      %v2491 = vpop.f32.mrf.mxu0
      %v2492 = vadd.f32 %v2466, %v2491
      %2493 = vmatmul.f32.gmra.mxu0 %v2419
      %v2494 = vpop.f32.mrf.mxu0
      %v2495 = vadd.f32 %v2466, %v2494
      %2496 = vmatmul.f32.gmra.mxu0 %v2420
      %v2497 = vpop.f32.mrf.mxu0
      %v2498 = vadd.f32 %v2466, %v2497
      %2499 = vmatmul.f32.gmra.mxu0 %v2421
      %v2500 = vpop.f32.mrf.mxu0
      %v2501 = vadd.f32 %v2466, %v2500
      %2502 = vmatmul.f32.gmra.mxu0 %v2422
      %v2503 = vpop.f32.mrf.mxu0
      %v2504 = vadd.f32 %v2466, %v2503
      %2505 = vmatmul.f32.gmra.mxu0 %v2423
      %v2506 = vpop.f32.mrf.mxu0
      %v2507 = vadd.f32 %v2466, %v2506
      %2508 = vmatmul.f32.gmra.mxu0 %v2424
      %v2509 = vpop.f32.mrf.mxu0
      %v2510 = vadd.f32 %v2466, %v2509
      %2511 = vmatmul.f32.gmra.mxu0 %v2425
      %v2512 = vpop.f32.mrf.mxu0
      %v2513 = vadd.f32 %v2466, %v2512
      %2514 = vmatmul.f32.gmra.mxu0 %v2426
      %v2515 = vpop.f32.mrf.mxu0
      %v2516 = vadd.f32 %v2466, %v2515
      %2517 = vmatmul.f32.gmra.mxu0 %v2427
      %v2518 = vpop.f32.mrf.mxu0
      %v2519 = vadd.f32 %v2466, %v2518
      %2520 = vmatmul.f32.gmra.mxu0 %v2428
      %v2521 = vpop.f32.mrf.mxu0
      %v2522 = vadd.f32 %v2466, %v2521
      %2523 = vmatmul.f32.gmra.mxu0 %v2429
      %v2524 = vpop.f32.mrf.mxu0
      %v2525 = vadd.f32 %v2466, %v2524
      %2526 = vmatmul.f32.gmra.mxu0 %v2430
      %v2527 = vpop.f32.mrf.mxu0
      %v2528 = vadd.f32 %v2466, %v2527
      %2529 = vmatmul.f32.gmra.mxu0 %v2431
      %v2530 = vpop.f32.mrf.mxu0
      %v2531 = vadd.f32 %v2466, %v2530
      %2532 = vmatmul.f32.gmra.mxu0 %v2432
      %v2533 = vpop.f32.mrf.mxu0
      %v2534 = vadd.f32 %v2466, %v2533
      %2535 = vmatmul.f32.gmra.mxu0 %v2433
      %v2536 = vpop.f32.mrf.mxu0
      %v2537 = vadd.f32 %v2466, %v2536
      %2538 = vmatmul.f32.gmra.mxu0 %v2434
      %v2539 = vpop.f32.mrf.mxu0
      %v2540 = vadd.f32 %v2466, %v2539
      %2541 = vmatmul.f32.gmra.mxu0 %v2435
      %v2542 = vpop.f32.mrf.mxu0
      %v2543 = vadd.f32 %v2466, %v2542
      %2544 = vmatmul.f32.gmra.mxu0 %v2436
      %v2545 = vpop.f32.mrf.mxu0
      %v2546 = vadd.f32 %v2466, %v2545
      %2547 = vmatmul.f32.gmra.mxu0 %v2437
      %v2548 = vpop.f32.mrf.mxu0
      %v2549 = vadd.f32 %v2466, %v2548
      %2550 = vmatmul.f32.gmra.mxu0 %v2438
      %v2551 = vpop.f32.mrf.mxu0
      %v2552 = vadd.f32 %v2466, %v2551
      %2553 = vmatmul.f32.gmra.mxu0 %v2439
      %v2554 = vpop.f32.mrf.mxu0
      %v2555 = vadd.f32 %v2466, %v2554
      %2556 = vmatmul.f32.gmra.mxu0 %v2440
      %v2557 = vpop.f32.mrf.mxu0
      %v2558 = vadd.f32 %v2466, %v2557
      %2559 = vmatmul.f32.gmra.mxu0 %v2441
      %v2560 = vpop.f32.mrf.mxu0
      %v2561 = vadd.f32 %v2466, %v2560
      %2562 = vmatmul.f32.gmra.mxu0 %v2442
      %v2563 = vpop.f32.mrf.mxu0
      %v2564 = vadd.f32 %v2466, %v2563
      %2565 = vmatmul.f32.gmra.mxu0 %v2443
      %v2566 = vpop.f32.mrf.mxu0
      %v2567 = vadd.f32 %v2466, %v2566
      %2568 = vmatmul.f32.gmra.mxu0 %v2444
      %v2569 = vpop.f32.mrf.mxu0
      %v2570 = vadd.f32 %v2466, %v2569
      %2571 = vmatmul.f32.gmra.mxu0 %v2445
      %v2572 = vpop.f32.mrf.mxu0
      %v2573 = vadd.f32 %v2466, %v2572
      %2574 = vmatmul.f32.gmra.mxu0 %v2446
      %v2575 = vpop.f32.mrf.mxu0
      %v2576 = vadd.f32 %v2466, %v2575
      %2577 = vmatmul.f32.gmra.mxu0 %v2447
      %v2578 = vpop.f32.mrf.mxu0
      %v2579 = vadd.f32 %v2466, %v2578
      %2580 = vdwg.mxu0
      %s2581 = smul.u32 %s25, 16
      %s2582 = smul.u32 %s2581, 16
      %s2583 = scalar_lea.vmem %s345, %s2582
      %v2584 = vld [vmem:[%s2583] sm:$0xff]
      %v2585 = vld [vmem:[%s2583 + $0x8] sm:$0xff]
      %s2586 = sadd.s32 %s2581, 1
      %s2587 = smul.u32 %s2586, 16
      %s2588 = scalar_lea.vmem %s345, %s2587
      %v2589 = vld [vmem:[%s2588] sm:$0xff]
      %v2590 = vld [vmem:[%s2588 + $0x8] sm:$0xff]
      %s2591 = sadd.s32 %s2581, 2
      %s2592 = smul.u32 %s2591, 16
      %s2593 = scalar_lea.vmem %s345, %s2592
      %v2594 = vld [vmem:[%s2593] sm:$0xff]
      %v2595 = vld [vmem:[%s2593 + $0x8] sm:$0xff]
      %s2596 = sadd.s32 %s2581, 3
      %s2597 = smul.u32 %s2596, 16
      %s2598 = scalar_lea.vmem %s345, %s2597
      %v2599 = vld [vmem:[%s2598] sm:$0xff]
      %v2600 = vld [vmem:[%s2598 + $0x8] sm:$0xff]
      %s2601 = sadd.s32 %s2581, 4
      %s2602 = smul.u32 %s2601, 16
      %s2603 = scalar_lea.vmem %s345, %s2602
      %v2604 = vld [vmem:[%s2603] sm:$0xff]
      %v2605 = vld [vmem:[%s2603 + $0x8] sm:$0xff]
      %s2606 = sadd.s32 %s2581, 5
      %s2607 = smul.u32 %s2606, 16
      %s2608 = scalar_lea.vmem %s345, %s2607
      %v2609 = vld [vmem:[%s2608] sm:$0xff]
      %v2610 = vld [vmem:[%s2608 + $0x8] sm:$0xff]
      %s2611 = sadd.s32 %s2581, 6
      %s2612 = smul.u32 %s2611, 16
      %s2613 = scalar_lea.vmem %s345, %s2612
      %v2614 = vld [vmem:[%s2613] sm:$0xff]
      %v2615 = vld [vmem:[%s2613 + $0x8] sm:$0xff]
      %s2616 = sadd.s32 %s2581, 7
      %s2617 = smul.u32 %s2616, 16
      %s2618 = scalar_lea.vmem %s345, %s2617
      %v2619 = vld [vmem:[%s2618] sm:$0xff]
      %v2620 = vld [vmem:[%s2618 + $0x8] sm:$0xff]
      %s2621 = sadd.s32 %s2581, 8
      %s2622 = smul.u32 %s2621, 16
      %s2623 = scalar_lea.vmem %s345, %s2622
      %v2624 = vld [vmem:[%s2623] sm:$0xff]
      %v2625 = vld [vmem:[%s2623 + $0x8] sm:$0xff]
      %s2626 = sadd.s32 %s2581, 9
      %s2627 = smul.u32 %s2626, 16
      %s2628 = scalar_lea.vmem %s345, %s2627
      %v2629 = vld [vmem:[%s2628] sm:$0xff]
      %v2630 = vld [vmem:[%s2628 + $0x8] sm:$0xff]
      %s2631 = sadd.s32 %s2581, 10
      %s2632 = smul.u32 %s2631, 16
      %s2633 = scalar_lea.vmem %s345, %s2632
      %v2634 = vld [vmem:[%s2633] sm:$0xff]
      %v2635 = vld [vmem:[%s2633 + $0x8] sm:$0xff]
      %s2636 = sadd.s32 %s2581, 11
      %s2637 = smul.u32 %s2636, 16
      %s2638 = scalar_lea.vmem %s345, %s2637
      %v2639 = vld [vmem:[%s2638] sm:$0xff]
      %v2640 = vld [vmem:[%s2638 + $0x8] sm:$0xff]
      %s2641 = sadd.s32 %s2581, 12
      %s2642 = smul.u32 %s2641, 16
      %s2643 = scalar_lea.vmem %s345, %s2642
      %v2644 = vld [vmem:[%s2643] sm:$0xff]
      %v2645 = vld [vmem:[%s2643 + $0x8] sm:$0xff]
      %s2646 = sadd.s32 %s2581, 13
      %s2647 = smul.u32 %s2646, 16
      %s2648 = scalar_lea.vmem %s345, %s2647
      %v2649 = vld [vmem:[%s2648] sm:$0xff]
      %v2650 = vld [vmem:[%s2648 + $0x8] sm:$0xff]
      %s2651 = sadd.s32 %s2581, 14
      %s2652 = smul.u32 %s2651, 16
      %s2653 = scalar_lea.vmem %s345, %s2652
      %v2654 = vld [vmem:[%s2653] sm:$0xff]
      %v2655 = vld [vmem:[%s2653 + $0x8] sm:$0xff]
      %s2656 = sadd.s32 %s2581, 15
      %s2657 = smul.u32 %s2656, 16
      %s2658 = scalar_lea.vmem %s345, %s2657
      %v2659 = vld [vmem:[%s2658] sm:$0xff]
      %v2660 = vld [vmem:[%s2658 + $0x8] sm:$0xff]
      %v2661 = vld [vmem:[%s8] sm:$0xff]
      %v2663 = vsel %vm526, %v2584, 0
      %v2666 = vsel %vm526, %v2585, 0
      %v2669 = vsel %vm526, %v2589, 0
      %v2672 = vsel %vm526, %v2590, 0
      %v2675 = vsel %vm526, %v2594, 0
      %v2678 = vsel %vm526, %v2595, 0
      %v2681 = vsel %vm526, %v2599, 0
      %v2684 = vsel %vm526, %v2600, 0
      %v2687 = vsel %vm526, %v2604, 0
      %v2690 = vsel %vm526, %v2605, 0
      %v2693 = vsel %vm526, %v2609, 0
      %v2696 = vsel %vm526, %v2610, 0
      %v2699 = vsel %vm526, %v2614, 0
      %v2702 = vsel %vm526, %v2615, 0
      %v2705 = vsel %vm526, %v2619, 0
      %v2708 = vsel %vm526, %v2620, 0
      %v2711 = vsel %vm526, %v2624, 0
      %v2714 = vsel %vm526, %v2625, 0
      %v2717 = vsel %vm526, %v2629, 0
      %v2720 = vsel %vm526, %v2630, 0
      %v2723 = vsel %vm526, %v2634, 0
      %v2726 = vsel %vm526, %v2635, 0
      %v2729 = vsel %vm526, %v2639, 0
      %v2732 = vsel %vm526, %v2640, 0
      %v2735 = vsel %vm526, %v2644, 0
      %v2738 = vsel %vm526, %v2645, 0
      %v2741 = vsel %vm526, %v2649, 0
      %v2744 = vsel %vm526, %v2650, 0
      %v2747 = vsel %vm526, %v2654, 0
      %v2750 = vsel %vm526, %v2655, 0
      %v2753 = vsel %vm526, %v2659, 0
      %v2756 = vsel %vm526, %v2660, 0
      %2758 = vmatpush.msra.mxu0 0.0
      %2759 = vmatpush.msra.mxu0 0.0
      %2760 = vmatpush.msra.mxu0 0.0
      %2761 = vmatpush.msra.mxu0 0.0
      %2762 = vmatpush.msra.mxu0 0.0
      %2763 = vmatpush.msra.mxu0 0.0
      %2764 = vmatpush.msra.mxu0 0.0
      %2765 = vmatpush.msra.mxu0 0.0
      %2766 = vmatpush.msra.mxu0 0.0
      %2767 = vmatpush.msra.mxu0 0.0
      %2768 = vmatpush.msra.mxu0 0.0
      %2769 = vmatpush.msra.mxu0 0.0
      %2770 = vmatpush.msra.mxu0 0.0
      %2771 = vmatpush.msra.mxu0 0.0
      %2772 = vmatpush.msra.mxu0 0.0
      %2773 = vmatpush.msra.mxu0 %v2661
      %2774 = vmatmul.f32.gmra.mxu0 %v2663
      %v2775 = vpop.f32.mrf.mxu0
      %v2776 = vadd.f32 0.0, %v2775
      %2777 = vmatmul.f32.gmra.mxu0 %v2666
      %v2778 = vpop.f32.mrf.mxu0
      %v2779 = vadd.f32 0.0, %v2778
      %2780 = vmatmul.f32.gmra.mxu0 %v2669
      %v2781 = vpop.f32.mrf.mxu0
      %v2782 = vadd.f32 0.0, %v2781
      %2783 = vmatmul.f32.gmra.mxu0 %v2672
      %v2784 = vpop.f32.mrf.mxu0
      %v2785 = vadd.f32 0.0, %v2784
      %2786 = vmatmul.f32.gmra.mxu0 %v2675
      %v2787 = vpop.f32.mrf.mxu0
      %v2788 = vadd.f32 0.0, %v2787
      %2789 = vmatmul.f32.gmra.mxu0 %v2678
      %v2790 = vpop.f32.mrf.mxu0
      %v2791 = vadd.f32 0.0, %v2790
      %2792 = vmatmul.f32.gmra.mxu0 %v2681
      %v2793 = vpop.f32.mrf.mxu0
      %v2794 = vadd.f32 0.0, %v2793
      %2795 = vmatmul.f32.gmra.mxu0 %v2684
      %v2796 = vpop.f32.mrf.mxu0
      %v2797 = vadd.f32 0.0, %v2796
      %2798 = vmatmul.f32.gmra.mxu0 %v2687
      %v2799 = vpop.f32.mrf.mxu0
      %v2800 = vadd.f32 0.0, %v2799
      %2801 = vmatmul.f32.gmra.mxu0 %v2690
      %v2802 = vpop.f32.mrf.mxu0
      %v2803 = vadd.f32 0.0, %v2802
      %2804 = vmatmul.f32.gmra.mxu0 %v2693
      %v2805 = vpop.f32.mrf.mxu0
      %v2806 = vadd.f32 0.0, %v2805
      %2807 = vmatmul.f32.gmra.mxu0 %v2696
      %v2808 = vpop.f32.mrf.mxu0
      %v2809 = vadd.f32 0.0, %v2808
      %2810 = vmatmul.f32.gmra.mxu0 %v2699
      %v2811 = vpop.f32.mrf.mxu0
      %v2812 = vadd.f32 0.0, %v2811
      %2813 = vmatmul.f32.gmra.mxu0 %v2702
      %v2814 = vpop.f32.mrf.mxu0
      %v2815 = vadd.f32 0.0, %v2814
      %2816 = vmatmul.f32.gmra.mxu0 %v2705
      %v2817 = vpop.f32.mrf.mxu0
      %v2818 = vadd.f32 0.0, %v2817
      %2819 = vmatmul.f32.gmra.mxu0 %v2708
      %v2820 = vpop.f32.mrf.mxu0
      %v2821 = vadd.f32 0.0, %v2820
      %2822 = vmatmul.f32.gmra.mxu0 %v2711
      %v2823 = vpop.f32.mrf.mxu0
      %v2824 = vadd.f32 0.0, %v2823
      %2825 = vmatmul.f32.gmra.mxu0 %v2714
      %v2826 = vpop.f32.mrf.mxu0
      %v2827 = vadd.f32 0.0, %v2826
      %2828 = vmatmul.f32.gmra.mxu0 %v2717
      %v2829 = vpop.f32.mrf.mxu0
      %v2830 = vadd.f32 0.0, %v2829
      %2831 = vmatmul.f32.gmra.mxu0 %v2720
      %v2832 = vpop.f32.mrf.mxu0
      %v2833 = vadd.f32 0.0, %v2832
      %2834 = vmatmul.f32.gmra.mxu0 %v2723
      %v2835 = vpop.f32.mrf.mxu0
      %v2836 = vadd.f32 0.0, %v2835
      %2837 = vmatmul.f32.gmra.mxu0 %v2726
      %v2838 = vpop.f32.mrf.mxu0
      %v2839 = vadd.f32 0.0, %v2838
      %2840 = vmatmul.f32.gmra.mxu0 %v2729
      %v2841 = vpop.f32.mrf.mxu0
      %v2842 = vadd.f32 0.0, %v2841
      %2843 = vmatmul.f32.gmra.mxu0 %v2732
      %v2844 = vpop.f32.mrf.mxu0
      %v2845 = vadd.f32 0.0, %v2844
      %2846 = vmatmul.f32.gmra.mxu0 %v2735
      %v2847 = vpop.f32.mrf.mxu0
      %v2848 = vadd.f32 0.0, %v2847
      %2849 = vmatmul.f32.gmra.mxu0 %v2738
      %v2850 = vpop.f32.mrf.mxu0
      %v2851 = vadd.f32 0.0, %v2850
      %2852 = vmatmul.f32.gmra.mxu0 %v2741
      %v2853 = vpop.f32.mrf.mxu0
      %v2854 = vadd.f32 0.0, %v2853
      %2855 = vmatmul.f32.gmra.mxu0 %v2744
      %v2856 = vpop.f32.mrf.mxu0
      %v2857 = vadd.f32 0.0, %v2856
      %2858 = vmatmul.f32.gmra.mxu0 %v2747
      %v2859 = vpop.f32.mrf.mxu0
      %v2860 = vadd.f32 0.0, %v2859
      %2861 = vmatmul.f32.gmra.mxu0 %v2750
      %v2862 = vpop.f32.mrf.mxu0
      %v2863 = vadd.f32 0.0, %v2862
      %2864 = vmatmul.f32.gmra.mxu0 %v2753
      %v2865 = vpop.f32.mrf.mxu0
      %v2866 = vadd.f32 0.0, %v2865
      %2867 = vmatmul.f32.gmra.mxu0 %v2756
      %v2868 = vpop.f32.mrf.mxu0
      %v2869 = vadd.f32 0.0, %v2868
      %2870 = vdwg.mxu0
      %v2871 = vadd.f32 %v2486, %v2776
      %v2872 = vadd.f32 %v2489, %v2779
      %v2873 = vadd.f32 %v2492, %v2782
      %v2874 = vadd.f32 %v2495, %v2785
      %v2875 = vadd.f32 %v2498, %v2788
      %v2876 = vadd.f32 %v2501, %v2791
      %v2877 = vadd.f32 %v2504, %v2794
      %v2878 = vadd.f32 %v2507, %v2797
      %v2879 = vadd.f32 %v2510, %v2800
      %v2880 = vadd.f32 %v2513, %v2803
      %v2881 = vadd.f32 %v2516, %v2806
      %v2882 = vadd.f32 %v2519, %v2809
      %v2883 = vadd.f32 %v2522, %v2812
      %v2884 = vadd.f32 %v2525, %v2815
      %v2885 = vadd.f32 %v2528, %v2818
      %v2886 = vadd.f32 %v2531, %v2821
      %v2887 = vadd.f32 %v2534, %v2824
      %v2888 = vadd.f32 %v2537, %v2827
      %v2889 = vadd.f32 %v2540, %v2830
      %v2890 = vadd.f32 %v2543, %v2833
      %v2891 = vadd.f32 %v2546, %v2836
      %v2892 = vadd.f32 %v2549, %v2839
      %v2893 = vadd.f32 %v2552, %v2842
      %v2894 = vadd.f32 %v2555, %v2845
      %v2895 = vadd.f32 %v2558, %v2848
      %v2896 = vadd.f32 %v2561, %v2851
      %v2897 = vadd.f32 %v2564, %v2854
      %v2898 = vadd.f32 %v2567, %v2857
      %v2899 = vadd.f32 %v2570, %v2860
      %v2900 = vadd.f32 %v2573, %v2863
      %v2901 = vadd.f32 %v2576, %v2866
      %v2902 = vadd.f32 %v2579, %v2869
      %2903 = vst [vmem:[%s354] sm:$0xff] %v2871
      %2904 = vst [vmem:[%s354 + $0x8] sm:$0xff] %v2872
      %2905 = vst [vmem:[%s354 + $0x10] sm:$0xff] %v2873
      %2906 = vst [vmem:[%s354 + $0x18] sm:$0xff] %v2874
      %2907 = vst [vmem:[%s354 + $0x20] sm:$0xff] %v2875
      %2908 = vst [vmem:[%s354 + $0x28] sm:$0xff] %v2876
      %2909 = vst [vmem:[%s354 + $0x30] sm:$0xff] %v2877
      %2910 = vst [vmem:[%s354 + $0x38] sm:$0xff] %v2878
      %2911 = vst [vmem:[%s354 + $0x40] sm:$0xff] %v2879
      %2912 = vst [vmem:[%s354 + $0x48] sm:$0xff] %v2880
      %2913 = vst [vmem:[%s354 + $0x50] sm:$0xff] %v2881
      %2914 = vst [vmem:[%s354 + $0x58] sm:$0xff] %v2882
      %2915 = vst [vmem:[%s354 + $0x60] sm:$0xff] %v2883
      %2916 = vst [vmem:[%s354 + $0x68] sm:$0xff] %v2884
      %2917 = vst [vmem:[%s354 + $0x70] sm:$0xff] %v2885
      %2918 = vst [vmem:[%s354 + $0x78] sm:$0xff] %v2886
      %2919 = vst [vmem:[%s354 + $0x80] sm:$0xff] %v2887
      %2920 = vst [vmem:[%s354 + $0x88] sm:$0xff] %v2888
      %2921 = vst [vmem:[%s354 + $0x90] sm:$0xff] %v2889
      %2922 = vst [vmem:[%s354 + $0x98] sm:$0xff] %v2890
      %2923 = vst [vmem:[%s354 + $0xa0] sm:$0xff] %v2891
      %2924 = vst [vmem:[%s354 + $0xa8] sm:$0xff] %v2892
      %2925 = vst [vmem:[%s354 + $0xb0] sm:$0xff] %v2893
      %2926 = vst [vmem:[%s354 + $0xb8] sm:$0xff] %v2894
      %2927 = vst [vmem:[%s354 + $0xc0] sm:$0xff] %v2895
      %2928 = vst [vmem:[%s354 + $0xc8] sm:$0xff] %v2896
      %2929 = vst [vmem:[%s354 + $0xd0] sm:$0xff] %v2897
      %2930 = vst [vmem:[%s354 + $0xd8] sm:$0xff] %v2898
      %2931 = vst [vmem:[%s354 + $0xe0] sm:$0xff] %v2899
      %2932 = vst [vmem:[%s354 + $0xe8] sm:$0xff] %v2900
      %2933 = vst [vmem:[%s354 + $0xf0] sm:$0xff] %v2901
      %2934 = vst [vmem:[%s354 + $0xf8] sm:$0xff] %v2902
      %s2935 = smul.u32 32, %s25
      %p2936 = scmp.lt.s32.totalorder %s24, 1
      %s2937 = scalar_select %p2936, %s24, 1
      %p2938 = scmp.lt.s32.totalorder %s2935, 31
      %s2939 = scalar_select %p2938, %s2935, 31
      %s2940 = smul.addr %s2937, 32
      %s2941 = sadd.s32 %s2939, %s2940
      %s2942 = smul.addr %s2941, 8
      %s2943 = scalar_lea.vmem %s9, %s2942
      // Predicated region
      $region61: #{inverted_residual_forward.1} parent=55 // pred_check
        %p2944 = pneg %p246
      $region62: #{inverted_residual_forward.1} parent=55 // pred_check_branch
        %2946 = sbr.rel (%p2944) target = $region64
      $region63: #{inverted_residual_forward.1} parent=55 // pred_region
        %s2947 = smul.u32 32, %s25
      $region64: #{inverted_residual_forward.1} parent=55 // pred_fallthru
        _
    $region56: #{inverted_residual_forward.1} parent=5 // pred_fallthru
      _
    %p2948 = scmp.le.s32.totalorder 2, %s15
    // Predicated region
    $region65: #{inverted_residual_forward.1} parent=5 // pred_check
      %p2949 = pneg %p2948
    $region66: #{inverted_residual_forward.1} parent=5 // pred_check_branch
      %2951 = sbr.rel (%p2949) target = $region68
    $region67: #{inverted_residual_forward.1} parent=5 // pred_region
      %s2952 = ssub.s32 %s15, 2
      // Predicated region
      $region69: #{inverted_residual_forward.1} parent=67 // pred_check
        %p2953 = pneg %p252
      $region70: #{inverted_residual_forward.1} parent=67 // pred_check_branch
        %2955 = sbr.rel (%p2953) target = $region72
      $region71: #{inverted_residual_forward.1} parent=67 // pred_region
        %s2956 = smul.u32 32, %s27
        %p2957 = scmp.lt.s32.totalorder %s26, 1
        %s2958 = scalar_select %p2957, %s26, 1
        %p2959 = scmp.lt.s32.totalorder %s2956, 31
        %s2960 = scalar_select %p2959, %s2956, 31
        %s2961 = smul.addr %s2958, 32
        %s2962 = sadd.s32 %s2960, %s2961
        %s2963 = smul.addr %s2962, 8
        %s2964 = scalar_lea.vmem %s9, %s2963
      $region72: #{inverted_residual_forward.1} parent=67 // pred_fallthru
        _
    $region68: #{inverted_residual_forward.1} parent=5 // pred_fallthru
      _
  $region6: #{inverted_residual_forward.1} parent=0 // loop_footer
    %s19 = sadd.s32 1, %s15
  $region7: #{inverted_residual_forward.1} parent=0 // loop_footer_branch
    %14 = sbr.rel target = $region3
  $region8: #{inverted_residual_forward.1} parent=0 // loop_exit
    _

</llo_original>
